<compile_context>
chip_gen: v6e
topology: v6e:2x2x1
jax: 0.10.0
libtpu: 0.0.40
codegen_flags: <defaults>
</compile_context>

<pallas_src>
import functools

import jax
import jax.numpy as jnp
import numpy as np
from jax import lax
from jax.experimental import pallas as pl
from jax.experimental.pallas import tpu as pltpu


def _round_up(x, m):
    return (x + m - 1) // m * m


def gin_kernel(x_ref,                # VMEM (tm, F_pad) f32   node features, this node tile
               hu_ref,               # VMEM (te, F_pad) f32   gathered x[src], this edge chunk
               dst_ref,              # VMEM (1, te) int32     destination ids (-1 padded)
               w1_ref, b1_ref,       # VMEM (F_pad, H_pad), (1, H_pad)
               w2_ref, b2_ref,       # VMEM (H_pad, H_pad), (1, H_pad)
               gamma_ref, beta_ref,  # VMEM (1, H_pad), (1, H_pad)
               eta_ref,              # SMEM (1, 1) f32
               out_ref,              # VMEM (tm, H_pad)
               agg_ref,              # VMEM scratch (tm, F_pad) f32 accumulator
               *, tm, n_real_h, add_skip):
    e = pl.program_id(1)
    n_e = pl.num_programs(1)
    row0 = pl.program_id(0) * tm
    te = dst_ref.shape[1]

    # ---- init accumulator at the first edge chunk of this node tile ---------
    @pl.when(e == 0)
    def _():
        agg_ref[...] = jnp.zeros_like(agg_ref)

    # ---- neighbour-sum for this (node tile, edge chunk) on the MXU ----------
    # dst_oh[d, j] = 1 iff edge j points at node row0 + d.  Padded edges carry
    # dst = -1 and never match; their gathered features are zero anyway.
    dst_oh = (dst_ref[...] ==
              (row0 + lax.broadcasted_iota(jnp.int32, (tm, te), 0))
              ).astype(jnp.float32)
    agg_ref[...] += jnp.dot(dst_oh, hu_ref[...],
                            preferred_element_type=jnp.float32)

    # ---- epilogue: MLP + LayerNorm + skip, once per node tile ---------------
    @pl.when(e == n_e - 1)
    def _():
        x_tile = x_ref[...]
        eta = eta_ref[0, 0]                       # SMEM scalar read
        h = (1.0 + eta) * x_tile + agg_ref[...]

        # MLP: Linear -> ReLU -> Linear -> ReLU (outer F.relu is idempotent).
        h1 = jnp.maximum(
            jnp.dot(h, w1_ref[...], preferred_element_type=jnp.float32)
            + b1_ref[...], 0.0)
        h2 = jnp.maximum(
            jnp.dot(h1, w2_ref[...], preferred_element_type=jnp.float32)
            + b2_ref[...], 0.0)
        # Dropout p=0.0 -> identity.
        # TODO(synk): stateful PRNG dropout (pltpu.prng_*) for p > 0.

        # LayerNorm over the REAL H features (eps=1e-5, biased variance).
        # Padded lanes of h2 are exactly zero (zero-padded w1/w2 columns and
        # b1/b2), so the row sum is already correct; only the variance needs a
        # lane mask on the real columns.
        h_pad = h2.shape[1]
        inv_h = 1.0 / float(n_real_h)
        col_mask = (lax.broadcasted_iota(jnp.int32, (1, h_pad), 1)
                    < n_real_h).astype(jnp.float32)
        mean = jnp.sum(h2, axis=-1, keepdims=True) * inv_h
        diff = (h2 - mean) * col_mask
        var = jnp.sum(diff * diff, axis=-1, keepdims=True) * inv_h
        out = diff * lax.rsqrt(var + 1e-5) * gamma_ref[...] + beta_ref[...]

        if add_skip:
            out = out + x_tile                    # requires F == H (as in ref)

        out_ref[...] = out.astype(out_ref.dtype)


def _vmem_estimate_bytes(tm, te, f_pad, h_pad):
    """Conservative resident-VMEM estimate (f32), incl. pipeline buffers."""
    words = (
        2 * tm * f_pad          # x tile (double buffered)
        + 2 * te * f_pad        # gathered edge features chunk (double buffered)
        + 2 * 8 * te            # dst id chunk, sublane-padded (double buffered)
        + 1 * f_pad * h_pad     # w1 (single buffered, pl.Buffered(1))
        + 1 * h_pad * h_pad     # w2 (single buffered)
        + 4 * 8 * h_pad         # b1, b2, gamma, beta (single buffered, padded rows)
        + 2 * tm * h_pad        # out tile (double buffered)
        + tm * f_pad            # agg accumulator scratch
        # kernel-internal intermediates: dst_oh, h, h1, h2, diff
        + tm * te + 4 * tm * h_pad
    )
    return 4 * words


def gin_forward(node_features, edge_index, params,
                add_skip_connection=False, tile_m=256, tile_e=512):
    N, F = node_features.shape
    H = params["w1"].shape[1]
    E = edge_index.shape[1]
    if add_skip_connection and F != H:
        raise ValueError("skip connection requires n_input_features == n_hidden_features")

    LANE = 128
    F_pad = _round_up(F, LANE)
    H_pad = _round_up(H, LANE)
    tm = min(tile_m, _round_up(N, 8))
    N_pad = _round_up(N, tm)
    te = min(tile_e, _round_up(E, LANE))
    te = _round_up(te, LANE)
    E_pad = _round_up(E, te)

    def pad2(a, rows, cols):
        a = jnp.asarray(a, jnp.float32)
        return jnp.pad(a, ((0, rows - a.shape[0]), (0, cols - a.shape[1])))

    x_p = pad2(node_features, N_pad, F_pad)
    w1_p = pad2(params["w1"], F_pad, H_pad)
    b1_p = pad2(params["b1"], 1, H_pad)
    w2_p = pad2(params["w2"], H_pad, H_pad)
    b2_p = pad2(params["b2"], 1, H_pad)
    gamma_p = pad2(params["gamma"], 1, H_pad)
    beta_p = pad2(params["beta"], 1, H_pad)
    eta = jnp.asarray(params["eta"], jnp.float32).reshape(1, 1)

    ei = edge_index.astype(jnp.int32)
    # Gather source features ONCE in the wrapper; padded edge rows are zero.
    hu_p = jnp.pad(x_p[ei[0]], ((0, E_pad - E), (0, 0)))            # (E_pad, F_pad)
    dst_p = jnp.pad(ei[1], (0, E_pad - E), constant_values=-1).reshape(1, E_pad)

    # VMEM budget: double buffers + single-buffered constants + scratch +
    # kernel intermediates, with headroom for Mosaic internal scratch.
    vmem_limit = 48 * 1024 * 1024                  # < v7x 64 MiB physical
    est = _vmem_estimate_bytes(tm, te, F_pad, H_pad)
    assert est + (4 << 20) < vmem_limit, (
        f"tile sizes (tm={tm}, te={te}) exceed the VMEM budget: {est} bytes")

    grid = (N_pad // tm, E_pad // te)
    const = lambda i, e: (0, 0)
    single = pl.Buffered(1)                        # grid-invariant -> 1 buffer

    kernel = pl.pallas_call(
        functools.partial(gin_kernel, tm=tm, n_real_h=H,
                          add_skip=add_skip_connection),
        out_shape=jax.ShapeDtypeStruct((N_pad, H_pad), node_features.dtype),
        grid=grid,
        in_specs=[
            pl.BlockSpec((tm, F_pad), lambda i, e: (i, 0)),      # x node tile
            pl.BlockSpec((te, F_pad), lambda i, e: (e, 0)),      # x[src] edge chunk
            pl.BlockSpec((1, te), lambda i, e: (0, e)),          # dst ids chunk
            pl.BlockSpec((F_pad, H_pad), const, pipeline_mode=single),  # w1
            pl.BlockSpec((1, H_pad), const, pipeline_mode=single),      # b1
            pl.BlockSpec((H_pad, H_pad), const, pipeline_mode=single),  # w2
            pl.BlockSpec((1, H_pad), const, pipeline_mode=single),      # b2
            pl.BlockSpec((1, H_pad), const, pipeline_mode=single),      # gamma
            pl.BlockSpec((1, H_pad), const, pipeline_mode=single),      # beta
            pl.BlockSpec(memory_space=pltpu.MemorySpace.SMEM),          # eta scalar
        ],
        out_specs=pl.BlockSpec((tm, H_pad), lambda i, e: (i, 0)),
        scratch_shapes=[pltpu.VMEM((tm, F_pad), jnp.float32)],   # agg accumulator
        compiler_params=pltpu.CompilerParams(
            dimension_semantics=("parallel", "arbitrary"),
            vmem_limit_bytes=vmem_limit),
    )
    out = kernel(x_p, hu_p, dst_p, w1_p, b1_p, w2_p, b2_p,
                 gamma_p, beta_p, eta)
    return out[:N, :H]


def gin_reference(x, edge_index, params, add_skip_connection=False):
    """Pure-JAX reference mirroring the PyTorch forward."""
    src, dst = edge_index[0], edge_index[1]
    hu = x[src]
    sum_hu = jnp.zeros_like(x).at[dst].add(hu)
    h = (1.0 + params["eta"][0, 0]) * x + sum_hu
    h1 = jax.nn.relu(h @ params["w1"] + params["b1"][0])
    h2 = jax.nn.relu(h1 @ params["w2"] + params["b2"][0])
    h2 = jax.nn.relu(h2)  # outer F.relu
    mean = jnp.mean(h2, axis=-1, keepdims=True)
    var = jnp.mean((h2 - mean) ** 2, axis=-1, keepdims=True)
    out = (h2 - mean) / jnp.sqrt(var + 1e-5) * params["gamma"][0] + params["beta"][0]
    if add_skip_connection:
        out = out + x
    return out


def init_params(key, n_input_features, n_hidden_features):
    """Deterministic synthetic parameters matching GINLayer.__init__ shapes."""
    k1, k2, k3, k4, k5 = jax.random.split(key, 5)
    F, H = n_input_features, n_hidden_features

    def xavier(k, shape):
        fan_in, fan_out = shape[0], shape[1]
        bound = jnp.sqrt(6.0 / (fan_in + fan_out))
        return jax.random.uniform(k, shape, jnp.float32, -bound, bound)

    return {
        # Linear weights stored already transposed ([in, out]) for y = x @ W.
        "w1": xavier(k1, (F, H)),
        "b1": 0.01 * jax.random.normal(k2, (1, H), jnp.float32),
        "w2": xavier(k3, (H, H)),
        "b2": 0.01 * jax.random.normal(k4, (1, H), jnp.float32),
        "eta": xavier(k5, (1, 1)),                # nn.init.xavier_uniform_ on (1,1)
        "gamma": jnp.ones((1, H), jnp.float32),   # LayerNorm default weight
        "beta": jnp.zeros((1, H), jnp.float32),   # LayerNorm default bias
    }


if __name__ == "__main__":
    # Shapes chosen so both grid axes are exercised: 2 node tiles (tm=256) and
    # 2 edge chunks (te=512), while staying small.
    N, F, H, E = 512, 64, 64, 1024

    key = jax.random.PRNGKey(0)
    kx, ke, kp = jax.random.split(key, 3)

    node_features = jax.random.normal(kx, (N, F), jnp.float32)
    edge_index = jax.random.randint(ke, (2, E), 0, N, jnp.int32)
    params = init_params(kp, F, H)

    out = gin_forward(node_features, edge_index, params,
                      add_skip_connection=False)
    out = jax.block_until_ready(out)
    ref = gin_reference(node_features, edge_index, params,
                        add_skip_connection=False)
    np.testing.assert_allclose(np.asarray(out), np.asarray(ref),
                               rtol=5e-4, atol=5e-4)

    # Also exercise the fused skip-connection epilogue.
    out_skip = gin_forward(node_features, edge_index, params,
                           add_skip_connection=True)
    out_skip = jax.block_until_ready(out_skip)
    ref_skip = gin_reference(node_features, edge_index, params,
                             add_skip_connection=True)
    np.testing.assert_allclose(np.asarray(out_skip), np.asarray(ref_skip),
                               rtol=5e-4, atol=5e-4)

    print("KERNEL_OK")
</pallas_src>

<mosaic_0001>
module attributes {stable_mosaic.version = 11 : i64} {
  func.func @gin_kernel(%arg0: i32, %arg1: i32, %arg2: memref<256x128xf32, #tpu.memory_space<vmem>>, %arg3: memref<512x128xf32, #tpu.memory_space<vmem>>, %arg4: memref<1x512xi32, #tpu.memory_space<vmem>>, %arg5: memref<128x128xf32, #tpu.memory_space<vmem>>, %arg6: memref<1x128xf32, #tpu.memory_space<vmem>>, %arg7: memref<128x128xf32, #tpu.memory_space<vmem>>, %arg8: memref<1x128xf32, #tpu.memory_space<vmem>>, %arg9: memref<1x128xf32, #tpu.memory_space<vmem>>, %arg10: memref<1x128xf32, #tpu.memory_space<vmem>>, %arg11: memref<1x1xf32, #tpu.memory_space<smem>>, %arg12: memref<256x128xf32, #tpu.memory_space<vmem>>, %arg13: memref<256x128xf32, #tpu.memory_space<vmem>>) attributes {dimension_semantics = [#tpu.dimension_semantics<parallel>, #tpu.dimension_semantics<arbitrary>], iteration_bounds = array<i64: 2, 2>, scalar_prefetch = 0 : i64, scratch_operands = 1 : i64, tpu.core_type = #tpu.core_type<tc>, window_params = [{transform_indices = @transform_0, window_bounds = array<i64: 256, 128>}, {transform_indices = @transform_1, window_bounds = array<i64: 512, 128>}, {transform_indices = @transform_2, window_bounds = array<i64: 1, 512>}, {pipeline_mode = #tpu.pipeline_mode<synchronous>, transform_indices = @transform_3, window_bounds = array<i64: 128, 128>}, {pipeline_mode = #tpu.pipeline_mode<synchronous>, transform_indices = @transform_4, window_bounds = array<i64: 1, 128>}, {pipeline_mode = #tpu.pipeline_mode<synchronous>, transform_indices = @transform_5, window_bounds = array<i64: 128, 128>}, {pipeline_mode = #tpu.pipeline_mode<synchronous>, transform_indices = @transform_6, window_bounds = array<i64: 1, 128>}, {pipeline_mode = #tpu.pipeline_mode<synchronous>, transform_indices = @transform_7, window_bounds = array<i64: 1, 128>}, {pipeline_mode = #tpu.pipeline_mode<synchronous>, transform_indices = @transform_8, window_bounds = array<i64: 1, 128>}, {transform_indices = @transform_9, window_bounds = array<i64: 1, 1>}, {transform_indices = @transform_10, window_bounds = array<i64: 256, 128>}]} {
    %c256_i32 = arith.constant 256 : i32
    %0 = arith.muli %arg0, %c256_i32 : i32
    %c0_i32 = arith.constant 0 : i32
    %1 = arith.cmpi eq, %arg1, %c0_i32 : i32
    %2 = arith.extui %1 : i1 to i32
    %c0_i32_0 = arith.constant 0 : i32
    %3 = arith.cmpi ne, %2, %c0_i32_0 : i32
    scf.if %3 {
      %cst_9 = arith.constant 0.000000e+00 : f32
      %20 = vector.broadcast %cst_9 : f32 to vector<256x128xf32>
      %c0_10 = arith.constant 0 : index
      %c0_11 = arith.constant 0 : index
      %21 = vector.load %arg13[%c0_10, %c0_11] : memref<256x128xf32, #tpu.memory_space<vmem>>, vector<256x128xf32>
      tpu.vector_store %arg13[%c0_10, %c0_11], %20 {strides = array<i32>} : memref<256x128xf32, #tpu.memory_space<vmem>>, vector<256x128xf32>,
    } else {
    }
    %c0 = arith.constant 0 : index
    %c0_1 = arith.constant 0 : index
    %4 = vector.load %arg4[%c0, %c0_1] : memref<1x512xi32, #tpu.memory_space<vmem>>, vector<1x512xi32>
    %5 = tpu.iota {dimensions = array<i32: 0>} : vector<256x512xi32>
    %6 = vector.broadcast %0 : i32 to vector<256x512xi32>
    %7 = arith.addi %6, %5 : vector<256x512xi32>
    %8 = vector.broadcast %4 : vector<1x512xi32> to vector<256x512xi32>
    %9 = arith.cmpi eq, %8, %7 : vector<256x512xi32>
    %10 = arith.extui %9 : vector<256x512xi1> to vector<256x512xi32>
    %11 = arith.sitofp %10 : vector<256x512xi32> to vector<256x512xf32>
    %c0_2 = arith.constant 0 : index
    %c0_3 = arith.constant 0 : index
    %12 = vector.load %arg13[%c0_2, %c0_3] : memref<256x128xf32, #tpu.memory_space<vmem>>, vector<256x128xf32>
    %c0_4 = arith.constant 0 : index
    %c0_5 = arith.constant 0 : index
    %13 = vector.load %arg3[%c0_4, %c0_5] : memref<512x128xf32, #tpu.memory_space<vmem>>, vector<512x128xf32>
    %cst = arith.constant dense<0.000000e+00> : vector<256x128xf32>
    %14 = tpu.matmul %11, %13, %cst {dimension_numbers = #tpu.dot_dimension_numbers<[1], [0], [0], [1], [0, 0, 1, 1], [], []>} : vector<256x512xf32>, vector<512x128xf32>, vector<256x128xf32> -> vector<256x128xf32>
    %15 = arith.addf %12, %14 : vector<256x128xf32>
    %c0_6 = arith.constant 0 : index
    %c0_7 = arith.constant 0 : index
    %16 = vector.load %arg13[%c0_6, %c0_7] : memref<256x128xf32, #tpu.memory_space<vmem>>, vector<256x128xf32>
    tpu.vector_store %arg13[%c0_6, %c0_7], %15 {strides = array<i32>} : memref<256x128xf32, #tpu.memory_space<vmem>>, vector<256x128xf32>,
    %c1_i32 = arith.constant 1 : i32
    %17 = arith.cmpi eq, %arg1, %c1_i32 : i32
    %18 = arith.extui %17 : i1 to i32
    %c0_i32_8 = arith.constant 0 : i32
    %19 = arith.cmpi ne, %18, %c0_i32_8 : i32
    scf.if %19 {
      %c0_9 = arith.constant 0 : index
      %c0_10 = arith.constant 0 : index
      %20 = vector.load %arg2[%c0_9, %c0_10] : memref<256x128xf32, #tpu.memory_space<vmem>>, vector<256x128xf32>
      %c0_11 = arith.constant 0 : index
      %c0_12 = arith.constant 0 : index
      %21 = memref.load %arg11[%c0_11, %c0_12] : memref<1x1xf32, #tpu.memory_space<smem>>
      %cst_13 = arith.constant 1.000000e+00 : f32
      %22 = arith.addf %cst_13, %21 : f32
      %23 = vector.broadcast %22 : f32 to vector<256x128xf32>
      %24 = arith.mulf %23, %20 : vector<256x128xf32>
      %c0_14 = arith.constant 0 : index
      %c0_15 = arith.constant 0 : index
      %25 = vector.load %arg13[%c0_14, %c0_15] : memref<256x128xf32, #tpu.memory_space<vmem>>, vector<256x128xf32>
      %26 = arith.addf %24, %25 : vector<256x128xf32>
      %c0_16 = arith.constant 0 : index
      %c0_17 = arith.constant 0 : index
      %27 = vector.load %arg5[%c0_16, %c0_17] : memref<128x128xf32, #tpu.memory_space<vmem>>, vector<128x128xf32>
      %cst_18 = arith.constant dense<0.000000e+00> : vector<256x128xf32>
      %28 = tpu.matmul %26, %27, %cst_18 {dimension_numbers = #tpu.dot_dimension_numbers<[1], [0], [0], [1], [0, 0, 1, 1], [], []>} : vector<256x128xf32>, vector<128x128xf32>, vector<256x128xf32> -> vector<256x128xf32>
      %c0_19 = arith.constant 0 : index
      %c0_20 = arith.constant 0 : index
      %29 = vector.load %arg6[%c0_19, %c0_20] : memref<1x128xf32, #tpu.memory_space<vmem>>, vector<1x128xf32>
      %30 = vector.broadcast %29 : vector<1x128xf32> to vector<256x128xf32>
      %31 = arith.addf %28, %30 : vector<256x128xf32>
      %cst_21 = arith.constant 0.000000e+00 : f32
      %32 = vector.broadcast %cst_21 : f32 to vector<256x128xf32>
      %33 = arith.maximumf %31, %32 : vector<256x128xf32>
      %c0_22 = arith.constant 0 : index
      %c0_23 = arith.constant 0 : index
      %34 = vector.load %arg7[%c0_22, %c0_23] : memref<128x128xf32, #tpu.memory_space<vmem>>, vector<128x128xf32>
      %cst_24 = arith.constant dense<0.000000e+00> : vector<256x128xf32>
      %35 = tpu.matmul %33, %34, %cst_24 {dimension_numbers = #tpu.dot_dimension_numbers<[1], [0], [0], [1], [0, 0, 1, 1], [], []>} : vector<256x128xf32>, vector<128x128xf32>, vector<256x128xf32> -> vector<256x128xf32>
      %c0_25 = arith.constant 0 : index
      %c0_26 = arith.constant 0 : index
      %36 = vector.load %arg8[%c0_25, %c0_26] : memref<1x128xf32, #tpu.memory_space<vmem>>, vector<1x128xf32>
      %37 = vector.broadcast %36 : vector<1x128xf32> to vector<256x128xf32>
      %38 = arith.addf %35, %37 : vector<256x128xf32>
      %cst_27 = arith.constant 0.000000e+00 : f32
      %39 = vector.broadcast %cst_27 : f32 to vector<256x128xf32>
      %40 = arith.maximumf %38, %39 : vector<256x128xf32>
      %41 = tpu.iota {dimensions = array<i32: 1>} : vector<1x128xi32>
      %c64_i32 = arith.constant 64 : i32
      %42 = vector.broadcast %c64_i32 : i32 to vector<1x128xi32>
      %43 = arith.cmpi slt, %41, %42 : vector<1x128xi32>
      %44 = arith.extui %43 : vector<1x128xi1> to vector<1x128xi32>
      %45 = arith.sitofp %44 : vector<1x128xi32> to vector<1x128xf32>
      %cst_28 = arith.constant dense<0.000000e+00> : vector<256xf32>
      %46 = vector.multi_reduction <add>, %40, %cst_28 [1] : vector<256x128xf32> to vector<256xf32>
      %47 = vector.shape_cast %46 : vector<256xf32> to vector<256x1xf32>
      %cst_29 = arith.constant 1.562500e-02 : f32
      %48 = vector.broadcast %cst_29 : f32 to vector<256x1xf32>
      %49 = arith.mulf %47, %48 : vector<256x1xf32>
      %50 = vector.broadcast %49 : vector<256x1xf32> to vector<256x128xf32>
      %51 = arith.subf %40, %50 : vector<256x128xf32>
      %52 = vector.broadcast %45 : vector<1x128xf32> to vector<256x128xf32>
      %53 = arith.mulf %51, %52 : vector<256x128xf32>
      %54 = arith.mulf %53, %53 : vector<256x128xf32>
      %cst_30 = arith.constant dense<0.000000e+00> : vector<256xf32>
      %55 = vector.multi_reduction <add>, %54, %cst_30 [1] : vector<256x128xf32> to vector<256xf32>
      %56 = vector.shape_cast %55 : vector<256xf32> to vector<256x1xf32>
      %cst_31 = arith.constant 1.562500e-02 : f32
      %57 = vector.broadcast %cst_31 : f32 to vector<256x1xf32>
      %58 = arith.mulf %56, %57 : vector<256x1xf32>
      %cst_32 = arith.constant 9.99999974E-6 : f32
      %59 = vector.broadcast %cst_32 : f32 to vector<256x1xf32>
      %60 = arith.addf %58, %59 : vector<256x1xf32>
      %61 = math.rsqrt %60 : vector<256x1xf32>
      %62 = vector.broadcast %61 : vector<256x1xf32> to vector<256x128xf32>
      %63 = arith.mulf %53, %62 : vector<256x128xf32>
      %c0_33 = arith.constant 0 : index
      %c0_34 = arith.constant 0 : index
      %64 = vector.load %arg9[%c0_33, %c0_34] : memref<1x128xf32, #tpu.memory_space<vmem>>, vector<1x128xf32>
      %65 = vector.broadcast %64 : vector<1x128xf32> to vector<256x128xf32>
      %66 = arith.mulf %63, %65 : vector<256x128xf32>
      %c0_35 = arith.constant 0 : index
      %c0_36 = arith.constant 0 : index
      %67 = vector.load %arg10[%c0_35, %c0_36] : memref<1x128xf32, #tpu.memory_space<vmem>>, vector<1x128xf32>
      %68 = vector.broadcast %67 : vector<1x128xf32> to vector<256x128xf32>
      %69 = arith.addf %66, %68 : vector<256x128xf32>
      %c0_37 = arith.constant 0 : index
      %c0_38 = arith.constant 0 : index
      %70 = vector.load %arg12[%c0_37, %c0_38] : memref<256x128xf32, #tpu.memory_space<vmem>>, vector<256x128xf32>
      tpu.vector_store %arg12[%c0_37, %c0_38], %69 {strides = array<i32>} : memref<256x128xf32, #tpu.memory_space<vmem>>, vector<256x128xf32>,
    } else {
    }
    return
  }
  func.func @transform_0(%arg0: i32, %arg1: i32) -> (i32, i32) {
    %c0_i32 = arith.constant 0 : i32
    %c0_i32_0 = arith.constant 0 : i32
    return %arg0, %c0_i32 : i32, i32
  }
  func.func @transform_1(%arg0: i32, %arg1: i32) -> (i32, i32) {
    %c0_i32 = arith.constant 0 : i32
    %c0_i32_0 = arith.constant 0 : i32
    return %arg1, %c0_i32 : i32, i32
  }
  func.func @transform_2(%arg0: i32, %arg1: i32) -> (i32, i32) {
    %c0_i32 = arith.constant 0 : i32
    %c0_i32_0 = arith.constant 0 : i32
    return %c0_i32, %arg1 : i32, i32
  }
  func.func @transform_3(%arg0: i32, %arg1: i32) -> (i32, i32) {
    %c0_i32 = arith.constant 0 : i32
    %c0_i32_0 = arith.constant 0 : i32
    %c0_i32_1 = arith.constant 0 : i32
    return %c0_i32, %c0_i32_0 : i32, i32
  }
  func.func @transform_4(%arg0: i32, %arg1: i32) -> (i32, i32) {
    %c0_i32 = arith.constant 0 : i32
    %c0_i32_0 = arith.constant 0 : i32
    %c0_i32_1 = arith.constant 0 : i32
    return %c0_i32, %c0_i32_0 : i32, i32
  }
  func.func @transform_5(%arg0: i32, %arg1: i32) -> (i32, i32) {
    %c0_i32 = arith.constant 0 : i32
    %c0_i32_0 = arith.constant 0 : i32
    %c0_i32_1 = arith.constant 0 : i32
    return %c0_i32, %c0_i32_0 : i32, i32
  }
  func.func @transform_6(%arg0: i32, %arg1: i32) -> (i32, i32) {
    %c0_i32 = arith.constant 0 : i32
    %c0_i32_0 = arith.constant 0 : i32
    %c0_i32_1 = arith.constant 0 : i32
    return %c0_i32, %c0_i32_0 : i32, i32
  }
  func.func @transform_7(%arg0: i32, %arg1: i32) -> (i32, i32) {
    %c0_i32 = arith.constant 0 : i32
    %c0_i32_0 = arith.constant 0 : i32
    %c0_i32_1 = arith.constant 0 : i32
    return %c0_i32, %c0_i32_0 : i32, i32
  }
  func.func @transform_8(%arg0: i32, %arg1: i32) -> (i32, i32) {
    %c0_i32 = arith.constant 0 : i32
    %c0_i32_0 = arith.constant 0 : i32
    %c0_i32_1 = arith.constant 0 : i32
    return %c0_i32, %c0_i32_0 : i32, i32
  }
  func.func @transform_9(%arg0: i32, %arg1: i32) -> (i32, i32) {
    %c0_i32 = arith.constant 0 : i32
    %c0_i32_0 = arith.constant 0 : i32
    %c0_i32_1 = arith.constant 0 : i32
    return %c0_i32, %c0_i32_0 : i32, i32
  }
  func.func @transform_10(%arg0: i32, %arg1: i32) -> (i32, i32) {
    %c0_i32 = arith.constant 0 : i32
    %c0_i32_0 = arith.constant 0 : i32
    return %arg0, %c0_i32 : i32, i32
  }
}

</mosaic_0001>

<llo_original>
// kernel: tpu_custom_call.1
$region0: #{tpu_custom_call.1}
  #allocation0 [shape = 'u32[]', space=smem, size = 0x4, offset = 0x4, fixed_abs, tag = 'smem constant byte address 0x4 - core index']
  #allocation1 [shape = 'u32[144,128]{1,0:T(1,128)}', space=vmem, size = 0x12000, scoped, tag = 'internal scratch']
  #allocation2 [shape = 'f32[256,128]{1,0:T(8,128)}', space=vmem, size = 0x20000, scoped, tag = 'scratch operand']
  #allocation3 [shape = 'f32[1,1]{1,0:T(1,128)S(6)}', space=smem, size = 0x200, scoped, tag = 'scoped memory for tpu_custom_call.1']
  %s0 = inlined_call_operand.hbm [shape: f32[512,128], index: 0, kind: input, shape index: {}]
  %s1 = inlined_call_operand.hbm [shape: f32[1024,128], index: 1, kind: input, shape index: {}]
  %s2 = inlined_call_operand.hbm [shape: s32[1,1024], index: 2, kind: input, shape index: {}]
  %s3 = inlined_call_operand.hbm [shape: f32[128,128], index: 3, kind: input, shape index: {}]
  %s4 = inlined_call_operand.vmem [shape: f32[1,128], index: 4, kind: input, shape index: {}]
  %s5 = inlined_call_operand.hbm [shape: f32[128,128], index: 5, kind: input, shape index: {}]
  %s6 = inlined_call_operand.vmem [shape: f32[1,128], index: 6, kind: input, shape index: {}]
  %s7 = inlined_call_operand.vmem [shape: f32[1,128], index: 7, kind: input, shape index: {}]
  %s8 = inlined_call_operand.vmem [shape: f32[1,128], index: 8, kind: input, shape index: {}]
  %s9 = inlined_call_operand.<no memory space> [shape: f32[1,1], index: 9, kind: input, shape index: {}]
  %s10 = inlined_call_operand.hbm [shape: f32[512,128], index: 10, kind: output, shape index: {}]
  %s11 = sld [smem:[#allocation0]]
  $region101: #{tpu_custom_call.1} parent=0
    _
  %s13 = ssub.s32 1, %s11
  %s14 = scalar_select 0, %s13, %s11
  %15 = sst [smem:[#allocation3]] %s9
  $region1: #{tpu_custom_call.1} parent=0
    #allocation4 [shape = 'u8[262144]{0}', space=vmem, size = 0x40000, scoped, tag = 'input window, operand 0']
    #allocation5 [shape = 's32[2]{0}', space=sflag, size = 0x8, scoped, tag = 'scoped memory for tpu_custom_call.1']
    #allocation6 [shape = 's32[2]{0}', space=sflag, size = 0x8, scoped, tag = 'scoped memory for tpu_custom_call.1']
    #allocation7 [shape = 'u8[524288]{0}', space=vmem, size = 0x80000, scoped, tag = 'input window, operand 1']
    #allocation8 [shape = 's32[2]{0}', space=sflag, size = 0x8, scoped, tag = 'scoped memory for tpu_custom_call.1']
    #allocation9 [shape = 'u8[4096]{0}', space=vmem, size = 0x1000, scoped, tag = 'input window, operand 2']
    #allocation10 [shape = 'u8[65536]{0}', space=vmem, size = 0x10000, scoped, tag = 'input window, operand 3, single buffered']
    #allocation11 [shape = 's32[1]{0}', space=sflag, size = 0x4, scoped, tag = 'scoped memory for tpu_custom_call.1']
    #allocation12 [shape = 'u8[65536]{0}', space=vmem, size = 0x10000, scoped, tag = 'input window, operand 5, single buffered']
    #allocation13 [shape = 'u8[262144]{0}', space=vmem, size = 0x40000, scoped, tag = 'output window, operand 0']
    %16 = vsyncpa [#allocation5], 0
    %s17 = scalar_lea.sflag [#allocation5], 1
    %18 = vsyncpa %s17, 0
    %19 = vsyncpa [#allocation8], 0
    %s20 = scalar_lea.sflag [#allocation8], 1
    %21 = vsyncpa %s20, 0
    %22 = vsyncpa [#allocation11], 0
    %23 = vsyncpa [#allocation6], 0
    %s24 = scalar_lea.sflag [#allocation6], 1
    %25 = vsyncpa %s24, 0
    loop: start=0, step=1, limit=6
    $region2: #{tpu_custom_call.1} parent=1 // loop_pre_header
      _
    $region3: #{tpu_custom_call.1} parent=1 // loop_header
      %s27 = sphi 0, %s31
      %p28 = scmp.ge.s32.totalorder %s27, 6
      %s34 = sphi 0, %s46
      %s35 = sphi 0, %s42
      %s36 = sphi 0, %s34
      %s37 = sphi 0, %s35
      %s38 = sphi 0, %s36
      %s39 = sphi 0, %s37
      %s49 = sphi 0, %s51
      %s52 = sphi 0, %s49
      %s53 = sphi 0, %s52
      %s69 = sphi 0, %s53
      %s75 = sphi 0, %s77
      %s78 = sphi 0, %s75
      %s79 = sphi 0, %s78
      %s95 = sphi 0, %s79
      %s101 = sphi 0, %s103
      %s104 = sphi 0, %s101
      %s105 = sphi 0, %s104
      %s121 = sphi 0, %s105
      %s125 = sphi 0, %s125
      %s127 = sphi 0, %s125
      %s128 = sphi 0, %s127
      %s142 = sphi 0, %s128
      %s146 = sphi 0, %s146
      %s148 = sphi 0, %s146
      %s149 = sphi 0, %s148
      %s163 = sphi 0, %s149
      %s167 = sphi 0, %s167
      %s169 = sphi 0, %s167
      %s170 = sphi 0, %s169
      %s184 = sphi 0, %s170
      %s188 = sphi 0, %s188
      %s190 = sphi 0, %s188
      %s191 = sphi 0, %s190
      %s205 = sphi 0, %s191
      %s209 = sphi 0, %s209
      %s211 = sphi 0, %s209
      %s212 = sphi 0, %s211
      %s226 = sphi 0, %s212
      %s230 = sphi 0, %s230
      %s232 = sphi 0, %s230
      %s233 = sphi 0, %s232
      %s247 = sphi 0, %s233
      %s251 = sphi 0, %s251
      %s253 = sphi 0, %s251
      %s254 = sphi 0, %s253
      %s268 = sphi 0, %s254
      %s274 = sphi 0, %s276
      %s277 = sphi 0, %s274
      %s278 = sphi 0, %s277
      %s294 = sphi 0, %s278
    $region4: #{tpu_custom_call.1} parent=1 // loop_header_branch
      %30 = sbr.rel (%p28) target = $region8
    $region5: #{tpu_custom_call.1} parent=1 // loop_body
      %s32 = ssub.s32 %s27, 1
      %s33 = ssub.s32 %s27, 2
      %s40 = sadd.s32 1, %s35
      %p41 = scmp.ge.s32.totalorder %s40, 2
      %s42 = scalar_select %p41, 0, %s40
      %s43 = sadd.s32 1, %s34
      %s44 = scalar_select %p41, %s43, %s34
      %p45 = scmp.ge.s32.totalorder %s44, 2
      %s46 = scalar_select %p45, 0, %s44
      %s47 = ssub.s32 %s34, %s46
      %p48 = scmp.eq.s32.totalorder %s47, 0
      %s50 = sadd.s32 %s49, 1
      %s51 = scalar_select %p48, %s49, %s50
      %p54 = pneg %p48
      %p55 = scmp.eq.s32.totalorder %s27, 3
      %p56 = por %p54, %p55
      %p57 = scmp.ne.s32.totalorder %s49, %s52
      %p58 = scmp.eq.s32.totalorder %s27, 0
      %p59 = por %p57, %p58
      %p60 = scmp.ne.s32.totalorder %s49, %s52
      %p61 = scmp.eq.s32.totalorder %s32, 3
      %p62 = por %p60, %p61
      %p63 = scmp.ne.s32.totalorder %s52, %s53
      %p64 = scmp.eq.s32.totalorder %s32, 0
      %p65 = por %p63, %p64
      %p66 = scmp.ne.s32.totalorder %s52, %s53
      %p67 = scmp.eq.s32.totalorder %s33, 3
      %p68 = por %p66, %p67
      %p70 = scmp.ne.s32.totalorder %s53, %s69
      %p71 = scmp.eq.s32.totalorder %s33, 0
      %p72 = por %p70, %p71
      %s73 = ssub.s32 %s35, %s42
      %p74 = scmp.eq.s32.totalorder %s73, 0
      %s76 = sadd.s32 %s75, 1
      %s77 = scalar_select %p74, %s75, %s76
      %p80 = pneg %p74
      %p81 = scmp.eq.s32.totalorder %s27, 3
      %p82 = por %p80, %p81
      %p83 = scmp.ne.s32.totalorder %s75, %s78
      %p84 = scmp.eq.s32.totalorder %s27, 0
      %p85 = por %p83, %p84
      %p86 = scmp.ne.s32.totalorder %s75, %s78
      %p87 = scmp.eq.s32.totalorder %s32, 3
      %p88 = por %p86, %p87
      %p89 = scmp.ne.s32.totalorder %s78, %s79
      %p90 = scmp.eq.s32.totalorder %s32, 0
      %p91 = por %p89, %p90
      %p92 = scmp.ne.s32.totalorder %s78, %s79
      %p93 = scmp.eq.s32.totalorder %s33, 3
      %p94 = por %p92, %p93
      %p96 = scmp.ne.s32.totalorder %s79, %s95
      %p97 = scmp.eq.s32.totalorder %s33, 0
      %p98 = por %p96, %p97
      %s99 = ssub.s32 %s35, %s42
      %p100 = scmp.eq.s32.totalorder %s99, 0
      %s102 = sadd.s32 %s101, 1
      %s103 = scalar_select %p100, %s101, %s102
      %p106 = pneg %p100
      %p107 = scmp.eq.s32.totalorder %s27, 3
      %p108 = por %p106, %p107
      %p109 = scmp.ne.s32.totalorder %s101, %s104
      %p110 = scmp.eq.s32.totalorder %s27, 0
      %p111 = por %p109, %p110
      %p112 = scmp.ne.s32.totalorder %s101, %s104
      %p113 = scmp.eq.s32.totalorder %s32, 3
      %p114 = por %p112, %p113
      %p115 = scmp.ne.s32.totalorder %s104, %s105
      %p116 = scmp.eq.s32.totalorder %s32, 0
      %p117 = por %p115, %p116
      %p118 = scmp.ne.s32.totalorder %s104, %s105
      %p119 = scmp.eq.s32.totalorder %s33, 3
      %p120 = por %p118, %p119
      %p122 = scmp.ne.s32.totalorder %s105, %s121
      %p123 = scmp.eq.s32.totalorder %s33, 0
      %p124 = por %p122, %p123
      %s126 = sadd.s32 %s125, 1
      %p129 = scmp.eq.s32.totalorder %s27, 3
      %p130 = scmp.ne.s32.totalorder %s125, %s127
      %p131 = scmp.eq.s32.totalorder %s27, 0
      %p132 = por %p130, %p131
      %p133 = scmp.ne.s32.totalorder %s125, %s127
      %p134 = scmp.eq.s32.totalorder %s32, 3
      %p135 = por %p133, %p134
      %p136 = scmp.ne.s32.totalorder %s127, %s128
      %p137 = scmp.eq.s32.totalorder %s32, 0
      %p138 = por %p136, %p137
      %p139 = scmp.ne.s32.totalorder %s127, %s128
      %p140 = scmp.eq.s32.totalorder %s33, 3
      %p141 = por %p139, %p140
      %p143 = scmp.ne.s32.totalorder %s128, %s142
      %p144 = scmp.eq.s32.totalorder %s33, 0
      %p145 = por %p143, %p144
      %s147 = sadd.s32 %s146, 1
      %p150 = scmp.eq.s32.totalorder %s27, 3
      %p151 = scmp.ne.s32.totalorder %s146, %s148
      %p152 = scmp.eq.s32.totalorder %s27, 0
      %p153 = por %p151, %p152
      %p154 = scmp.ne.s32.totalorder %s146, %s148
      %p155 = scmp.eq.s32.totalorder %s32, 3
      %p156 = por %p154, %p155
      %p157 = scmp.ne.s32.totalorder %s148, %s149
      %p158 = scmp.eq.s32.totalorder %s32, 0
      %p159 = por %p157, %p158
      %p160 = scmp.ne.s32.totalorder %s148, %s149
      %p161 = scmp.eq.s32.totalorder %s33, 3
      %p162 = por %p160, %p161
      %p164 = scmp.ne.s32.totalorder %s149, %s163
      %p165 = scmp.eq.s32.totalorder %s33, 0
      %p166 = por %p164, %p165
      %s168 = sadd.s32 %s167, 1
      %p171 = scmp.eq.s32.totalorder %s27, 3
      %p172 = scmp.ne.s32.totalorder %s167, %s169
      %p173 = scmp.eq.s32.totalorder %s27, 0
      %p174 = por %p172, %p173
      %p175 = scmp.ne.s32.totalorder %s167, %s169
      %p176 = scmp.eq.s32.totalorder %s32, 3
      %p177 = por %p175, %p176
      %p178 = scmp.ne.s32.totalorder %s169, %s170
      %p179 = scmp.eq.s32.totalorder %s32, 0
      %p180 = por %p178, %p179
      %p181 = scmp.ne.s32.totalorder %s169, %s170
      %p182 = scmp.eq.s32.totalorder %s33, 3
      %p183 = por %p181, %p182
      %p185 = scmp.ne.s32.totalorder %s170, %s184
      %p186 = scmp.eq.s32.totalorder %s33, 0
      %p187 = por %p185, %p186
      %s189 = sadd.s32 %s188, 1
      %p192 = scmp.eq.s32.totalorder %s27, 3
      %p193 = scmp.ne.s32.totalorder %s188, %s190
      %p194 = scmp.eq.s32.totalorder %s27, 0
      %p195 = por %p193, %p194
      %p196 = scmp.ne.s32.totalorder %s188, %s190
      %p197 = scmp.eq.s32.totalorder %s32, 3
      %p198 = por %p196, %p197
      %p199 = scmp.ne.s32.totalorder %s190, %s191
      %p200 = scmp.eq.s32.totalorder %s32, 0
      %p201 = por %p199, %p200
      %p202 = scmp.ne.s32.totalorder %s190, %s191
      %p203 = scmp.eq.s32.totalorder %s33, 3
      %p204 = por %p202, %p203
      %p206 = scmp.ne.s32.totalorder %s191, %s205
      %p207 = scmp.eq.s32.totalorder %s33, 0
      %p208 = por %p206, %p207
      %s210 = sadd.s32 %s209, 1
      %p213 = scmp.eq.s32.totalorder %s27, 3
      %p214 = scmp.ne.s32.totalorder %s209, %s211
      %p215 = scmp.eq.s32.totalorder %s27, 0
      %p216 = por %p214, %p215
      %p217 = scmp.ne.s32.totalorder %s209, %s211
      %p218 = scmp.eq.s32.totalorder %s32, 3
      %p219 = por %p217, %p218
      %p220 = scmp.ne.s32.totalorder %s211, %s212
      %p221 = scmp.eq.s32.totalorder %s32, 0
      %p222 = por %p220, %p221
      %p223 = scmp.ne.s32.totalorder %s211, %s212
      %p224 = scmp.eq.s32.totalorder %s33, 3
      %p225 = por %p223, %p224
      %p227 = scmp.ne.s32.totalorder %s212, %s226
      %p228 = scmp.eq.s32.totalorder %s33, 0
      %p229 = por %p227, %p228
      %s231 = sadd.s32 %s230, 1
      %p234 = scmp.eq.s32.totalorder %s27, 3
      %p235 = scmp.ne.s32.totalorder %s230, %s232
      %p236 = scmp.eq.s32.totalorder %s27, 0
      %p237 = por %p235, %p236
      %p238 = scmp.ne.s32.totalorder %s230, %s232
      %p239 = scmp.eq.s32.totalorder %s32, 3
      %p240 = por %p238, %p239
      %p241 = scmp.ne.s32.totalorder %s232, %s233
      %p242 = scmp.eq.s32.totalorder %s32, 0
      %p243 = por %p241, %p242
      %p244 = scmp.ne.s32.totalorder %s232, %s233
      %p245 = scmp.eq.s32.totalorder %s33, 3
      %p246 = por %p244, %p245
      %p248 = scmp.ne.s32.totalorder %s233, %s247
      %p249 = scmp.eq.s32.totalorder %s33, 0
      %p250 = por %p248, %p249
      %s252 = sadd.s32 %s251, 1
      %p255 = scmp.eq.s32.totalorder %s27, 3
      %p256 = scmp.ne.s32.totalorder %s251, %s253
      %p257 = scmp.eq.s32.totalorder %s27, 0
      %p258 = por %p256, %p257
      %p259 = scmp.ne.s32.totalorder %s251, %s253
      %p260 = scmp.eq.s32.totalorder %s32, 3
      %p261 = por %p259, %p260
      %p262 = scmp.ne.s32.totalorder %s253, %s254
      %p263 = scmp.eq.s32.totalorder %s32, 0
      %p264 = por %p262, %p263
      %p265 = scmp.ne.s32.totalorder %s253, %s254
      %p266 = scmp.eq.s32.totalorder %s33, 3
      %p267 = por %p265, %p266
      %p269 = scmp.ne.s32.totalorder %s254, %s268
      %p270 = scmp.eq.s32.totalorder %s33, 0
      %p271 = por %p269, %p270
      %s272 = ssub.s32 %s34, %s46
      %p273 = scmp.eq.s32.totalorder %s272, 0
      %s275 = sadd.s32 %s274, 1
      %s276 = scalar_select %p273, %s274, %s275
      %p279 = pneg %p273
      %p280 = scmp.eq.s32.totalorder %s27, 3
      %p281 = por %p279, %p280
      %p282 = scmp.ne.s32.totalorder %s274, %s277
      %p283 = scmp.eq.s32.totalorder %s27, 0
      %p284 = por %p282, %p283
      %p285 = scmp.ne.s32.totalorder %s274, %s277
      %p286 = scmp.eq.s32.totalorder %s32, 3
      %p287 = por %p285, %p286
      %p288 = scmp.ne.s32.totalorder %s277, %s278
      %p289 = scmp.eq.s32.totalorder %s32, 0
      %p290 = por %p288, %p289
      %p291 = scmp.ne.s32.totalorder %s277, %s278
      %p292 = scmp.eq.s32.totalorder %s33, 3
      %p293 = por %p291, %p292
      %p295 = scmp.ne.s32.totalorder %s278, %s294
      %p296 = scmp.eq.s32.totalorder %s33, 0
      %p297 = por %p295, %p296
      %p298 = scmp.le.s32.totalorder 1, %s27
      %p299 = scmp.lt.s32.totalorder %s27, 5
      %p300 = pnand %p298, %p299
      %p301 = pneg %p300
      // Predicated region
      $region9: #{tpu_custom_call.1} parent=5 // pred_check
        _
      $region10: #{tpu_custom_call.1} parent=5 // pred_check_branch
        %303 = sbr.rel (%p300) target = $region12
      $region11: #{tpu_custom_call.1} parent=5 // pred_region
        %s304 = ssub.s32 %s27, 1
        // Predicated region
        $region13: #{tpu_custom_call.1} parent=11 // pred_check
          %p305 = pneg %p138
        $region14: #{tpu_custom_call.1} parent=11 // pred_check_branch
          %307 = sbr.rel (%p305) target = $region16
        $region15: #{tpu_custom_call.1} parent=11 // pred_region
          %s309 = ssub.s32 2048, 2048
          %310 = vsyncadd [#allocation11], %s309
          %s311 = sshll.u32 [#allocation10], 4
          %s312 = int_to_ptr.vmem [resolvable:$true] %s311
          %317 = dma.hbm_to_vmem [thread:$0]  %s3, 2048, %s312, [#allocation11], 128, 128, 8
        $region16: #{tpu_custom_call.1} parent=11 // pred_fallthru
          _
        // Predicated region
        $region17: #{tpu_custom_call.1} parent=11 // pred_check
          %p318 = pneg %p159
        $region18: #{tpu_custom_call.1} parent=11 // pred_check_branch
          %320 = sbr.rel (%p318) target = $region20
        $region19: #{tpu_custom_call.1} parent=11 // pred_region
          _
        $region20: #{tpu_custom_call.1} parent=11 // pred_fallthru
          _
        // Predicated region
        $region21: #{tpu_custom_call.1} parent=11 // pred_check
          %p321 = pneg %p180
        $region22: #{tpu_custom_call.1} parent=11 // pred_check_branch
          %323 = sbr.rel (%p321) target = $region24
        $region23: #{tpu_custom_call.1} parent=11 // pred_region
          %s325 = ssub.s32 2048, 2048
          %326 = vsyncadd [#allocation11], %s325
          %s327 = sshll.u32 [#allocation12], 4
          %s328 = int_to_ptr.vmem [resolvable:$true] %s327
          %333 = dma.hbm_to_vmem [thread:$0]  %s5, 2048, %s328, [#allocation11], 128, 128, 8
        $region24: #{tpu_custom_call.1} parent=11 // pred_fallthru
          _
        // Predicated region
        $region25: #{tpu_custom_call.1} parent=11 // pred_check
          %p334 = pneg %p201
        $region26: #{tpu_custom_call.1} parent=11 // pred_check_branch
          %336 = sbr.rel (%p334) target = $region28
        $region27: #{tpu_custom_call.1} parent=11 // pred_region
          _
        $region28: #{tpu_custom_call.1} parent=11 // pred_fallthru
          _
        // Predicated region
        $region29: #{tpu_custom_call.1} parent=11 // pred_check
          %p337 = pneg %p222
        $region30: #{tpu_custom_call.1} parent=11 // pred_check_branch
          %339 = sbr.rel (%p337) target = $region32
        $region31: #{tpu_custom_call.1} parent=11 // pred_region
          _
        $region32: #{tpu_custom_call.1} parent=11 // pred_fallthru
          _
        // Predicated region
        $region33: #{tpu_custom_call.1} parent=11 // pred_check
          %p340 = pneg %p243
        $region34: #{tpu_custom_call.1} parent=11 // pred_check_branch
          %342 = sbr.rel (%p340) target = $region36
        $region35: #{tpu_custom_call.1} parent=11 // pred_region
          _
        $region36: #{tpu_custom_call.1} parent=11 // pred_fallthru
          _
        // Predicated region
        $region37: #{tpu_custom_call.1} parent=11 // pred_check
          %p343 = pneg %p264
        $region38: #{tpu_custom_call.1} parent=11 // pred_check_branch
          %345 = sbr.rel (%p343) target = $region40
        $region39: #{tpu_custom_call.1} parent=11 // pred_region
          _
        $region40: #{tpu_custom_call.1} parent=11 // pred_fallthru
          _
      $region12: #{tpu_custom_call.1} parent=5 // pred_fallthru
        _
      %p346 = scmp.lt.s32.totalorder %s27, 4
      // Predicated region
      $region41: #{tpu_custom_call.1} parent=5 // pred_check
        %p347 = pneg %p346
      $region42: #{tpu_custom_call.1} parent=5 // pred_check_branch
        %349 = sbr.rel (%p347) target = $region44
      $region43: #{tpu_custom_call.1} parent=5 // pred_region
        // Predicated region
        $region45: #{tpu_custom_call.1} parent=43 // pred_check
          %p350 = pneg %p59
        $region46: #{tpu_custom_call.1} parent=43 // pred_check_branch
          %352 = sbr.rel (%p350) target = $region48
        $region47: #{tpu_custom_call.1} parent=43 // pred_region
          %s353 = sand.u32 %s49, 1
          %s354 = scalar_lea.sflag [#allocation5], %s353
          %s355 = sand.u32 %s49, 1
          %s356 = smul.addr %s355, 256
          %s357 = scalar_lea.vmem [#allocation4], %s356
          %s358 = smul.u32 32, %s34
          %s360 = ssub.s32 4096, 4096
          %361 = vsyncadd %s354, %s360
          %s362 = smul.addr %s358, 128
          %s363 = scalar_lea.hbm %s0, %s362
          %s364 = sshll.u32 %s357, 4
          %s365 = int_to_ptr.vmem [resolvable:$true] %s364
          %370 = dma.hbm_to_vmem [thread:$0]  %s363, 4096, %s365, %s354, 128, 128, 8
        $region48: #{tpu_custom_call.1} parent=43 // pred_fallthru
          _
        // Predicated region
        $region49: #{tpu_custom_call.1} parent=43 // pred_check
          %p371 = pneg %p85
        $region50: #{tpu_custom_call.1} parent=43 // pred_check_branch
          %373 = sbr.rel (%p371) target = $region52
        $region51: #{tpu_custom_call.1} parent=43 // pred_region
          %s374 = sand.u32 %s27, 1
          %s375 = scalar_lea.sflag [#allocation8], %s374
          %s376 = sand.u32 %s75, 1
          %s377 = smul.addr %s376, 512
          %s378 = scalar_lea.vmem [#allocation7], %s377
          %s379 = smul.u32 64, %s35
          %s381 = ssub.s32 8192, 8192
          %382 = vsyncadd %s375, %s381
          %s383 = smul.addr %s379, 128
          %s384 = scalar_lea.hbm %s1, %s383
          %s385 = sshll.u32 %s378, 4
          %s386 = int_to_ptr.vmem [resolvable:$true] %s385
          %391 = dma.hbm_to_vmem [thread:$0]  %s384, 8192, %s386, %s375, 128, 128, 8
        $region52: #{tpu_custom_call.1} parent=43 // pred_fallthru
          _
        // Predicated region
        $region53: #{tpu_custom_call.1} parent=43 // pred_check
          %p392 = pneg %p111
        $region54: #{tpu_custom_call.1} parent=43 // pred_check_branch
          %394 = sbr.rel (%p392) target = $region56
        $region55: #{tpu_custom_call.1} parent=43 // pred_region
          %s395 = sand.u32 %s27, 1
          %s396 = scalar_lea.sflag [#allocation8], %s395
          %s397 = sand.u32 %s101, 1
          %s398 = smul.addr %s397, 4
          %s399 = scalar_lea.vmem [#allocation9], %s398
          %s400 = smul.u32 4, %s35
          %s402 = ssub.s32 64, 64
          %403 = vsyncadd %s396, %s402
          %s404 = smul.addr %s400, 16
          %s405 = scalar_lea.hbm %s2, %s404
          %s407 = sshll.u32 %s399, 4
          %s408 = int_to_ptr.vmem [resolvable:$true] %s407
          %410 = dma.hbm_to_vmem [thread:$0]  %s405, 64, %s408, %s396
        $region56: #{tpu_custom_call.1} parent=43 // pred_fallthru
          _
      $region44: #{tpu_custom_call.1} parent=5 // pred_fallthru
        _
      %p411 = scmp.le.s32.totalorder 1, %s27
      %p412 = scmp.lt.s32.totalorder %s27, 5
      %p413 = pnand %p411, %p412
      %p414 = pneg %p413
      // Predicated region
      $region57: #{tpu_custom_call.1} parent=5 // pred_check
        _
      $region58: #{tpu_custom_call.1} parent=5 // pred_check_branch
        %416 = sbr.rel (%p413) target = $region60
      $region59: #{tpu_custom_call.1} parent=5 // pred_region
        %s417 = ssub.s32 %s27, 1
        %s418 = sand.u32 %s52, 1
        %s419 = scalar_lea.sflag [#allocation5], %s418
        %s420 = sand.u32 %s52, 1
        %s421 = smul.addr %s420, 256
        %s422 = scalar_lea.vmem [#allocation4], %s421
        // Predicated region
        $region61: #{tpu_custom_call.1} parent=59 // pred_check
          %p423 = pneg %p65
        $region62: #{tpu_custom_call.1} parent=59 // pred_check_branch
          %425 = sbr.rel (%p423) target = $region64
        $region63: #{tpu_custom_call.1} parent=59 // pred_region
          %426 = dma.done %s419, 4096
        $region64: #{tpu_custom_call.1} parent=59 // pred_fallthru
          _
        %s427 = sand.u32 %s32, 1
        %s428 = scalar_lea.sflag [#allocation8], %s427
        %s429 = sand.u32 %s78, 1
        %s430 = smul.addr %s429, 512
        %s431 = scalar_lea.vmem [#allocation7], %s430
        // Predicated region
        $region65: #{tpu_custom_call.1} parent=59 // pred_check
          %p432 = pneg %p91
        $region66: #{tpu_custom_call.1} parent=59 // pred_check_branch
          %434 = sbr.rel (%p432) target = $region68
        $region67: #{tpu_custom_call.1} parent=59 // pred_region
          %435 = dma.done %s428, 8192
        $region68: #{tpu_custom_call.1} parent=59 // pred_fallthru
          _
        %s436 = sand.u32 %s32, 1
        %s437 = scalar_lea.sflag [#allocation8], %s436
        %s438 = sand.u32 %s104, 1
        %s439 = smul.addr %s438, 4
        %s440 = scalar_lea.vmem [#allocation9], %s439
        // Predicated region
        $region69: #{tpu_custom_call.1} parent=59 // pred_check
          %p441 = pneg %p117
        $region70: #{tpu_custom_call.1} parent=59 // pred_check_branch
          %443 = sbr.rel (%p441) target = $region72
        $region71: #{tpu_custom_call.1} parent=59 // pred_region
          %444 = dma.done %s437, 64
        $region72: #{tpu_custom_call.1} parent=59 // pred_fallthru
          _
        // Predicated region
        $region73: #{tpu_custom_call.1} parent=59 // pred_check
          %p445 = pneg %p138
        $region74: #{tpu_custom_call.1} parent=59 // pred_check_branch
          %447 = sbr.rel (%p445) target = $region76
        $region75: #{tpu_custom_call.1} parent=59 // pred_region
          %448 = dma.done [#allocation11], 2048
        $region76: #{tpu_custom_call.1} parent=59 // pred_fallthru
          _
        // Predicated region
        $region77: #{tpu_custom_call.1} parent=59 // pred_check
          %p449 = pneg %p180
        $region78: #{tpu_custom_call.1} parent=59 // pred_check_branch
          %451 = sbr.rel (%p449) target = $region80
        $region79: #{tpu_custom_call.1} parent=59 // pred_region
          %452 = dma.done [#allocation11], 2048
        $region80: #{tpu_custom_call.1} parent=59 // pred_fallthru
          _
        %s453 = sand.u32 %s52, 1
        %s454 = scalar_lea.sflag [#allocation5], %s453
        %s455 = sand.u32 %s52, 1
        %s456 = smul.addr %s455, 256
        %s457 = scalar_lea.vmem [#allocation4], %s456
        %p458 = pneg %p65
        %p459 = pneg %p62
        %s460 = sand.u32 %s32, 1
        %s461 = scalar_lea.sflag [#allocation8], %s460
        %s462 = sand.u32 %s78, 1
        %s463 = smul.addr %s462, 512
        %s464 = scalar_lea.vmem [#allocation7], %s463
        %p465 = pneg %p91
        %p466 = pneg %p88
        %s467 = sand.u32 %s32, 1
        %s468 = scalar_lea.sflag [#allocation8], %s467
        %s469 = sand.u32 %s104, 1
        %s470 = smul.addr %s469, 4
        %s471 = scalar_lea.vmem [#allocation9], %s470
        %p472 = pneg %p117
        %p473 = pneg %p114
        %p474 = pneg %p138
        %p475 = pneg %p135
        %p476 = pneg %p159
        %p477 = pneg %p156
        %p478 = pneg %p180
        %p479 = pneg %p177
        %p480 = pneg %p201
        %p481 = pneg %p198
        %p482 = pneg %p222
        %p483 = pneg %p219
        %p484 = pneg %p243
        %p485 = pneg %p240
        %p486 = pneg %p264
        %p487 = pneg %p261
        %p488 = pneg %p290
        %p489 = pneg %p287
        %s490 = sand.u32 %s277, 1
        %s491 = scalar_lea.sflag [#allocation6], %s490
        %s492 = sand.u32 %s277, 1
        %s493 = smul.addr %s492, 256
        %s494 = scalar_lea.vmem [#allocation13], %s493
        %s495 = smul.u32 32, %s36
        %s496 = smul.u32 64, %s37
        %s497 = smul.u32 4, %s37
        %s498 = smul.u32 32, %s36
        %s499 = smul.u32 %s36, 256
        %p500 = scmp.eq.s32.totalorder %s37, 0
        // Predicated region
        $region81: #{tpu_custom_call.1} parent=59 // pred_check
          %p501 = pneg %p500
        $region82: #{tpu_custom_call.1} parent=59 // pred_check_branch
          %503 = sbr.rel (%p501) target = $region84
        $region83: #{tpu_custom_call.1} parent=59 // pred_region
          %504 = vst [vmem:[#allocation2] sm:$0xff] 0.0
          %505 = vst [vmem:[#allocation2 + $0x8] sm:$0xff] 0.0
          %506 = vst [vmem:[#allocation2 + $0x10] sm:$0xff] 0.0
          %507 = vst [vmem:[#allocation2 + $0x18] sm:$0xff] 0.0
          %508 = vst [vmem:[#allocation2 + $0x20] sm:$0xff] 0.0
          %509 = vst [vmem:[#allocation2 + $0x28] sm:$0xff] 0.0
          %510 = vst [vmem:[#allocation2 + $0x30] sm:$0xff] 0.0
          %511 = vst [vmem:[#allocation2 + $0x38] sm:$0xff] 0.0
          %512 = vst [vmem:[#allocation2 + $0x40] sm:$0xff] 0.0
          %513 = vst [vmem:[#allocation2 + $0x48] sm:$0xff] 0.0
          %514 = vst [vmem:[#allocation2 + $0x50] sm:$0xff] 0.0
          %515 = vst [vmem:[#allocation2 + $0x58] sm:$0xff] 0.0
          %516 = vst [vmem:[#allocation2 + $0x60] sm:$0xff] 0.0
          %517 = vst [vmem:[#allocation2 + $0x68] sm:$0xff] 0.0
          %518 = vst [vmem:[#allocation2 + $0x70] sm:$0xff] 0.0
          %519 = vst [vmem:[#allocation2 + $0x78] sm:$0xff] 0.0
          %520 = vst [vmem:[#allocation2 + $0x80] sm:$0xff] 0.0
          %521 = vst [vmem:[#allocation2 + $0x88] sm:$0xff] 0.0
          %522 = vst [vmem:[#allocation2 + $0x90] sm:$0xff] 0.0
          %523 = vst [vmem:[#allocation2 + $0x98] sm:$0xff] 0.0
          %524 = vst [vmem:[#allocation2 + $0xa0] sm:$0xff] 0.0
          %525 = vst [vmem:[#allocation2 + $0xa8] sm:$0xff] 0.0
          %526 = vst [vmem:[#allocation2 + $0xb0] sm:$0xff] 0.0
          %527 = vst [vmem:[#allocation2 + $0xb8] sm:$0xff] 0.0
          %528 = vst [vmem:[#allocation2 + $0xc0] sm:$0xff] 0.0
          %529 = vst [vmem:[#allocation2 + $0xc8] sm:$0xff] 0.0
          %530 = vst [vmem:[#allocation2 + $0xd0] sm:$0xff] 0.0
          %531 = vst [vmem:[#allocation2 + $0xd8] sm:$0xff] 0.0
          %532 = vst [vmem:[#allocation2 + $0xe0] sm:$0xff] 0.0
          %533 = vst [vmem:[#allocation2 + $0xe8] sm:$0xff] 0.0
          %534 = vst [vmem:[#allocation2 + $0xf0] sm:$0xff] 0.0
          %535 = vst [vmem:[#allocation2 + $0xf8] sm:$0xff] 0.0
        $region84: #{tpu_custom_call.1} parent=59 // pred_fallthru
          _
        %v536 = vld [vmem:[%s440] sm:$0xf]
        %v537 = vlaneseq
        %v538 = vshrl.u32 %v537, 7
        %v539 = vadd.s32 %v538, 8
        %v540 = vadd.s32 %v538, 16
        %v541 = vadd.s32 %v538, 24
        %v542 = vadd.s32 %v538, 32
        %v543 = vadd.s32 %v538, 40
        %v544 = vadd.s32 %v538, 48
        %v545 = vadd.s32 %v538, 56
        %v546 = vadd.s32 %v538, 64
        %v547 = vadd.s32 %v538, 72
        %v548 = vadd.s32 %v538, 80
        %v549 = vadd.s32 %v538, 88
        %v550 = vadd.s32 %v538, 96
        %v551 = vadd.s32 %v538, 104
        %v552 = vadd.s32 %v538, 112
        %v553 = vadd.s32 %v538, 120
        %v554 = vadd.s32 %v538, 128
        %v555 = vadd.s32 %v538, 136
        %v556 = vadd.s32 %v538, 144
        %v557 = vadd.s32 %v538, 152
        %v558 = vadd.s32 %v538, 160
        %v559 = vadd.s32 %v538, 168
        %v560 = vadd.s32 %v538, 176
        %v561 = vadd.s32 %v538, 184
        %v562 = vadd.s32 %v538, 192
        %v563 = vadd.s32 %v538, 200
        %v564 = vadd.s32 %v538, 208
        %v565 = vadd.s32 %v538, 216
        %v566 = vadd.s32 %v538, 224
        %v567 = vadd.s32 %v538, 232
        %v568 = vadd.s32 %v538, 240
        %v569 = vadd.s32 %v538, 248
        %v570 = vstv %s499
        %v571 = vadd.s32 %v570, %v538
        %v572 = vadd.s32 %v570, %v539
        %v573 = vadd.s32 %v570, %v540
        %v574 = vadd.s32 %v570, %v541
        %v575 = vadd.s32 %v570, %v542
        %v576 = vadd.s32 %v570, %v543
        %v577 = vadd.s32 %v570, %v544
        %v578 = vadd.s32 %v570, %v545
        %v579 = vadd.s32 %v570, %v546
        %v580 = vadd.s32 %v570, %v547
        %v581 = vadd.s32 %v570, %v548
        %v582 = vadd.s32 %v570, %v549
        %v583 = vadd.s32 %v570, %v550
        %v584 = vadd.s32 %v570, %v551
        %v585 = vadd.s32 %v570, %v552
        %v586 = vadd.s32 %v570, %v553
        %v587 = vadd.s32 %v570, %v554
        %v588 = vadd.s32 %v570, %v555
        %v589 = vadd.s32 %v570, %v556
        %v590 = vadd.s32 %v570, %v557
        %v591 = vadd.s32 %v570, %v558
        %v592 = vadd.s32 %v570, %v559
        %v593 = vadd.s32 %v570, %v560
        %v594 = vadd.s32 %v570, %v561
        %v595 = vadd.s32 %v570, %v562
        %v596 = vadd.s32 %v570, %v563
        %v597 = vadd.s32 %v570, %v564
        %v598 = vadd.s32 %v570, %v565
        %v599 = vadd.s32 %v570, %v566
        %v600 = vadd.s32 %v570, %v567
        %v601 = vadd.s32 %v570, %v568
        %v602 = vadd.s32 %v570, %v569
        %v603 = vlaneseq
        %v604 = vshrl.u32 %v603, 7
        %v605 = vsub.s32 0, %v604
        %v606 = vrot.slane %v536, %v605
        %v607 = vlaneseq
        %v608 = vshrl.u32 %v607, 7
        %v609 = vsub.s32 1, %v608
        %v610 = vrot.slane %v536, %v609
        %v611 = vlaneseq
        %v612 = vshrl.u32 %v611, 7
        %v613 = vsub.s32 2, %v612
        %v614 = vrot.slane %v536, %v613
        %v615 = vlaneseq
        %v616 = vshrl.u32 %v615, 7
        %v617 = vsub.s32 3, %v616
        %v618 = vrot.slane %v536, %v617
        %vm619 = vcmp.eq.s32.totalorder %v606, %v571
        %vm620 = vcmp.eq.s32.totalorder %v610, %v571
        %vm621 = vcmp.eq.s32.totalorder %v614, %v571
        %vm622 = vcmp.eq.s32.totalorder %v618, %v571
        %vm623 = vcmp.eq.s32.totalorder %v606, %v572
        %vm624 = vcmp.eq.s32.totalorder %v610, %v572
        %vm625 = vcmp.eq.s32.totalorder %v614, %v572
        %vm626 = vcmp.eq.s32.totalorder %v618, %v572
        %vm627 = vcmp.eq.s32.totalorder %v606, %v573
        %vm628 = vcmp.eq.s32.totalorder %v610, %v573
        %vm629 = vcmp.eq.s32.totalorder %v614, %v573
        %vm630 = vcmp.eq.s32.totalorder %v618, %v573
        %vm631 = vcmp.eq.s32.totalorder %v606, %v574
        %vm632 = vcmp.eq.s32.totalorder %v610, %v574
        %vm633 = vcmp.eq.s32.totalorder %v614, %v574
        %vm634 = vcmp.eq.s32.totalorder %v618, %v574
        %vm635 = vcmp.eq.s32.totalorder %v606, %v575
        %vm636 = vcmp.eq.s32.totalorder %v610, %v575
        %vm637 = vcmp.eq.s32.totalorder %v614, %v575
        %vm638 = vcmp.eq.s32.totalorder %v618, %v575
        %vm639 = vcmp.eq.s32.totalorder %v606, %v576
        %vm640 = vcmp.eq.s32.totalorder %v610, %v576
        %vm641 = vcmp.eq.s32.totalorder %v614, %v576
        %vm642 = vcmp.eq.s32.totalorder %v618, %v576
        %vm643 = vcmp.eq.s32.totalorder %v606, %v577
        %vm644 = vcmp.eq.s32.totalorder %v610, %v577
        %vm645 = vcmp.eq.s32.totalorder %v614, %v577
        %vm646 = vcmp.eq.s32.totalorder %v618, %v577
        %vm647 = vcmp.eq.s32.totalorder %v606, %v578
        %vm648 = vcmp.eq.s32.totalorder %v610, %v578
        %vm649 = vcmp.eq.s32.totalorder %v614, %v578
        %vm650 = vcmp.eq.s32.totalorder %v618, %v578
        %vm651 = vcmp.eq.s32.totalorder %v606, %v579
        %vm652 = vcmp.eq.s32.totalorder %v610, %v579
        %vm653 = vcmp.eq.s32.totalorder %v614, %v579
        %vm654 = vcmp.eq.s32.totalorder %v618, %v579
        %vm655 = vcmp.eq.s32.totalorder %v606, %v580
        %vm656 = vcmp.eq.s32.totalorder %v610, %v580
        %vm657 = vcmp.eq.s32.totalorder %v614, %v580
        %vm658 = vcmp.eq.s32.totalorder %v618, %v580
        %vm659 = vcmp.eq.s32.totalorder %v606, %v581
        %vm660 = vcmp.eq.s32.totalorder %v610, %v581
        %vm661 = vcmp.eq.s32.totalorder %v614, %v581
        %vm662 = vcmp.eq.s32.totalorder %v618, %v581
        %vm663 = vcmp.eq.s32.totalorder %v606, %v582
        %vm664 = vcmp.eq.s32.totalorder %v610, %v582
        %vm665 = vcmp.eq.s32.totalorder %v614, %v582
        %vm666 = vcmp.eq.s32.totalorder %v618, %v582
        %vm667 = vcmp.eq.s32.totalorder %v606, %v583
        %vm668 = vcmp.eq.s32.totalorder %v610, %v583
        %vm669 = vcmp.eq.s32.totalorder %v614, %v583
        %vm670 = vcmp.eq.s32.totalorder %v618, %v583
        %vm671 = vcmp.eq.s32.totalorder %v606, %v584
        %vm672 = vcmp.eq.s32.totalorder %v610, %v584
        %vm673 = vcmp.eq.s32.totalorder %v614, %v584
        %vm674 = vcmp.eq.s32.totalorder %v618, %v584
        %vm675 = vcmp.eq.s32.totalorder %v606, %v585
        %vm676 = vcmp.eq.s32.totalorder %v610, %v585
        %vm677 = vcmp.eq.s32.totalorder %v614, %v585
        %vm678 = vcmp.eq.s32.totalorder %v618, %v585
        %vm679 = vcmp.eq.s32.totalorder %v606, %v586
        %vm680 = vcmp.eq.s32.totalorder %v610, %v586
        %vm681 = vcmp.eq.s32.totalorder %v614, %v586
        %vm682 = vcmp.eq.s32.totalorder %v618, %v586
        %vm683 = vcmp.eq.s32.totalorder %v606, %v587
        %vm684 = vcmp.eq.s32.totalorder %v610, %v587
        %vm685 = vcmp.eq.s32.totalorder %v614, %v587
        %vm686 = vcmp.eq.s32.totalorder %v618, %v587
        %vm687 = vcmp.eq.s32.totalorder %v606, %v588
        %vm688 = vcmp.eq.s32.totalorder %v610, %v588
        %vm689 = vcmp.eq.s32.totalorder %v614, %v588
        %vm690 = vcmp.eq.s32.totalorder %v618, %v588
        %vm691 = vcmp.eq.s32.totalorder %v606, %v589
        %vm692 = vcmp.eq.s32.totalorder %v610, %v589
        %vm693 = vcmp.eq.s32.totalorder %v614, %v589
        %vm694 = vcmp.eq.s32.totalorder %v618, %v589
        %vm695 = vcmp.eq.s32.totalorder %v606, %v590
        %vm696 = vcmp.eq.s32.totalorder %v610, %v590
        %vm697 = vcmp.eq.s32.totalorder %v614, %v590
        %vm698 = vcmp.eq.s32.totalorder %v618, %v590
        %vm699 = vcmp.eq.s32.totalorder %v606, %v591
        %vm700 = vcmp.eq.s32.totalorder %v610, %v591
        %vm701 = vcmp.eq.s32.totalorder %v614, %v591
        %vm702 = vcmp.eq.s32.totalorder %v618, %v591
        %vm703 = vcmp.eq.s32.totalorder %v606, %v592
        %vm704 = vcmp.eq.s32.totalorder %v610, %v592
        %vm705 = vcmp.eq.s32.totalorder %v614, %v592
        %vm706 = vcmp.eq.s32.totalorder %v618, %v592
        %vm707 = vcmp.eq.s32.totalorder %v606, %v593
        %vm708 = vcmp.eq.s32.totalorder %v610, %v593
        %vm709 = vcmp.eq.s32.totalorder %v614, %v593
        %vm710 = vcmp.eq.s32.totalorder %v618, %v593
        %vm711 = vcmp.eq.s32.totalorder %v606, %v594
        %vm712 = vcmp.eq.s32.totalorder %v610, %v594
        %vm713 = vcmp.eq.s32.totalorder %v614, %v594
        %vm714 = vcmp.eq.s32.totalorder %v618, %v594
        %vm715 = vcmp.eq.s32.totalorder %v606, %v595
        %vm716 = vcmp.eq.s32.totalorder %v610, %v595
        %vm717 = vcmp.eq.s32.totalorder %v614, %v595
        %vm718 = vcmp.eq.s32.totalorder %v618, %v595
        %vm719 = vcmp.eq.s32.totalorder %v606, %v596
        %vm720 = vcmp.eq.s32.totalorder %v610, %v596
        %vm721 = vcmp.eq.s32.totalorder %v614, %v596
        %vm722 = vcmp.eq.s32.totalorder %v618, %v596
        %vm723 = vcmp.eq.s32.totalorder %v606, %v597
        %vm724 = vcmp.eq.s32.totalorder %v610, %v597
        %vm725 = vcmp.eq.s32.totalorder %v614, %v597
        %vm726 = vcmp.eq.s32.totalorder %v618, %v597
        %vm727 = vcmp.eq.s32.totalorder %v606, %v598
        %vm728 = vcmp.eq.s32.totalorder %v610, %v598
        %vm729 = vcmp.eq.s32.totalorder %v614, %v598
        %vm730 = vcmp.eq.s32.totalorder %v618, %v598
        %vm731 = vcmp.eq.s32.totalorder %v606, %v599
        %vm732 = vcmp.eq.s32.totalorder %v610, %v599
        %vm733 = vcmp.eq.s32.totalorder %v614, %v599
        %vm734 = vcmp.eq.s32.totalorder %v618, %v599
        %vm735 = vcmp.eq.s32.totalorder %v606, %v600
        %vm736 = vcmp.eq.s32.totalorder %v610, %v600
        %vm737 = vcmp.eq.s32.totalorder %v614, %v600
        %vm738 = vcmp.eq.s32.totalorder %v618, %v600
        %vm739 = vcmp.eq.s32.totalorder %v606, %v601
        %vm740 = vcmp.eq.s32.totalorder %v610, %v601
        %vm741 = vcmp.eq.s32.totalorder %v614, %v601
        %vm742 = vcmp.eq.s32.totalorder %v618, %v601
        %vm743 = vcmp.eq.s32.totalorder %v606, %v602
        %vm744 = vcmp.eq.s32.totalorder %v610, %v602
        %vm745 = vcmp.eq.s32.totalorder %v614, %v602
        %vm746 = vcmp.eq.s32.totalorder %v618, %v602
        %v747 = vsel %vm619, 1, 0
        %v748 = vsel %vm620, 1, 0
        %v749 = vsel %vm621, 1, 0
        %v750 = vsel %vm622, 1, 0
        %v751 = vsel %vm623, 1, 0
        %v752 = vsel %vm624, 1, 0
        %v753 = vsel %vm625, 1, 0
        %v754 = vsel %vm626, 1, 0
        %v755 = vsel %vm627, 1, 0
        %v756 = vsel %vm628, 1, 0
        %v757 = vsel %vm629, 1, 0
        %v758 = vsel %vm630, 1, 0
        %v759 = vsel %vm631, 1, 0
        %v760 = vsel %vm632, 1, 0
        %v761 = vsel %vm633, 1, 0
        %v762 = vsel %vm634, 1, 0
        %v763 = vsel %vm635, 1, 0
        %v764 = vsel %vm636, 1, 0
        %v765 = vsel %vm637, 1, 0
        %v766 = vsel %vm638, 1, 0
        %v767 = vsel %vm639, 1, 0
        %v768 = vsel %vm640, 1, 0
        %v769 = vsel %vm641, 1, 0
        %v770 = vsel %vm642, 1, 0
        %v771 = vsel %vm643, 1, 0
        %v772 = vsel %vm644, 1, 0
        %v773 = vsel %vm645, 1, 0
        %v774 = vsel %vm646, 1, 0
        %v775 = vsel %vm647, 1, 0
        %v776 = vsel %vm648, 1, 0
        %v777 = vsel %vm649, 1, 0
        %v778 = vsel %vm650, 1, 0
        %v779 = vsel %vm651, 1, 0
        %v780 = vsel %vm652, 1, 0
        %v781 = vsel %vm653, 1, 0
        %v782 = vsel %vm654, 1, 0
        %v783 = vsel %vm655, 1, 0
        %v784 = vsel %vm656, 1, 0
        %v785 = vsel %vm657, 1, 0
        %v786 = vsel %vm658, 1, 0
        %v787 = vsel %vm659, 1, 0
        %v788 = vsel %vm660, 1, 0
        %v789 = vsel %vm661, 1, 0
        %v790 = vsel %vm662, 1, 0
        %v791 = vsel %vm663, 1, 0
        %v792 = vsel %vm664, 1, 0
        %v793 = vsel %vm665, 1, 0
        %v794 = vsel %vm666, 1, 0
        %v795 = vsel %vm667, 1, 0
        %v796 = vsel %vm668, 1, 0
        %v797 = vsel %vm669, 1, 0
        %v798 = vsel %vm670, 1, 0
        %v799 = vsel %vm671, 1, 0
        %v800 = vsel %vm672, 1, 0
        %v801 = vsel %vm673, 1, 0
        %v802 = vsel %vm674, 1, 0
        %v803 = vsel %vm675, 1, 0
        %v804 = vsel %vm676, 1, 0
        %v805 = vsel %vm677, 1, 0
        %v806 = vsel %vm678, 1, 0
        %v807 = vsel %vm679, 1, 0
        %v808 = vsel %vm680, 1, 0
        %v809 = vsel %vm681, 1, 0
        %v810 = vsel %vm682, 1, 0
        %v811 = vsel %vm683, 1, 0
        %v812 = vsel %vm684, 1, 0
        %v813 = vsel %vm685, 1, 0
        %v814 = vsel %vm686, 1, 0
        %v815 = vsel %vm687, 1, 0
        %v816 = vsel %vm688, 1, 0
        %v817 = vsel %vm689, 1, 0
        %v818 = vsel %vm690, 1, 0
        %v819 = vsel %vm691, 1, 0
        %v820 = vsel %vm692, 1, 0
        %v821 = vsel %vm693, 1, 0
        %v822 = vsel %vm694, 1, 0
        %v823 = vsel %vm695, 1, 0
        %v824 = vsel %vm696, 1, 0
        %v825 = vsel %vm697, 1, 0
        %v826 = vsel %vm698, 1, 0
        %v827 = vsel %vm699, 1, 0
        %v828 = vsel %vm700, 1, 0
        %v829 = vsel %vm701, 1, 0
        %v830 = vsel %vm702, 1, 0
        %v831 = vsel %vm703, 1, 0
        %v832 = vsel %vm704, 1, 0
        %v833 = vsel %vm705, 1, 0
        %v834 = vsel %vm706, 1, 0
        %v835 = vsel %vm707, 1, 0
        %v836 = vsel %vm708, 1, 0
        %v837 = vsel %vm709, 1, 0
        %v838 = vsel %vm710, 1, 0
        %v839 = vsel %vm711, 1, 0
        %v840 = vsel %vm712, 1, 0
        %v841 = vsel %vm713, 1, 0
        %v842 = vsel %vm714, 1, 0
        %v843 = vsel %vm715, 1, 0
        %v844 = vsel %vm716, 1, 0
        %v845 = vsel %vm717, 1, 0
        %v846 = vsel %vm718, 1, 0
        %v847 = vsel %vm719, 1, 0
        %v848 = vsel %vm720, 1, 0
        %v849 = vsel %vm721, 1, 0
        %v850 = vsel %vm722, 1, 0
        %v851 = vsel %vm723, 1, 0
        %v852 = vsel %vm724, 1, 0
        %v853 = vsel %vm725, 1, 0
        %v854 = vsel %vm726, 1, 0
        %v855 = vsel %vm727, 1, 0
        %v856 = vsel %vm728, 1, 0
        %v857 = vsel %vm729, 1, 0
        %v858 = vsel %vm730, 1, 0
        %v859 = vsel %vm731, 1, 0
        %v860 = vsel %vm732, 1, 0
        %v861 = vsel %vm733, 1, 0
        %v862 = vsel %vm734, 1, 0
        %v863 = vsel %vm735, 1, 0
        %v864 = vsel %vm736, 1, 0
        %v865 = vsel %vm737, 1, 0
        %v866 = vsel %vm738, 1, 0
        %v867 = vsel %vm739, 1, 0
        %v868 = vsel %vm740, 1, 0
        %v869 = vsel %vm741, 1, 0
        %v870 = vsel %vm742, 1, 0
        %v871 = vsel %vm743, 1, 0
        %v872 = vsel %vm744, 1, 0
        %v873 = vsel %vm745, 1, 0
        %v874 = vsel %vm746, 1, 0
        %v875 = vcvt.s32.f32 %v747
        %v876 = vcvt.s32.f32 %v748
        %v877 = vcvt.s32.f32 %v749
        %v878 = vcvt.s32.f32 %v750
        %v879 = vcvt.s32.f32 %v751
        %v880 = vcvt.s32.f32 %v752
        %v881 = vcvt.s32.f32 %v753
        %v882 = vcvt.s32.f32 %v754
        %v883 = vcvt.s32.f32 %v755
        %v884 = vcvt.s32.f32 %v756
        %v885 = vcvt.s32.f32 %v757
        %v886 = vcvt.s32.f32 %v758
        %v887 = vcvt.s32.f32 %v759
        %v888 = vcvt.s32.f32 %v760
        %v889 = vcvt.s32.f32 %v761
        %v890 = vcvt.s32.f32 %v762
        %v891 = vcvt.s32.f32 %v763
        %v892 = vcvt.s32.f32 %v764
        %v893 = vcvt.s32.f32 %v765
        %v894 = vcvt.s32.f32 %v766
        %v895 = vcvt.s32.f32 %v767
        %v896 = vcvt.s32.f32 %v768
        %v897 = vcvt.s32.f32 %v769
        %v898 = vcvt.s32.f32 %v770
        %v899 = vcvt.s32.f32 %v771
        %v900 = vcvt.s32.f32 %v772
        %v901 = vcvt.s32.f32 %v773
        %v902 = vcvt.s32.f32 %v774
        %v903 = vcvt.s32.f32 %v775
        %v904 = vcvt.s32.f32 %v776
        %v905 = vcvt.s32.f32 %v777
        %v906 = vcvt.s32.f32 %v778
        %v907 = vcvt.s32.f32 %v779
        %v908 = vcvt.s32.f32 %v780
        %v909 = vcvt.s32.f32 %v781
        %v910 = vcvt.s32.f32 %v782
        %v911 = vcvt.s32.f32 %v783
        %v912 = vcvt.s32.f32 %v784
        %v913 = vcvt.s32.f32 %v785
        %v914 = vcvt.s32.f32 %v786
        %v915 = vcvt.s32.f32 %v787
        %v916 = vcvt.s32.f32 %v788
        %v917 = vcvt.s32.f32 %v789
        %v918 = vcvt.s32.f32 %v790
        %v919 = vcvt.s32.f32 %v791
        %v920 = vcvt.s32.f32 %v792
        %v921 = vcvt.s32.f32 %v793
        %v922 = vcvt.s32.f32 %v794
        %v923 = vcvt.s32.f32 %v795
        %v924 = vcvt.s32.f32 %v796
        %v925 = vcvt.s32.f32 %v797
        %v926 = vcvt.s32.f32 %v798
        %v927 = vcvt.s32.f32 %v799
        %v928 = vcvt.s32.f32 %v800
        %v929 = vcvt.s32.f32 %v801
        %v930 = vcvt.s32.f32 %v802
        %v931 = vcvt.s32.f32 %v803
        %v932 = vcvt.s32.f32 %v804
        %v933 = vcvt.s32.f32 %v805
        %v934 = vcvt.s32.f32 %v806
        %v935 = vcvt.s32.f32 %v807
        %v936 = vcvt.s32.f32 %v808
        %v937 = vcvt.s32.f32 %v809
        %v938 = vcvt.s32.f32 %v810
        %v939 = vcvt.s32.f32 %v811
        %v940 = vcvt.s32.f32 %v812
        %v941 = vcvt.s32.f32 %v813
        %v942 = vcvt.s32.f32 %v814
        %v943 = vcvt.s32.f32 %v815
        %v944 = vcvt.s32.f32 %v816
        %v945 = vcvt.s32.f32 %v817
        %v946 = vcvt.s32.f32 %v818
        %v947 = vcvt.s32.f32 %v819
        %v948 = vcvt.s32.f32 %v820
        %v949 = vcvt.s32.f32 %v821
        %v950 = vcvt.s32.f32 %v822
        %v951 = vcvt.s32.f32 %v823
        %v952 = vcvt.s32.f32 %v824
        %v953 = vcvt.s32.f32 %v825
        %v954 = vcvt.s32.f32 %v826
        %v955 = vcvt.s32.f32 %v827
        %v956 = vcvt.s32.f32 %v828
        %v957 = vcvt.s32.f32 %v829
        %v958 = vcvt.s32.f32 %v830
        %v959 = vcvt.s32.f32 %v831
        %v960 = vcvt.s32.f32 %v832
        %v961 = vcvt.s32.f32 %v833
        %v962 = vcvt.s32.f32 %v834
        %v963 = vcvt.s32.f32 %v835
        %v964 = vcvt.s32.f32 %v836
        %v965 = vcvt.s32.f32 %v837
        %v966 = vcvt.s32.f32 %v838
        %v967 = vcvt.s32.f32 %v839
        %v968 = vcvt.s32.f32 %v840
        %v969 = vcvt.s32.f32 %v841
        %v970 = vcvt.s32.f32 %v842
        %v971 = vcvt.s32.f32 %v843
        %v972 = vcvt.s32.f32 %v844
        %v973 = vcvt.s32.f32 %v845
        %v974 = vcvt.s32.f32 %v846
        %v975 = vcvt.s32.f32 %v847
        %v976 = vcvt.s32.f32 %v848
        %v977 = vcvt.s32.f32 %v849
        %v978 = vcvt.s32.f32 %v850
        %v979 = vcvt.s32.f32 %v851
        %v980 = vcvt.s32.f32 %v852
        %v981 = vcvt.s32.f32 %v853
        %v982 = vcvt.s32.f32 %v854
        %v983 = vcvt.s32.f32 %v855
        %v984 = vcvt.s32.f32 %v856
        %v985 = vcvt.s32.f32 %v857
        %v986 = vcvt.s32.f32 %v858
        %v987 = vcvt.s32.f32 %v859
        %v988 = vcvt.s32.f32 %v860
        %v989 = vcvt.s32.f32 %v861
        %v990 = vcvt.s32.f32 %v862
        %v991 = vcvt.s32.f32 %v863
        %v992 = vcvt.s32.f32 %v864
        %v993 = vcvt.s32.f32 %v865
        %v994 = vcvt.s32.f32 %v866
        %v995 = vcvt.s32.f32 %v867
        %v996 = vcvt.s32.f32 %v868
        %v997 = vcvt.s32.f32 %v869
        %v998 = vcvt.s32.f32 %v870
        %v999 = vcvt.s32.f32 %v871
        %v1000 = vcvt.s32.f32 %v872
        %v1001 = vcvt.s32.f32 %v873
        %v1002 = vcvt.s32.f32 %v874
        %v1003 = vld [vmem:[#allocation2] sm:$0xff]
        %v1004 = vld [vmem:[#allocation2 + $0x8] sm:$0xff]
        %v1005 = vld [vmem:[#allocation2 + $0x10] sm:$0xff]
        %v1006 = vld [vmem:[#allocation2 + $0x18] sm:$0xff]
        %v1007 = vld [vmem:[#allocation2 + $0x20] sm:$0xff]
        %v1008 = vld [vmem:[#allocation2 + $0x28] sm:$0xff]
        %v1009 = vld [vmem:[#allocation2 + $0x30] sm:$0xff]
        %v1010 = vld [vmem:[#allocation2 + $0x38] sm:$0xff]
        %v1011 = vld [vmem:[#allocation2 + $0x40] sm:$0xff]
        %v1012 = vld [vmem:[#allocation2 + $0x48] sm:$0xff]
        %v1013 = vld [vmem:[#allocation2 + $0x50] sm:$0xff]
        %v1014 = vld [vmem:[#allocation2 + $0x58] sm:$0xff]
        %v1015 = vld [vmem:[#allocation2 + $0x60] sm:$0xff]
        %v1016 = vld [vmem:[#allocation2 + $0x68] sm:$0xff]
        %v1017 = vld [vmem:[#allocation2 + $0x70] sm:$0xff]
        %v1018 = vld [vmem:[#allocation2 + $0x78] sm:$0xff]
        %v1019 = vld [vmem:[#allocation2 + $0x80] sm:$0xff]
        %v1020 = vld [vmem:[#allocation2 + $0x88] sm:$0xff]
        %v1021 = vld [vmem:[#allocation2 + $0x90] sm:$0xff]
        %v1022 = vld [vmem:[#allocation2 + $0x98] sm:$0xff]
        %v1023 = vld [vmem:[#allocation2 + $0xa0] sm:$0xff]
        %v1024 = vld [vmem:[#allocation2 + $0xa8] sm:$0xff]
        %v1025 = vld [vmem:[#allocation2 + $0xb0] sm:$0xff]
        %v1026 = vld [vmem:[#allocation2 + $0xb8] sm:$0xff]
        %v1027 = vld [vmem:[#allocation2 + $0xc0] sm:$0xff]
        %v1028 = vld [vmem:[#allocation2 + $0xc8] sm:$0xff]
        %v1029 = vld [vmem:[#allocation2 + $0xd0] sm:$0xff]
        %v1030 = vld [vmem:[#allocation2 + $0xd8] sm:$0xff]
        %v1031 = vld [vmem:[#allocation2 + $0xe0] sm:$0xff]
        %v1032 = vld [vmem:[#allocation2 + $0xe8] sm:$0xff]
        %v1033 = vld [vmem:[#allocation2 + $0xf0] sm:$0xff]
        %v1034 = vld [vmem:[#allocation2 + $0xf8] sm:$0xff]
        %v1035 = vld [vmem:[%s431] sm:$0xff]
        %v1036 = vld [vmem:[%s431 + $0x8] sm:$0xff]
        %v1037 = vld [vmem:[%s431 + $0x10] sm:$0xff]
        %v1038 = vld [vmem:[%s431 + $0x18] sm:$0xff]
        %v1039 = vld [vmem:[%s431 + $0x20] sm:$0xff]
        %v1040 = vld [vmem:[%s431 + $0x28] sm:$0xff]
        %v1041 = vld [vmem:[%s431 + $0x30] sm:$0xff]
        %v1042 = vld [vmem:[%s431 + $0x38] sm:$0xff]
        %v1043 = vld [vmem:[%s431 + $0x40] sm:$0xff]
        %v1044 = vld [vmem:[%s431 + $0x48] sm:$0xff]
        %v1045 = vld [vmem:[%s431 + $0x50] sm:$0xff]
        %v1046 = vld [vmem:[%s431 + $0x58] sm:$0xff]
        %v1047 = vld [vmem:[%s431 + $0x60] sm:$0xff]
        %v1048 = vld [vmem:[%s431 + $0x68] sm:$0xff]
        %v1049 = vld [vmem:[%s431 + $0x70] sm:$0xff]
        %v1050 = vld [vmem:[%s431 + $0x78] sm:$0xff]
        %v1051 = vld [vmem:[%s431 + $0x80] sm:$0xff]
        %v1052 = vld [vmem:[%s431 + $0x88] sm:$0xff]
        %v1053 = vld [vmem:[%s431 + $0x90] sm:$0xff]
        %v1054 = vld [vmem:[%s431 + $0x98] sm:$0xff]
        %v1055 = vld [vmem:[%s431 + $0xa0] sm:$0xff]
        %v1056 = vld [vmem:[%s431 + $0xa8] sm:$0xff]
        %v1057 = vld [vmem:[%s431 + $0xb0] sm:$0xff]
        %v1058 = vld [vmem:[%s431 + $0xb8] sm:$0xff]
        %v1059 = vld [vmem:[%s431 + $0xc0] sm:$0xff]
        %v1060 = vld [vmem:[%s431 + $0xc8] sm:$0xff]
        %v1061 = vld [vmem:[%s431 + $0xd0] sm:$0xff]
        %v1062 = vld [vmem:[%s431 + $0xd8] sm:$0xff]
        %v1063 = vld [vmem:[%s431 + $0xe0] sm:$0xff]
        %v1064 = vld [vmem:[%s431 + $0xe8] sm:$0xff]
        %v1065 = vld [vmem:[%s431 + $0xf0] sm:$0xff]
        %v1066 = vld [vmem:[%s431 + $0xf8] sm:$0xff]
        %v1067 = vld [vmem:[%s431 + $0x100] sm:$0xff]
        %v1068 = vld [vmem:[%s431 + $0x108] sm:$0xff]
        %v1069 = vld [vmem:[%s431 + $0x110] sm:$0xff]
        %v1070 = vld [vmem:[%s431 + $0x118] sm:$0xff]
        %v1071 = vld [vmem:[%s431 + $0x120] sm:$0xff]
        %v1072 = vld [vmem:[%s431 + $0x128] sm:$0xff]
        %v1073 = vld [vmem:[%s431 + $0x130] sm:$0xff]
        %v1074 = vld [vmem:[%s431 + $0x138] sm:$0xff]
        %v1075 = vld [vmem:[%s431 + $0x140] sm:$0xff]
        %v1076 = vld [vmem:[%s431 + $0x148] sm:$0xff]
        %v1077 = vld [vmem:[%s431 + $0x150] sm:$0xff]
        %v1078 = vld [vmem:[%s431 + $0x158] sm:$0xff]
        %v1079 = vld [vmem:[%s431 + $0x160] sm:$0xff]
        %v1080 = vld [vmem:[%s431 + $0x168] sm:$0xff]
        %v1081 = vld [vmem:[%s431 + $0x170] sm:$0xff]
        %v1082 = vld [vmem:[%s431 + $0x178] sm:$0xff]
        %v1083 = vld [vmem:[%s431 + $0x180] sm:$0xff]
        %v1084 = vld [vmem:[%s431 + $0x188] sm:$0xff]
        %v1085 = vld [vmem:[%s431 + $0x190] sm:$0xff]
        %v1086 = vld [vmem:[%s431 + $0x198] sm:$0xff]
        %v1087 = vld [vmem:[%s431 + $0x1a0] sm:$0xff]
        %v1088 = vld [vmem:[%s431 + $0x1a8] sm:$0xff]
        %v1089 = vld [vmem:[%s431 + $0x1b0] sm:$0xff]
        %v1090 = vld [vmem:[%s431 + $0x1b8] sm:$0xff]
        %v1091 = vld [vmem:[%s431 + $0x1c0] sm:$0xff]
        %v1092 = vld [vmem:[%s431 + $0x1c8] sm:$0xff]
        %v1093 = vld [vmem:[%s431 + $0x1d0] sm:$0xff]
        %v1094 = vld [vmem:[%s431 + $0x1d8] sm:$0xff]
        %v1095 = vld [vmem:[%s431 + $0x1e0] sm:$0xff]
        %v1096 = vld [vmem:[%s431 + $0x1e8] sm:$0xff]
        %v1097 = vld [vmem:[%s431 + $0x1f0] sm:$0xff]
        %v1098 = vld [vmem:[%s431 + $0x1f8] sm:$0xff]
        %1099 = vmatprep.subr.mxu0 0.0
        %1100 = vmatpush1.msra.mxu0 %v1050
        %1101 = vmatprep.subr.mxu0 0.0
        %1102 = vmatpush1.msra.mxu0 %v1049
        %1103 = vmatprep.subr.mxu0 0.0
        %1104 = vmatpush1.msra.mxu0 %v1048
        %1105 = vmatprep.subr.mxu0 0.0
        %1106 = vmatpush1.msra.mxu0 %v1047
        %1107 = vmatprep.subr.mxu0 0.0
        %1108 = vmatpush1.msra.mxu0 %v1046
        %1109 = vmatprep.subr.mxu0 0.0
        %1110 = vmatpush1.msra.mxu0 %v1045
        %1111 = vmatprep.subr.mxu0 0.0
        %1112 = vmatpush1.msra.mxu0 %v1044
        %1113 = vmatprep.subr.mxu0 0.0
        %1114 = vmatpush1.msra.mxu0 %v1043
        %1115 = vmatprep.subr.mxu0 0.0
        %1116 = vmatpush1.msra.mxu0 %v1042
        %1117 = vmatprep.subr.mxu0 0.0
        %1118 = vmatpush1.msra.mxu0 %v1041
        %1119 = vmatprep.subr.mxu0 0.0
        %1120 = vmatpush1.msra.mxu0 %v1040
        %1121 = vmatprep.subr.mxu0 0.0
        %1122 = vmatpush1.msra.mxu0 %v1039
        %1123 = vmatprep.subr.mxu0 0.0
        %1124 = vmatpush1.msra.mxu0 %v1038
        %1125 = vmatprep.subr.mxu0 0.0
        %1126 = vmatpush1.msra.mxu0 %v1037
        %1127 = vmatprep.subr.mxu0 0.0
        %1128 = vmatpush1.msra.mxu0 %v1036
        %1129 = vmatprep.subr.mxu0 0.0
        %1130 = vmatpush1.msra.mxu0 %v1035
        %1131 = vmatprep.subr.mxu0 0.0
        %1132 = vmatpush2.msra.mxu0 %v1066
        %1133 = vmatprep.subr.mxu0 0.0
        %1134 = vmatpush2.msra.mxu0 %v1065
        %1135 = vmatprep.subr.mxu0 0.0
        %1136 = vmatpush2.msra.mxu0 %v1064
        %1137 = vmatprep.subr.mxu0 0.0
        %1138 = vmatpush2.msra.mxu0 %v1063
        %1139 = vmatprep.subr.mxu0 0.0
        %1140 = vmatpush2.msra.mxu0 %v1062
        %1141 = vmatprep.subr.mxu0 0.0
        %1142 = vmatpush2.msra.mxu0 %v1061
        %1143 = vmatprep.subr.mxu0 0.0
        %1144 = vmatpush2.msra.mxu0 %v1060
        %1145 = vmatprep.subr.mxu0 0.0
        %1146 = vmatpush2.msra.mxu0 %v1059
        %1147 = vmatprep.subr.mxu0 0.0
        %1148 = vmatpush2.msra.mxu0 %v1058
        %1149 = vmatprep.subr.mxu0 0.0
        %1150 = vmatpush2.msra.mxu0 %v1057
        %1151 = vmatprep.subr.mxu0 0.0
        %1152 = vmatpush2.msra.mxu0 %v1056
        %1153 = vmatprep.subr.mxu0 0.0
        %1154 = vmatpush2.msra.mxu0 %v1055
        %1155 = vmatprep.subr.mxu0 0.0
        %1156 = vmatpush2.msra.mxu0 %v1054
        %1157 = vmatprep.subr.mxu0 0.0
        %1158 = vmatpush2.msra.mxu0 %v1053
        %1159 = vmatprep.subr.mxu0 0.0
        %1160 = vmatpush2.msra.mxu0 %v1052
        %1161 = vmatprep.subr.mxu0 0.0
        %1162 = vmatpush2.msra.mxu0 %v1051
        %1163 = vmatprep.mubr.f32.mxu0 %v876
        %1164 = vmatmul.mubr.f32.gmra.mxu0 %v875
        %v1165 = vpop.f32.mrf.mxu0
        %v1166 = vadd.f32 0.0, %v1165
        %v1167 = vpop.f32.mrf.mxu0
        %1168 = vmatprep.mubr.f32.mxu0 %v880
        %1169 = vmatmul.mubr.f32.gmra.mxu0 %v879
        %v1170 = vpop.f32.mrf.mxu0
        %v1171 = vadd.f32 0.0, %v1170
        %v1172 = vpop.f32.mrf.mxu0
        %1173 = vmatprep.mubr.f32.mxu0 %v884
        %1174 = vmatmul.mubr.f32.gmra.mxu0 %v883
        %v1175 = vpop.f32.mrf.mxu0
        %v1176 = vadd.f32 0.0, %v1175
        %v1177 = vpop.f32.mrf.mxu0
        %1178 = vmatprep.mubr.f32.mxu0 %v888
        %1179 = vmatmul.mubr.f32.gmra.mxu0 %v887
        %v1180 = vpop.f32.mrf.mxu0
        %v1181 = vadd.f32 0.0, %v1180
        %v1182 = vpop.f32.mrf.mxu0
        %1183 = vmatprep.mubr.f32.mxu0 %v892
        %1184 = vmatmul.mubr.f32.gmra.mxu0 %v891
        %v1185 = vpop.f32.mrf.mxu0
        %v1186 = vadd.f32 0.0, %v1185
        %v1187 = vpop.f32.mrf.mxu0
        %1188 = vmatprep.mubr.f32.mxu0 %v896
        %1189 = vmatmul.mubr.f32.gmra.mxu0 %v895
        %v1190 = vpop.f32.mrf.mxu0
        %v1191 = vadd.f32 0.0, %v1190
        %v1192 = vpop.f32.mrf.mxu0
        %1193 = vmatprep.mubr.f32.mxu0 %v900
        %1194 = vmatmul.mubr.f32.gmra.mxu0 %v899
        %v1195 = vpop.f32.mrf.mxu0
        %v1196 = vadd.f32 0.0, %v1195
        %v1197 = vpop.f32.mrf.mxu0
        %1198 = vmatprep.mubr.f32.mxu0 %v904
        %1199 = vmatmul.mubr.f32.gmra.mxu0 %v903
        %v1200 = vpop.f32.mrf.mxu0
        %v1201 = vadd.f32 0.0, %v1200
        %v1202 = vpop.f32.mrf.mxu0
        %1203 = vmatprep.mubr.f32.mxu0 %v908
        %1204 = vmatmul.mubr.f32.gmra.mxu0 %v907
        %v1205 = vpop.f32.mrf.mxu0
        %v1206 = vadd.f32 0.0, %v1205
        %v1207 = vpop.f32.mrf.mxu0
        %1208 = vmatprep.mubr.f32.mxu0 %v912
        %1209 = vmatmul.mubr.f32.gmra.mxu0 %v911
        %v1210 = vpop.f32.mrf.mxu0
        %v1211 = vadd.f32 0.0, %v1210
        %v1212 = vpop.f32.mrf.mxu0
        %1213 = vmatprep.mubr.f32.mxu0 %v916
        %1214 = vmatmul.mubr.f32.gmra.mxu0 %v915
        %v1215 = vpop.f32.mrf.mxu0
        %v1216 = vadd.f32 0.0, %v1215
        %v1217 = vpop.f32.mrf.mxu0
        %1218 = vmatprep.mubr.f32.mxu0 %v920
        %1219 = vmatmul.mubr.f32.gmra.mxu0 %v919
        %v1220 = vpop.f32.mrf.mxu0
        %v1221 = vadd.f32 0.0, %v1220
        %v1222 = vpop.f32.mrf.mxu0
        %1223 = vmatprep.mubr.f32.mxu0 %v924
        %1224 = vmatmul.mubr.f32.gmra.mxu0 %v923
        %v1225 = vpop.f32.mrf.mxu0
        %v1226 = vadd.f32 0.0, %v1225
        %v1227 = vpop.f32.mrf.mxu0
        %1228 = vmatprep.mubr.f32.mxu0 %v928
        %1229 = vmatmul.mubr.f32.gmra.mxu0 %v927
        %v1230 = vpop.f32.mrf.mxu0
        %v1231 = vadd.f32 0.0, %v1230
        %v1232 = vpop.f32.mrf.mxu0
        %1233 = vmatprep.mubr.f32.mxu0 %v932
        %1234 = vmatmul.mubr.f32.gmra.mxu0 %v931
        %v1235 = vpop.f32.mrf.mxu0
        %v1236 = vadd.f32 0.0, %v1235
        %v1237 = vpop.f32.mrf.mxu0
        %1238 = vmatprep.mubr.f32.mxu0 %v936
        %1239 = vmatmul.mubr.f32.gmra.mxu0 %v935
        %v1240 = vpop.f32.mrf.mxu0
        %v1241 = vadd.f32 0.0, %v1240
        %v1242 = vpop.f32.mrf.mxu0
        %1243 = vmatprep.mubr.f32.mxu0 %v940
        %1244 = vmatmul.mubr.f32.gmra.mxu0 %v939
        %v1245 = vpop.f32.mrf.mxu0
        %v1246 = vadd.f32 0.0, %v1245
        %v1247 = vpop.f32.mrf.mxu0
        %1248 = vmatprep.mubr.f32.mxu0 %v944
        %1249 = vmatmul.mubr.f32.gmra.mxu0 %v943
        %v1250 = vpop.f32.mrf.mxu0
        %v1251 = vadd.f32 0.0, %v1250
        %v1252 = vpop.f32.mrf.mxu0
        %1253 = vmatprep.mubr.f32.mxu0 %v948
        %1254 = vmatmul.mubr.f32.gmra.mxu0 %v947
        %v1255 = vpop.f32.mrf.mxu0
        %v1256 = vadd.f32 0.0, %v1255
        %v1257 = vpop.f32.mrf.mxu0
        %1258 = vmatprep.mubr.f32.mxu0 %v952
        %1259 = vmatmul.mubr.f32.gmra.mxu0 %v951
        %v1260 = vpop.f32.mrf.mxu0
        %v1261 = vadd.f32 0.0, %v1260
        %v1262 = vpop.f32.mrf.mxu0
        %1263 = vmatprep.mubr.f32.mxu0 %v956
        %1264 = vmatmul.mubr.f32.gmra.mxu0 %v955
        %v1265 = vpop.f32.mrf.mxu0
        %v1266 = vadd.f32 0.0, %v1265
        %v1267 = vpop.f32.mrf.mxu0
        %1268 = vmatprep.mubr.f32.mxu0 %v960
        %1269 = vmatmul.mubr.f32.gmra.mxu0 %v959
        %v1270 = vpop.f32.mrf.mxu0
        %v1271 = vadd.f32 0.0, %v1270
        %v1272 = vpop.f32.mrf.mxu0
        %1273 = vmatprep.mubr.f32.mxu0 %v964
        %1274 = vmatmul.mubr.f32.gmra.mxu0 %v963
        %v1275 = vpop.f32.mrf.mxu0
        %v1276 = vadd.f32 0.0, %v1275
        %v1277 = vpop.f32.mrf.mxu0
        %1278 = vmatprep.mubr.f32.mxu0 %v968
        %1279 = vmatmul.mubr.f32.gmra.mxu0 %v967
        %v1280 = vpop.f32.mrf.mxu0
        %v1281 = vadd.f32 0.0, %v1280
        %v1282 = vpop.f32.mrf.mxu0
        %1283 = vmatprep.mubr.f32.mxu0 %v972
        %1284 = vmatmul.mubr.f32.gmra.mxu0 %v971
        %v1285 = vpop.f32.mrf.mxu0
        %v1286 = vadd.f32 0.0, %v1285
        %v1287 = vpop.f32.mrf.mxu0
        %1288 = vmatprep.mubr.f32.mxu0 %v976
        %1289 = vmatmul.mubr.f32.gmra.mxu0 %v975
        %v1290 = vpop.f32.mrf.mxu0
        %v1291 = vadd.f32 0.0, %v1290
        %v1292 = vpop.f32.mrf.mxu0
        %1293 = vmatprep.mubr.f32.mxu0 %v980
        %1294 = vmatmul.mubr.f32.gmra.mxu0 %v979
        %v1295 = vpop.f32.mrf.mxu0
        %v1296 = vadd.f32 0.0, %v1295
        %v1297 = vpop.f32.mrf.mxu0
        %1298 = vmatprep.mubr.f32.mxu0 %v984
        %1299 = vmatmul.mubr.f32.gmra.mxu0 %v983
        %v1300 = vpop.f32.mrf.mxu0
        %v1301 = vadd.f32 0.0, %v1300
        %v1302 = vpop.f32.mrf.mxu0
        %1303 = vmatprep.mubr.f32.mxu0 %v988
        %1304 = vmatmul.mubr.f32.gmra.mxu0 %v987
        %v1305 = vpop.f32.mrf.mxu0
        %v1306 = vadd.f32 0.0, %v1305
        %v1307 = vpop.f32.mrf.mxu0
        %1308 = vmatprep.mubr.f32.mxu0 %v992
        %1309 = vmatmul.mubr.f32.gmra.mxu0 %v991
        %v1310 = vpop.f32.mrf.mxu0
        %v1311 = vadd.f32 0.0, %v1310
        %v1312 = vpop.f32.mrf.mxu0
        %1313 = vmatprep.mubr.f32.mxu0 %v996
        %1314 = vmatmul.mubr.f32.gmra.mxu0 %v995
        %v1315 = vpop.f32.mrf.mxu0
        %v1316 = vadd.f32 0.0, %v1315
        %v1317 = vpop.f32.mrf.mxu0
        %1318 = vmatprep.mubr.f32.mxu0 %v1000
        %1319 = vmatmul.mubr.f32.gmra.mxu0 %v999
        %v1320 = vpop.f32.mrf.mxu0
        %v1321 = vadd.f32 0.0, %v1320
        %v1322 = vpop.f32.mrf.mxu0
        %1323 = vdwg.mxu0
        %1324 = vmatprep.subr.mxu0 0.0
        %1325 = vmatpush1.msra.mxu0 %v1082
        %1326 = vmatprep.subr.mxu0 0.0
        %1327 = vmatpush1.msra.mxu0 %v1081
        %1328 = vmatprep.subr.mxu0 0.0
        %1329 = vmatpush1.msra.mxu0 %v1080
        %1330 = vmatprep.subr.mxu0 0.0
        %1331 = vmatpush1.msra.mxu0 %v1079
        %1332 = vmatprep.subr.mxu0 0.0
        %1333 = vmatpush1.msra.mxu0 %v1078
        %1334 = vmatprep.subr.mxu0 0.0
        %1335 = vmatpush1.msra.mxu0 %v1077
        %1336 = vmatprep.subr.mxu0 0.0
        %1337 = vmatpush1.msra.mxu0 %v1076
        %1338 = vmatprep.subr.mxu0 0.0
        %1339 = vmatpush1.msra.mxu0 %v1075
        %1340 = vmatprep.subr.mxu0 0.0
        %1341 = vmatpush1.msra.mxu0 %v1074
        %1342 = vmatprep.subr.mxu0 0.0
        %1343 = vmatpush1.msra.mxu0 %v1073
        %1344 = vmatprep.subr.mxu0 0.0
        %1345 = vmatpush1.msra.mxu0 %v1072
        %1346 = vmatprep.subr.mxu0 0.0
        %1347 = vmatpush1.msra.mxu0 %v1071
        %1348 = vmatprep.subr.mxu0 0.0
        %1349 = vmatpush1.msra.mxu0 %v1070
        %1350 = vmatprep.subr.mxu0 0.0
        %1351 = vmatpush1.msra.mxu0 %v1069
        %1352 = vmatprep.subr.mxu0 0.0
        %1353 = vmatpush1.msra.mxu0 %v1068
        %1354 = vmatprep.subr.mxu0 0.0
        %1355 = vmatpush1.msra.mxu0 %v1067
        %1356 = vmatprep.subr.mxu0 0.0
        %1357 = vmatpush2.msra.mxu0 %v1098
        %1358 = vmatprep.subr.mxu0 0.0
        %1359 = vmatpush2.msra.mxu0 %v1097
        %1360 = vmatprep.subr.mxu0 0.0
        %1361 = vmatpush2.msra.mxu0 %v1096
        %1362 = vmatprep.subr.mxu0 0.0
        %1363 = vmatpush2.msra.mxu0 %v1095
        %1364 = vmatprep.subr.mxu0 0.0
        %1365 = vmatpush2.msra.mxu0 %v1094
        %1366 = vmatprep.subr.mxu0 0.0
        %1367 = vmatpush2.msra.mxu0 %v1093
        %1368 = vmatprep.subr.mxu0 0.0
        %1369 = vmatpush2.msra.mxu0 %v1092
        %1370 = vmatprep.subr.mxu0 0.0
        %1371 = vmatpush2.msra.mxu0 %v1091
        %1372 = vmatprep.subr.mxu0 0.0
        %1373 = vmatpush2.msra.mxu0 %v1090
        %1374 = vmatprep.subr.mxu0 0.0
        %1375 = vmatpush2.msra.mxu0 %v1089
        %1376 = vmatprep.subr.mxu0 0.0
        %1377 = vmatpush2.msra.mxu0 %v1088
        %1378 = vmatprep.subr.mxu0 0.0
        %1379 = vmatpush2.msra.mxu0 %v1087
        %1380 = vmatprep.subr.mxu0 0.0
        %1381 = vmatpush2.msra.mxu0 %v1086
        %1382 = vmatprep.subr.mxu0 0.0
        %1383 = vmatpush2.msra.mxu0 %v1085
        %1384 = vmatprep.subr.mxu0 0.0
        %1385 = vmatpush2.msra.mxu0 %v1084
        %1386 = vmatprep.subr.mxu0 0.0
        %1387 = vmatpush2.msra.mxu0 %v1083
        %1388 = vmatprep.mubr.f32.mxu0 %v878
        %1389 = vmatmul.mubr.f32.gmra.mxu0 %v877
        %v1390 = vpop.f32.mrf.mxu0
        %v1391 = vadd.f32 %v1166, %v1390
        %v1392 = vpop.f32.mrf.mxu0
        %1393 = vmatprep.mubr.f32.mxu0 %v882
        %1394 = vmatmul.mubr.f32.gmra.mxu0 %v881
        %v1395 = vpop.f32.mrf.mxu0
        %v1396 = vadd.f32 %v1171, %v1395
        %v1397 = vpop.f32.mrf.mxu0
        %1398 = vmatprep.mubr.f32.mxu0 %v886
        %1399 = vmatmul.mubr.f32.gmra.mxu0 %v885
        %v1400 = vpop.f32.mrf.mxu0
        %v1401 = vadd.f32 %v1176, %v1400
        %v1402 = vpop.f32.mrf.mxu0
        %1403 = vmatprep.mubr.f32.mxu0 %v890
        %1404 = vmatmul.mubr.f32.gmra.mxu0 %v889
        %v1405 = vpop.f32.mrf.mxu0
        %v1406 = vadd.f32 %v1181, %v1405
        %v1407 = vpop.f32.mrf.mxu0
        %1408 = vmatprep.mubr.f32.mxu0 %v894
        %1409 = vmatmul.mubr.f32.gmra.mxu0 %v893
        %v1410 = vpop.f32.mrf.mxu0
        %v1411 = vadd.f32 %v1186, %v1410
        %v1412 = vpop.f32.mrf.mxu0
        %1413 = vmatprep.mubr.f32.mxu0 %v898
        %1414 = vmatmul.mubr.f32.gmra.mxu0 %v897
        %v1415 = vpop.f32.mrf.mxu0
        %v1416 = vadd.f32 %v1191, %v1415
        %v1417 = vpop.f32.mrf.mxu0
        %1418 = vmatprep.mubr.f32.mxu0 %v902
        %1419 = vmatmul.mubr.f32.gmra.mxu0 %v901
        %v1420 = vpop.f32.mrf.mxu0
        %v1421 = vadd.f32 %v1196, %v1420
        %v1422 = vpop.f32.mrf.mxu0
        %1423 = vmatprep.mubr.f32.mxu0 %v906
        %1424 = vmatmul.mubr.f32.gmra.mxu0 %v905
        %v1425 = vpop.f32.mrf.mxu0
        %v1426 = vadd.f32 %v1201, %v1425
        %v1427 = vpop.f32.mrf.mxu0
        %1428 = vmatprep.mubr.f32.mxu0 %v910
        %1429 = vmatmul.mubr.f32.gmra.mxu0 %v909
        %v1430 = vpop.f32.mrf.mxu0
        %v1431 = vadd.f32 %v1206, %v1430
        %v1432 = vpop.f32.mrf.mxu0
        %1433 = vmatprep.mubr.f32.mxu0 %v914
        %1434 = vmatmul.mubr.f32.gmra.mxu0 %v913
        %v1435 = vpop.f32.mrf.mxu0
        %v1436 = vadd.f32 %v1211, %v1435
        %v1437 = vpop.f32.mrf.mxu0
        %1438 = vmatprep.mubr.f32.mxu0 %v918
        %1439 = vmatmul.mubr.f32.gmra.mxu0 %v917
        %v1440 = vpop.f32.mrf.mxu0
        %v1441 = vadd.f32 %v1216, %v1440
        %v1442 = vpop.f32.mrf.mxu0
        %1443 = vmatprep.mubr.f32.mxu0 %v922
        %1444 = vmatmul.mubr.f32.gmra.mxu0 %v921
        %v1445 = vpop.f32.mrf.mxu0
        %v1446 = vadd.f32 %v1221, %v1445
        %v1447 = vpop.f32.mrf.mxu0
        %1448 = vmatprep.mubr.f32.mxu0 %v926
        %1449 = vmatmul.mubr.f32.gmra.mxu0 %v925
        %v1450 = vpop.f32.mrf.mxu0
        %v1451 = vadd.f32 %v1226, %v1450
        %v1452 = vpop.f32.mrf.mxu0
        %1453 = vmatprep.mubr.f32.mxu0 %v930
        %1454 = vmatmul.mubr.f32.gmra.mxu0 %v929
        %v1455 = vpop.f32.mrf.mxu0
        %v1456 = vadd.f32 %v1231, %v1455
        %v1457 = vpop.f32.mrf.mxu0
        %1458 = vmatprep.mubr.f32.mxu0 %v934
        %1459 = vmatmul.mubr.f32.gmra.mxu0 %v933
        %v1460 = vpop.f32.mrf.mxu0
        %v1461 = vadd.f32 %v1236, %v1460
        %v1462 = vpop.f32.mrf.mxu0
        %1463 = vmatprep.mubr.f32.mxu0 %v938
        %1464 = vmatmul.mubr.f32.gmra.mxu0 %v937
        %v1465 = vpop.f32.mrf.mxu0
        %v1466 = vadd.f32 %v1241, %v1465
        %v1467 = vpop.f32.mrf.mxu0
        %1468 = vmatprep.mubr.f32.mxu0 %v942
        %1469 = vmatmul.mubr.f32.gmra.mxu0 %v941
        %v1470 = vpop.f32.mrf.mxu0
        %v1471 = vadd.f32 %v1246, %v1470
        %v1472 = vpop.f32.mrf.mxu0
        %1473 = vmatprep.mubr.f32.mxu0 %v946
        %1474 = vmatmul.mubr.f32.gmra.mxu0 %v945
        %v1475 = vpop.f32.mrf.mxu0
        %v1476 = vadd.f32 %v1251, %v1475
        %v1477 = vpop.f32.mrf.mxu0
        %1478 = vmatprep.mubr.f32.mxu0 %v950
        %1479 = vmatmul.mubr.f32.gmra.mxu0 %v949
        %v1480 = vpop.f32.mrf.mxu0
        %v1481 = vadd.f32 %v1256, %v1480
        %v1482 = vpop.f32.mrf.mxu0
        %1483 = vmatprep.mubr.f32.mxu0 %v954
        %1484 = vmatmul.mubr.f32.gmra.mxu0 %v953
        %v1485 = vpop.f32.mrf.mxu0
        %v1486 = vadd.f32 %v1261, %v1485
        %v1487 = vpop.f32.mrf.mxu0
        %1488 = vmatprep.mubr.f32.mxu0 %v958
        %1489 = vmatmul.mubr.f32.gmra.mxu0 %v957
        %v1490 = vpop.f32.mrf.mxu0
        %v1491 = vadd.f32 %v1266, %v1490
        %v1492 = vpop.f32.mrf.mxu0
        %1493 = vmatprep.mubr.f32.mxu0 %v962
        %1494 = vmatmul.mubr.f32.gmra.mxu0 %v961
        %v1495 = vpop.f32.mrf.mxu0
        %v1496 = vadd.f32 %v1271, %v1495
        %v1497 = vpop.f32.mrf.mxu0
        %1498 = vmatprep.mubr.f32.mxu0 %v966
        %1499 = vmatmul.mubr.f32.gmra.mxu0 %v965
        %v1500 = vpop.f32.mrf.mxu0
        %v1501 = vadd.f32 %v1276, %v1500
        %v1502 = vpop.f32.mrf.mxu0
        %1503 = vmatprep.mubr.f32.mxu0 %v970
        %1504 = vmatmul.mubr.f32.gmra.mxu0 %v969
        %v1505 = vpop.f32.mrf.mxu0
        %v1506 = vadd.f32 %v1281, %v1505
        %v1507 = vpop.f32.mrf.mxu0
        %1508 = vmatprep.mubr.f32.mxu0 %v974
        %1509 = vmatmul.mubr.f32.gmra.mxu0 %v973
        %v1510 = vpop.f32.mrf.mxu0
        %v1511 = vadd.f32 %v1286, %v1510
        %v1512 = vpop.f32.mrf.mxu0
        %1513 = vmatprep.mubr.f32.mxu0 %v978
        %1514 = vmatmul.mubr.f32.gmra.mxu0 %v977
        %v1515 = vpop.f32.mrf.mxu0
        %v1516 = vadd.f32 %v1291, %v1515
        %v1517 = vpop.f32.mrf.mxu0
        %1518 = vmatprep.mubr.f32.mxu0 %v982
        %1519 = vmatmul.mubr.f32.gmra.mxu0 %v981
        %v1520 = vpop.f32.mrf.mxu0
        %v1521 = vadd.f32 %v1296, %v1520
        %v1522 = vpop.f32.mrf.mxu0
        %1523 = vmatprep.mubr.f32.mxu0 %v986
        %1524 = vmatmul.mubr.f32.gmra.mxu0 %v985
        %v1525 = vpop.f32.mrf.mxu0
        %v1526 = vadd.f32 %v1301, %v1525
        %v1527 = vpop.f32.mrf.mxu0
        %1528 = vmatprep.mubr.f32.mxu0 %v990
        %1529 = vmatmul.mubr.f32.gmra.mxu0 %v989
        %v1530 = vpop.f32.mrf.mxu0
        %v1531 = vadd.f32 %v1306, %v1530
        %v1532 = vpop.f32.mrf.mxu0
        %1533 = vmatprep.mubr.f32.mxu0 %v994
        %1534 = vmatmul.mubr.f32.gmra.mxu0 %v993
        %v1535 = vpop.f32.mrf.mxu0
        %v1536 = vadd.f32 %v1311, %v1535
        %v1537 = vpop.f32.mrf.mxu0
        %1538 = vmatprep.mubr.f32.mxu0 %v998
        %1539 = vmatmul.mubr.f32.gmra.mxu0 %v997
        %v1540 = vpop.f32.mrf.mxu0
        %v1541 = vadd.f32 %v1316, %v1540
        %v1542 = vpop.f32.mrf.mxu0
        %1543 = vmatprep.mubr.f32.mxu0 %v1002
        %1544 = vmatmul.mubr.f32.gmra.mxu0 %v1001
        %v1545 = vpop.f32.mrf.mxu0
        %v1546 = vadd.f32 %v1321, %v1545
        %v1547 = vpop.f32.mrf.mxu0
        %1548 = vdwg.mxu0
        %v1549 = vadd.f32 %v1003, %v1391
        %v1550 = vadd.f32 %v1004, %v1396
        %v1551 = vadd.f32 %v1005, %v1401
        %v1552 = vadd.f32 %v1006, %v1406
        %v1553 = vadd.f32 %v1007, %v1411
        %v1554 = vadd.f32 %v1008, %v1416
        %v1555 = vadd.f32 %v1009, %v1421
        %v1556 = vadd.f32 %v1010, %v1426
        %v1557 = vadd.f32 %v1011, %v1431
        %v1558 = vadd.f32 %v1012, %v1436
        %v1559 = vadd.f32 %v1013, %v1441
        %v1560 = vadd.f32 %v1014, %v1446
        %v1561 = vadd.f32 %v1015, %v1451
        %v1562 = vadd.f32 %v1016, %v1456
        %v1563 = vadd.f32 %v1017, %v1461
        %v1564 = vadd.f32 %v1018, %v1466
        %v1565 = vadd.f32 %v1019, %v1471
        %v1566 = vadd.f32 %v1020, %v1476
        %v1567 = vadd.f32 %v1021, %v1481
        %v1568 = vadd.f32 %v1022, %v1486
        %v1569 = vadd.f32 %v1023, %v1491
        %v1570 = vadd.f32 %v1024, %v1496
        %v1571 = vadd.f32 %v1025, %v1501
        %v1572 = vadd.f32 %v1026, %v1506
        %v1573 = vadd.f32 %v1027, %v1511
        %v1574 = vadd.f32 %v1028, %v1516
        %v1575 = vadd.f32 %v1029, %v1521
        %v1576 = vadd.f32 %v1030, %v1526
        %v1577 = vadd.f32 %v1031, %v1531
        %v1578 = vadd.f32 %v1032, %v1536
        %v1579 = vadd.f32 %v1033, %v1541
        %v1580 = vadd.f32 %v1034, %v1546
        %1581 = vst [vmem:[#allocation2] sm:$0xff] %v1549
        %1582 = vst [vmem:[#allocation2 + $0x8] sm:$0xff] %v1550
        %1583 = vst [vmem:[#allocation2 + $0x10] sm:$0xff] %v1551
        %1584 = vst [vmem:[#allocation2 + $0x18] sm:$0xff] %v1552
        %1585 = vst [vmem:[#allocation2 + $0x20] sm:$0xff] %v1553
        %1586 = vst [vmem:[#allocation2 + $0x28] sm:$0xff] %v1554
        %1587 = vst [vmem:[#allocation2 + $0x30] sm:$0xff] %v1555
        %1588 = vst [vmem:[#allocation2 + $0x38] sm:$0xff] %v1556
        %1589 = vst [vmem:[#allocation2 + $0x40] sm:$0xff] %v1557
        %1590 = vst [vmem:[#allocation2 + $0x48] sm:$0xff] %v1558
        %1591 = vst [vmem:[#allocation2 + $0x50] sm:$0xff] %v1559
        %1592 = vst [vmem:[#allocation2 + $0x58] sm:$0xff] %v1560
        %1593 = vst [vmem:[#allocation2 + $0x60] sm:$0xff] %v1561
        %1594 = vst [vmem:[#allocation2 + $0x68] sm:$0xff] %v1562
        %1595 = vst [vmem:[#allocation2 + $0x70] sm:$0xff] %v1563
        %1596 = vst [vmem:[#allocation2 + $0x78] sm:$0xff] %v1564
        %1597 = vst [vmem:[#allocation2 + $0x80] sm:$0xff] %v1565
        %1598 = vst [vmem:[#allocation2 + $0x88] sm:$0xff] %v1566
        %1599 = vst [vmem:[#allocation2 + $0x90] sm:$0xff] %v1567
        %1600 = vst [vmem:[#allocation2 + $0x98] sm:$0xff] %v1568
        %1601 = vst [vmem:[#allocation2 + $0xa0] sm:$0xff] %v1569
        %1602 = vst [vmem:[#allocation2 + $0xa8] sm:$0xff] %v1570
        %1603 = vst [vmem:[#allocation2 + $0xb0] sm:$0xff] %v1571
        %1604 = vst [vmem:[#allocation2 + $0xb8] sm:$0xff] %v1572
        %1605 = vst [vmem:[#allocation2 + $0xc0] sm:$0xff] %v1573
        %1606 = vst [vmem:[#allocation2 + $0xc8] sm:$0xff] %v1574
        %1607 = vst [vmem:[#allocation2 + $0xd0] sm:$0xff] %v1575
        %1608 = vst [vmem:[#allocation2 + $0xd8] sm:$0xff] %v1576
        %1609 = vst [vmem:[#allocation2 + $0xe0] sm:$0xff] %v1577
        %1610 = vst [vmem:[#allocation2 + $0xe8] sm:$0xff] %v1578
        %1611 = vst [vmem:[#allocation2 + $0xf0] sm:$0xff] %v1579
        %1612 = vst [vmem:[#allocation2 + $0xf8] sm:$0xff] %v1580
        %p1613 = scmp.eq.s32.totalorder %s37, 1
        // Predicated region
        $region85: #{tpu_custom_call.1} parent=59 // pred_check
          %p1614 = pneg %p1613
        $region86: #{tpu_custom_call.1} parent=59 // pred_check_branch
          %1616 = sbr.rel (%p1614) target = $region88
        $region87: #{tpu_custom_call.1} parent=59 // pred_region
          %v1617 = vld [vmem:[%s422] sm:$0xff]
          %v1618 = vld [vmem:[%s422 + $0x8] sm:$0xff]
          %v1619 = vld [vmem:[%s422 + $0x10] sm:$0xff]
          %v1620 = vld [vmem:[%s422 + $0x18] sm:$0xff]
          %v1621 = vld [vmem:[%s422 + $0x20] sm:$0xff]
          %v1622 = vld [vmem:[%s422 + $0x28] sm:$0xff]
          %v1623 = vld [vmem:[%s422 + $0x30] sm:$0xff]
          %v1624 = vld [vmem:[%s422 + $0x38] sm:$0xff]
          %v1625 = vld [vmem:[%s422 + $0x40] sm:$0xff]
          %v1626 = vld [vmem:[%s422 + $0x48] sm:$0xff]
          %v1627 = vld [vmem:[%s422 + $0x50] sm:$0xff]
          %v1628 = vld [vmem:[%s422 + $0x58] sm:$0xff]
          %v1629 = vld [vmem:[%s422 + $0x60] sm:$0xff]
          %v1630 = vld [vmem:[%s422 + $0x68] sm:$0xff]
          %v1631 = vld [vmem:[%s422 + $0x70] sm:$0xff]
          %v1632 = vld [vmem:[%s422 + $0x78] sm:$0xff]
          %v1633 = vld [vmem:[%s422 + $0x80] sm:$0xff]
          %v1634 = vld [vmem:[%s422 + $0x88] sm:$0xff]
          %v1635 = vld [vmem:[%s422 + $0x90] sm:$0xff]
          %v1636 = vld [vmem:[%s422 + $0x98] sm:$0xff]
          %v1637 = vld [vmem:[%s422 + $0xa0] sm:$0xff]
          %v1638 = vld [vmem:[%s422 + $0xa8] sm:$0xff]
          %v1639 = vld [vmem:[%s422 + $0xb0] sm:$0xff]
          %v1640 = vld [vmem:[%s422 + $0xb8] sm:$0xff]
          %v1641 = vld [vmem:[%s422 + $0xc0] sm:$0xff]
          %v1642 = vld [vmem:[%s422 + $0xc8] sm:$0xff]
          %v1643 = vld [vmem:[%s422 + $0xd0] sm:$0xff]
          %v1644 = vld [vmem:[%s422 + $0xd8] sm:$0xff]
          %v1645 = vld [vmem:[%s422 + $0xe0] sm:$0xff]
          %v1646 = vld [vmem:[%s422 + $0xe8] sm:$0xff]
          %v1647 = vld [vmem:[%s422 + $0xf0] sm:$0xff]
          %v1648 = vld [vmem:[%s422 + $0xf8] sm:$0xff]
          %s1649 = sld [smem:[#allocation3]]
          %s1650 = sadd.f32 %s1649, 1.0
          %v1651 = vstv %s1650
          %v1652 = vmul.f32 %v1651, %v1617
          %v1653 = vmul.f32 %v1651, %v1618
          %v1654 = vmul.f32 %v1651, %v1619
          %v1655 = vmul.f32 %v1651, %v1620
          %v1656 = vmul.f32 %v1651, %v1621
          %v1657 = vmul.f32 %v1651, %v1622
          %v1658 = vmul.f32 %v1651, %v1623
          %v1659 = vmul.f32 %v1651, %v1624
          %v1660 = vmul.f32 %v1651, %v1625
          %v1661 = vmul.f32 %v1651, %v1626
          %v1662 = vmul.f32 %v1651, %v1627
          %v1663 = vmul.f32 %v1651, %v1628
          %v1664 = vmul.f32 %v1651, %v1629
          %v1665 = vmul.f32 %v1651, %v1630
          %v1666 = vmul.f32 %v1651, %v1631
          %v1667 = vmul.f32 %v1651, %v1632
          %v1668 = vmul.f32 %v1651, %v1633
          %v1669 = vmul.f32 %v1651, %v1634
          %v1670 = vmul.f32 %v1651, %v1635
          %v1671 = vmul.f32 %v1651, %v1636
          %v1672 = vmul.f32 %v1651, %v1637
          %v1673 = vmul.f32 %v1651, %v1638
          %v1674 = vmul.f32 %v1651, %v1639
          %v1675 = vmul.f32 %v1651, %v1640
          %v1676 = vmul.f32 %v1651, %v1641
          %v1677 = vmul.f32 %v1651, %v1642
          %v1678 = vmul.f32 %v1651, %v1643
          %v1679 = vmul.f32 %v1651, %v1644
          %v1680 = vmul.f32 %v1651, %v1645
          %v1681 = vmul.f32 %v1651, %v1646
          %v1682 = vmul.f32 %v1651, %v1647
          %v1683 = vmul.f32 %v1651, %v1648
          %v1684 = vld [vmem:[#allocation2] sm:$0xff]
          %v1685 = vld [vmem:[#allocation2 + $0x8] sm:$0xff]
          %v1686 = vld [vmem:[#allocation2 + $0x10] sm:$0xff]
          %v1687 = vld [vmem:[#allocation2 + $0x18] sm:$0xff]
          %v1688 = vld [vmem:[#allocation2 + $0x20] sm:$0xff]
          %v1689 = vld [vmem:[#allocation2 + $0x28] sm:$0xff]
          %v1690 = vld [vmem:[#allocation2 + $0x30] sm:$0xff]
          %v1691 = vld [vmem:[#allocation2 + $0x38] sm:$0xff]
          %v1692 = vld [vmem:[#allocation2 + $0x40] sm:$0xff]
          %v1693 = vld [vmem:[#allocation2 + $0x48] sm:$0xff]
          %v1694 = vld [vmem:[#allocation2 + $0x50] sm:$0xff]
          %v1695 = vld [vmem:[#allocation2 + $0x58] sm:$0xff]
          %v1696 = vld [vmem:[#allocation2 + $0x60] sm:$0xff]
          %v1697 = vld [vmem:[#allocation2 + $0x68] sm:$0xff]
          %v1698 = vld [vmem:[#allocation2 + $0x70] sm:$0xff]
          %v1699 = vld [vmem:[#allocation2 + $0x78] sm:$0xff]
          %v1700 = vld [vmem:[#allocation2 + $0x80] sm:$0xff]
          %v1701 = vld [vmem:[#allocation2 + $0x88] sm:$0xff]
          %v1702 = vld [vmem:[#allocation2 + $0x90] sm:$0xff]
          %v1703 = vld [vmem:[#allocation2 + $0x98] sm:$0xff]
          %v1704 = vld [vmem:[#allocation2 + $0xa0] sm:$0xff]
          %v1705 = vld [vmem:[#allocation2 + $0xa8] sm:$0xff]
          %v1706 = vld [vmem:[#allocation2 + $0xb0] sm:$0xff]
          %v1707 = vld [vmem:[#allocation2 + $0xb8] sm:$0xff]
          %v1708 = vld [vmem:[#allocation2 + $0xc0] sm:$0xff]
          %v1709 = vld [vmem:[#allocation2 + $0xc8] sm:$0xff]
          %v1710 = vld [vmem:[#allocation2 + $0xd0] sm:$0xff]
          %v1711 = vld [vmem:[#allocation2 + $0xd8] sm:$0xff]
          %v1712 = vld [vmem:[#allocation2 + $0xe0] sm:$0xff]
          %v1713 = vld [vmem:[#allocation2 + $0xe8] sm:$0xff]
          %v1714 = vld [vmem:[#allocation2 + $0xf0] sm:$0xff]
          %v1715 = vld [vmem:[#allocation2 + $0xf8] sm:$0xff]
          %v1716 = vadd.f32 %v1652, %v1684
          %v1717 = vadd.f32 %v1653, %v1685
          %v1718 = vadd.f32 %v1654, %v1686
          %v1719 = vadd.f32 %v1655, %v1687
          %v1720 = vadd.f32 %v1656, %v1688
          %v1721 = vadd.f32 %v1657, %v1689
          %v1722 = vadd.f32 %v1658, %v1690
          %v1723 = vadd.f32 %v1659, %v1691
          %v1724 = vadd.f32 %v1660, %v1692
          %v1725 = vadd.f32 %v1661, %v1693
          %v1726 = vadd.f32 %v1662, %v1694
          %v1727 = vadd.f32 %v1663, %v1695
          %v1728 = vadd.f32 %v1664, %v1696
          %v1729 = vadd.f32 %v1665, %v1697
          %v1730 = vadd.f32 %v1666, %v1698
          %v1731 = vadd.f32 %v1667, %v1699
          %v1732 = vadd.f32 %v1668, %v1700
          %v1733 = vadd.f32 %v1669, %v1701
          %v1734 = vadd.f32 %v1670, %v1702
          %v1735 = vadd.f32 %v1671, %v1703
          %v1736 = vadd.f32 %v1672, %v1704
          %v1737 = vadd.f32 %v1673, %v1705
          %v1738 = vadd.f32 %v1674, %v1706
          %v1739 = vadd.f32 %v1675, %v1707
          %v1740 = vadd.f32 %v1676, %v1708
          %v1741 = vadd.f32 %v1677, %v1709
          %v1742 = vadd.f32 %v1678, %v1710
          %v1743 = vadd.f32 %v1679, %v1711
          %v1744 = vadd.f32 %v1680, %v1712
          %v1745 = vadd.f32 %v1681, %v1713
          %v1746 = vadd.f32 %v1682, %v1714
          %v1747 = vadd.f32 %v1683, %v1715
          %v1748 = vld [vmem:[#allocation10] sm:$0xff]
          %v1749 = vld [vmem:[#allocation10 + $0x8] sm:$0xff]
          %v1750 = vld [vmem:[#allocation10 + $0x10] sm:$0xff]
          %v1751 = vld [vmem:[#allocation10 + $0x18] sm:$0xff]
          %v1752 = vld [vmem:[#allocation10 + $0x20] sm:$0xff]
          %v1753 = vld [vmem:[#allocation10 + $0x28] sm:$0xff]
          %v1754 = vld [vmem:[#allocation10 + $0x30] sm:$0xff]
          %v1755 = vld [vmem:[#allocation10 + $0x38] sm:$0xff]
          %v1756 = vld [vmem:[#allocation10 + $0x40] sm:$0xff]
          %v1757 = vld [vmem:[#allocation10 + $0x48] sm:$0xff]
          %v1758 = vld [vmem:[#allocation10 + $0x50] sm:$0xff]
          %v1759 = vld [vmem:[#allocation10 + $0x58] sm:$0xff]
          %v1760 = vld [vmem:[#allocation10 + $0x60] sm:$0xff]
          %v1761 = vld [vmem:[#allocation10 + $0x68] sm:$0xff]
          %v1762 = vld [vmem:[#allocation10 + $0x70] sm:$0xff]
          %v1763 = vld [vmem:[#allocation10 + $0x78] sm:$0xff]
          %v1764 = vld [vmem:[%s4] sm:$0x1]
          %v1766 = vlaneseq
          %v1767 = vshrl.u32 %v1766, 7
          %v1768 = vsub.s32 0, %v1767
          %v1769 = vrot.slane %v1764, %v1768
          %1771 = vmatprep.subr.mxu0 0.0
          %1772 = vmatpush1.msra.mxu0 %v1763
          %1773 = vmatprep.subr.mxu0 0.0
          %1774 = vmatpush1.msra.mxu0 %v1762
          %1775 = vmatprep.subr.mxu0 0.0
          %1776 = vmatpush1.msra.mxu0 %v1761
          %1777 = vmatprep.subr.mxu0 0.0
          %1778 = vmatpush1.msra.mxu0 %v1760
          %1779 = vmatprep.subr.mxu0 0.0
          %1780 = vmatpush1.msra.mxu0 %v1759
          %1781 = vmatprep.subr.mxu0 0.0
          %1782 = vmatpush1.msra.mxu0 %v1758
          %1783 = vmatprep.subr.mxu0 0.0
          %1784 = vmatpush1.msra.mxu0 %v1757
          %1785 = vmatprep.subr.mxu0 0.0
          %1786 = vmatpush1.msra.mxu0 %v1756
          %1787 = vmatprep.subr.mxu0 0.0
          %1788 = vmatpush1.msra.mxu0 %v1755
          %1789 = vmatprep.subr.mxu0 0.0
          %1790 = vmatpush1.msra.mxu0 %v1754
          %1791 = vmatprep.subr.mxu0 0.0
          %1792 = vmatpush1.msra.mxu0 %v1753
          %1793 = vmatprep.subr.mxu0 0.0
          %1794 = vmatpush1.msra.mxu0 %v1752
          %1795 = vmatprep.subr.mxu0 0.0
          %1796 = vmatpush1.msra.mxu0 %v1751
          %1797 = vmatprep.subr.mxu0 0.0
          %1798 = vmatpush1.msra.mxu0 %v1750
          %1799 = vmatprep.subr.mxu0 0.0
          %1800 = vmatpush1.msra.mxu0 %v1749
          %1801 = vmatprep.subr.mxu0 0.0
          %1802 = vmatpush1.msra.mxu0 %v1748
          %1803 = vmatprep.subr.mxu0 0.0
          %1804 = vmatpush2.msra.mxu0 0.0
          %1805 = vmatprep.subr.mxu0 0.0
          %1806 = vmatpush2.msra.mxu0 0.0
          %1807 = vmatprep.subr.mxu0 0.0
          %1808 = vmatpush2.msra.mxu0 0.0
          %1809 = vmatprep.subr.mxu0 0.0
          %1810 = vmatpush2.msra.mxu0 0.0
          %1811 = vmatprep.subr.mxu0 0.0
          %1812 = vmatpush2.msra.mxu0 0.0
          %1813 = vmatprep.subr.mxu0 0.0
          %1814 = vmatpush2.msra.mxu0 0.0
          %1815 = vmatprep.subr.mxu0 0.0
          %1816 = vmatpush2.msra.mxu0 0.0
          %1817 = vmatprep.subr.mxu0 0.0
          %1818 = vmatpush2.msra.mxu0 0.0
          %1819 = vmatprep.subr.mxu0 0.0
          %1820 = vmatpush2.msra.mxu0 0.0
          %1821 = vmatprep.subr.mxu0 0.0
          %1822 = vmatpush2.msra.mxu0 0.0
          %1823 = vmatprep.subr.mxu0 0.0
          %1824 = vmatpush2.msra.mxu0 0.0
          %1825 = vmatprep.subr.mxu0 0.0
          %1826 = vmatpush2.msra.mxu0 0.0
          %1827 = vmatprep.subr.mxu0 0.0
          %1828 = vmatpush2.msra.mxu0 0.0
          %1829 = vmatprep.subr.mxu0 0.0
          %1830 = vmatpush2.msra.mxu0 0.0
          %1831 = vmatprep.subr.mxu0 0.0
          %1832 = vmatpush2.msra.mxu0 0.0
          %1833 = vmatprep.subr.mxu0 0.0
          %1834 = vmatpush2.msra.mxu0 0.0
          %1835 = vmatprep.mubr.f32.mxu0 0.0
          %1836 = vmatmul.mubr.f32.gmra.mxu0 %v1716
          %v1837 = vpop.f32.mrf.mxu0
          %v1838 = vadd.f32 %v1769, %v1837
          %v1839 = vpop.f32.mrf.mxu0
          %1840 = vmatprep.mubr.f32.mxu0 0.0
          %1841 = vmatmul.mubr.f32.gmra.mxu0 %v1717
          %v1842 = vpop.f32.mrf.mxu0
          %v1843 = vadd.f32 %v1769, %v1842
          %v1844 = vpop.f32.mrf.mxu0
          %1845 = vmatprep.mubr.f32.mxu0 0.0
          %1846 = vmatmul.mubr.f32.gmra.mxu0 %v1718
          %v1847 = vpop.f32.mrf.mxu0
          %v1848 = vadd.f32 %v1769, %v1847
          %v1849 = vpop.f32.mrf.mxu0
          %1850 = vmatprep.mubr.f32.mxu0 0.0
          %1851 = vmatmul.mubr.f32.gmra.mxu0 %v1719
          %v1852 = vpop.f32.mrf.mxu0
          %v1853 = vadd.f32 %v1769, %v1852
          %v1854 = vpop.f32.mrf.mxu0
          %1855 = vmatprep.mubr.f32.mxu0 0.0
          %1856 = vmatmul.mubr.f32.gmra.mxu0 %v1720
          %v1857 = vpop.f32.mrf.mxu0
          %v1858 = vadd.f32 %v1769, %v1857
          %v1859 = vpop.f32.mrf.mxu0
          %1860 = vmatprep.mubr.f32.mxu0 0.0
          %1861 = vmatmul.mubr.f32.gmra.mxu0 %v1721
          %v1862 = vpop.f32.mrf.mxu0
          %v1863 = vadd.f32 %v1769, %v1862
          %v1864 = vpop.f32.mrf.mxu0
          %1865 = vmatprep.mubr.f32.mxu0 0.0
          %1866 = vmatmul.mubr.f32.gmra.mxu0 %v1722
          %v1867 = vpop.f32.mrf.mxu0
          %v1868 = vadd.f32 %v1769, %v1867
          %v1869 = vpop.f32.mrf.mxu0
          %1870 = vmatprep.mubr.f32.mxu0 0.0
          %1871 = vmatmul.mubr.f32.gmra.mxu0 %v1723
          %v1872 = vpop.f32.mrf.mxu0
          %v1873 = vadd.f32 %v1769, %v1872
          %v1874 = vpop.f32.mrf.mxu0
          %1875 = vmatprep.mubr.f32.mxu0 0.0
          %1876 = vmatmul.mubr.f32.gmra.mxu0 %v1724
          %v1877 = vpop.f32.mrf.mxu0
          %v1878 = vadd.f32 %v1769, %v1877
          %v1879 = vpop.f32.mrf.mxu0
          %1880 = vmatprep.mubr.f32.mxu0 0.0
          %1881 = vmatmul.mubr.f32.gmra.mxu0 %v1725
          %v1882 = vpop.f32.mrf.mxu0
          %v1883 = vadd.f32 %v1769, %v1882
          %v1884 = vpop.f32.mrf.mxu0
          %1885 = vmatprep.mubr.f32.mxu0 0.0
          %1886 = vmatmul.mubr.f32.gmra.mxu0 %v1726
          %v1887 = vpop.f32.mrf.mxu0
          %v1888 = vadd.f32 %v1769, %v1887
          %v1889 = vpop.f32.mrf.mxu0
          %1890 = vmatprep.mubr.f32.mxu0 0.0
          %1891 = vmatmul.mubr.f32.gmra.mxu0 %v1727
          %v1892 = vpop.f32.mrf.mxu0
          %v1893 = vadd.f32 %v1769, %v1892
          %v1894 = vpop.f32.mrf.mxu0
          %1895 = vmatprep.mubr.f32.mxu0 0.0
          %1896 = vmatmul.mubr.f32.gmra.mxu0 %v1728
          %v1897 = vpop.f32.mrf.mxu0
          %v1898 = vadd.f32 %v1769, %v1897
          %v1899 = vpop.f32.mrf.mxu0
          %1900 = vmatprep.mubr.f32.mxu0 0.0
          %1901 = vmatmul.mubr.f32.gmra.mxu0 %v1729
          %v1902 = vpop.f32.mrf.mxu0
          %v1903 = vadd.f32 %v1769, %v1902
          %v1904 = vpop.f32.mrf.mxu0
          %1905 = vmatprep.mubr.f32.mxu0 0.0
          %1906 = vmatmul.mubr.f32.gmra.mxu0 %v1730
          %v1907 = vpop.f32.mrf.mxu0
          %v1908 = vadd.f32 %v1769, %v1907
          %v1909 = vpop.f32.mrf.mxu0
          %1910 = vmatprep.mubr.f32.mxu0 0.0
          %1911 = vmatmul.mubr.f32.gmra.mxu0 %v1731
          %v1912 = vpop.f32.mrf.mxu0
          %v1913 = vadd.f32 %v1769, %v1912
          %v1914 = vpop.f32.mrf.mxu0
          %1915 = vmatprep.mubr.f32.mxu0 0.0
          %1916 = vmatmul.mubr.f32.gmra.mxu0 %v1732
          %v1917 = vpop.f32.mrf.mxu0
          %v1918 = vadd.f32 %v1769, %v1917
          %v1919 = vpop.f32.mrf.mxu0
          %1920 = vmatprep.mubr.f32.mxu0 0.0
          %1921 = vmatmul.mubr.f32.gmra.mxu0 %v1733
          %v1922 = vpop.f32.mrf.mxu0
          %v1923 = vadd.f32 %v1769, %v1922
          %v1924 = vpop.f32.mrf.mxu0
          %1925 = vmatprep.mubr.f32.mxu0 0.0
          %1926 = vmatmul.mubr.f32.gmra.mxu0 %v1734
          %v1927 = vpop.f32.mrf.mxu0
          %v1928 = vadd.f32 %v1769, %v1927
          %v1929 = vpop.f32.mrf.mxu0
          %1930 = vmatprep.mubr.f32.mxu0 0.0
          %1931 = vmatmul.mubr.f32.gmra.mxu0 %v1735
          %v1932 = vpop.f32.mrf.mxu0
          %v1933 = vadd.f32 %v1769, %v1932
          %v1934 = vpop.f32.mrf.mxu0
          %1935 = vmatprep.mubr.f32.mxu0 0.0
          %1936 = vmatmul.mubr.f32.gmra.mxu0 %v1736
          %v1937 = vpop.f32.mrf.mxu0
          %v1938 = vadd.f32 %v1769, %v1937
          %v1939 = vpop.f32.mrf.mxu0
          %1940 = vmatprep.mubr.f32.mxu0 0.0
          %1941 = vmatmul.mubr.f32.gmra.mxu0 %v1737
          %v1942 = vpop.f32.mrf.mxu0
          %v1943 = vadd.f32 %v1769, %v1942
          %v1944 = vpop.f32.mrf.mxu0
          %1945 = vmatprep.mubr.f32.mxu0 0.0
          %1946 = vmatmul.mubr.f32.gmra.mxu0 %v1738
          %v1947 = vpop.f32.mrf.mxu0
          %v1948 = vadd.f32 %v1769, %v1947
          %v1949 = vpop.f32.mrf.mxu0
          %1950 = vmatprep.mubr.f32.mxu0 0.0
          %1951 = vmatmul.mubr.f32.gmra.mxu0 %v1739
          %v1952 = vpop.f32.mrf.mxu0
          %v1953 = vadd.f32 %v1769, %v1952
          %v1954 = vpop.f32.mrf.mxu0
          %1955 = vmatprep.mubr.f32.mxu0 0.0
          %1956 = vmatmul.mubr.f32.gmra.mxu0 %v1740
          %v1957 = vpop.f32.mrf.mxu0
          %v1958 = vadd.f32 %v1769, %v1957
          %v1959 = vpop.f32.mrf.mxu0
          %1960 = vmatprep.mubr.f32.mxu0 0.0
          %1961 = vmatmul.mubr.f32.gmra.mxu0 %v1741
          %v1962 = vpop.f32.mrf.mxu0
          %v1963 = vadd.f32 %v1769, %v1962
          %v1964 = vpop.f32.mrf.mxu0
          %1965 = vmatprep.mubr.f32.mxu0 0.0
          %1966 = vmatmul.mubr.f32.gmra.mxu0 %v1742
          %v1967 = vpop.f32.mrf.mxu0
          %v1968 = vadd.f32 %v1769, %v1967
          %v1969 = vpop.f32.mrf.mxu0
          %1970 = vmatprep.mubr.f32.mxu0 0.0
          %1971 = vmatmul.mubr.f32.gmra.mxu0 %v1743
          %v1972 = vpop.f32.mrf.mxu0
          %v1973 = vadd.f32 %v1769, %v1972
          %v1974 = vpop.f32.mrf.mxu0
          %1975 = vmatprep.mubr.f32.mxu0 0.0
          %1976 = vmatmul.mubr.f32.gmra.mxu0 %v1744
          %v1977 = vpop.f32.mrf.mxu0
          %v1978 = vadd.f32 %v1769, %v1977
          %v1979 = vpop.f32.mrf.mxu0
          %1980 = vmatprep.mubr.f32.mxu0 0.0
          %1981 = vmatmul.mubr.f32.gmra.mxu0 %v1745
          %v1982 = vpop.f32.mrf.mxu0
          %v1983 = vadd.f32 %v1769, %v1982
          %v1984 = vpop.f32.mrf.mxu0
          %1985 = vmatprep.mubr.f32.mxu0 0.0
          %1986 = vmatmul.mubr.f32.gmra.mxu0 %v1746
          %v1987 = vpop.f32.mrf.mxu0
          %v1988 = vadd.f32 %v1769, %v1987
          %v1989 = vpop.f32.mrf.mxu0
          %1990 = vmatprep.mubr.f32.mxu0 0.0
          %1991 = vmatmul.mubr.f32.gmra.mxu0 %v1747
          %v1992 = vpop.f32.mrf.mxu0
          %v1993 = vadd.f32 %v1769, %v1992
          %v1994 = vpop.f32.mrf.mxu0
          %1995 = vdwg.mxu0
          %v1996 = vmax.f32 %v1838, 0.0
          %v1997 = vmax.f32 %v1843, 0.0
          %v1998 = vmax.f32 %v1848, 0.0
          %v1999 = vmax.f32 %v1853, 0.0
          %v2000 = vmax.f32 %v1858, 0.0
          %v2001 = vmax.f32 %v1863, 0.0
          %v2002 = vmax.f32 %v1868, 0.0
          %v2003 = vmax.f32 %v1873, 0.0
          %v2004 = vmax.f32 %v1878, 0.0
          %v2005 = vmax.f32 %v1883, 0.0
          %v2006 = vmax.f32 %v1888, 0.0
          %v2007 = vmax.f32 %v1893, 0.0
          %v2008 = vmax.f32 %v1898, 0.0
          %v2009 = vmax.f32 %v1903, 0.0
          %v2010 = vmax.f32 %v1908, 0.0
          %v2011 = vmax.f32 %v1913, 0.0
          %v2012 = vmax.f32 %v1918, 0.0
          %v2013 = vmax.f32 %v1923, 0.0
          %v2014 = vmax.f32 %v1928, 0.0
          %v2015 = vmax.f32 %v1933, 0.0
          %v2016 = vmax.f32 %v1938, 0.0
          %v2017 = vmax.f32 %v1943, 0.0
          %v2018 = vmax.f32 %v1948, 0.0
          %v2019 = vmax.f32 %v1953, 0.0
          %v2020 = vmax.f32 %v1958, 0.0
          %v2021 = vmax.f32 %v1963, 0.0
          %v2022 = vmax.f32 %v1968, 0.0
          %v2023 = vmax.f32 %v1973, 0.0
          %v2024 = vmax.f32 %v1978, 0.0
          %v2025 = vmax.f32 %v1983, 0.0
          %v2026 = vmax.f32 %v1988, 0.0
          %v2027 = vmax.f32 %v1993, 0.0
          %v2028 = vld [vmem:[#allocation12] sm:$0xff]
          %v2029 = vld [vmem:[#allocation12 + $0x8] sm:$0xff]
          %v2030 = vld [vmem:[#allocation12 + $0x10] sm:$0xff]
          %v2031 = vld [vmem:[#allocation12 + $0x18] sm:$0xff]
          %v2032 = vld [vmem:[#allocation12 + $0x20] sm:$0xff]
          %v2033 = vld [vmem:[#allocation12 + $0x28] sm:$0xff]
          %v2034 = vld [vmem:[#allocation12 + $0x30] sm:$0xff]
          %v2035 = vld [vmem:[#allocation12 + $0x38] sm:$0xff]
          %v2036 = vld [vmem:[#allocation12 + $0x40] sm:$0xff]
          %v2037 = vld [vmem:[#allocation12 + $0x48] sm:$0xff]
          %v2038 = vld [vmem:[#allocation12 + $0x50] sm:$0xff]
          %v2039 = vld [vmem:[#allocation12 + $0x58] sm:$0xff]
          %v2040 = vld [vmem:[#allocation12 + $0x60] sm:$0xff]
          %v2041 = vld [vmem:[#allocation12 + $0x68] sm:$0xff]
          %v2042 = vld [vmem:[#allocation12 + $0x70] sm:$0xff]
          %v2043 = vld [vmem:[#allocation12 + $0x78] sm:$0xff]
          %v2044 = vld [vmem:[%s6] sm:$0x1]
          %v2046 = vlaneseq
          %v2047 = vshrl.u32 %v2046, 7
          %v2048 = vsub.s32 0, %v2047
          %v2049 = vrot.slane %v2044, %v2048
          %2051 = vmatprep.subr.mxu0 0.0
          %2052 = vmatpush1.msra.mxu0 %v2043
          %2053 = vmatprep.subr.mxu0 0.0
          %2054 = vmatpush1.msra.mxu0 %v2042
          %2055 = vmatprep.subr.mxu0 0.0
          %2056 = vmatpush1.msra.mxu0 %v2041
          %2057 = vmatprep.subr.mxu0 0.0
          %2058 = vmatpush1.msra.mxu0 %v2040
          %2059 = vmatprep.subr.mxu0 0.0
          %2060 = vmatpush1.msra.mxu0 %v2039
          %2061 = vmatprep.subr.mxu0 0.0
          %2062 = vmatpush1.msra.mxu0 %v2038
          %2063 = vmatprep.subr.mxu0 0.0
          %2064 = vmatpush1.msra.mxu0 %v2037
          %2065 = vmatprep.subr.mxu0 0.0
          %2066 = vmatpush1.msra.mxu0 %v2036
          %2067 = vmatprep.subr.mxu0 0.0
          %2068 = vmatpush1.msra.mxu0 %v2035
          %2069 = vmatprep.subr.mxu0 0.0
          %2070 = vmatpush1.msra.mxu0 %v2034
          %2071 = vmatprep.subr.mxu0 0.0
          %2072 = vmatpush1.msra.mxu0 %v2033
          %2073 = vmatprep.subr.mxu0 0.0
          %2074 = vmatpush1.msra.mxu0 %v2032
          %2075 = vmatprep.subr.mxu0 0.0
          %2076 = vmatpush1.msra.mxu0 %v2031
          %2077 = vmatprep.subr.mxu0 0.0
          %2078 = vmatpush1.msra.mxu0 %v2030
          %2079 = vmatprep.subr.mxu0 0.0
          %2080 = vmatpush1.msra.mxu0 %v2029
          %2081 = vmatprep.subr.mxu0 0.0
          %2082 = vmatpush1.msra.mxu0 %v2028
          %2083 = vmatprep.subr.mxu0 0.0
          %2084 = vmatpush2.msra.mxu0 0.0
          %2085 = vmatprep.subr.mxu0 0.0
          %2086 = vmatpush2.msra.mxu0 0.0
          %2087 = vmatprep.subr.mxu0 0.0
          %2088 = vmatpush2.msra.mxu0 0.0
          %2089 = vmatprep.subr.mxu0 0.0
          %2090 = vmatpush2.msra.mxu0 0.0
          %2091 = vmatprep.subr.mxu0 0.0
          %2092 = vmatpush2.msra.mxu0 0.0
          %2093 = vmatprep.subr.mxu0 0.0
          %2094 = vmatpush2.msra.mxu0 0.0
          %2095 = vmatprep.subr.mxu0 0.0
          %2096 = vmatpush2.msra.mxu0 0.0
          %2097 = vmatprep.subr.mxu0 0.0
          %2098 = vmatpush2.msra.mxu0 0.0
          %2099 = vmatprep.subr.mxu0 0.0
          %2100 = vmatpush2.msra.mxu0 0.0
          %2101 = vmatprep.subr.mxu0 0.0
          %2102 = vmatpush2.msra.mxu0 0.0
          %2103 = vmatprep.subr.mxu0 0.0
          %2104 = vmatpush2.msra.mxu0 0.0
          %2105 = vmatprep.subr.mxu0 0.0
          %2106 = vmatpush2.msra.mxu0 0.0
          %2107 = vmatprep.subr.mxu0 0.0
          %2108 = vmatpush2.msra.mxu0 0.0
          %2109 = vmatprep.subr.mxu0 0.0
          %2110 = vmatpush2.msra.mxu0 0.0
          %2111 = vmatprep.subr.mxu0 0.0
          %2112 = vmatpush2.msra.mxu0 0.0
          %2113 = vmatprep.subr.mxu0 0.0
          %2114 = vmatpush2.msra.mxu0 0.0
          %2115 = vmatprep.mubr.f32.mxu0 0.0
          %2116 = vmatmul.mubr.f32.gmra.mxu0 %v1996
          %v2117 = vpop.f32.mrf.mxu0
          %v2118 = vadd.f32 %v2049, %v2117
          %v2119 = vpop.f32.mrf.mxu0
          %2120 = vmatprep.mubr.f32.mxu0 0.0
          %2121 = vmatmul.mubr.f32.gmra.mxu0 %v1997
          %v2122 = vpop.f32.mrf.mxu0
          %v2123 = vadd.f32 %v2049, %v2122
          %v2124 = vpop.f32.mrf.mxu0
          %2125 = vmatprep.mubr.f32.mxu0 0.0
          %2126 = vmatmul.mubr.f32.gmra.mxu0 %v1998
          %v2127 = vpop.f32.mrf.mxu0
          %v2128 = vadd.f32 %v2049, %v2127
          %v2129 = vpop.f32.mrf.mxu0
          %2130 = vmatprep.mubr.f32.mxu0 0.0
          %2131 = vmatmul.mubr.f32.gmra.mxu0 %v1999
          %v2132 = vpop.f32.mrf.mxu0
          %v2133 = vadd.f32 %v2049, %v2132
          %v2134 = vpop.f32.mrf.mxu0
          %2135 = vmatprep.mubr.f32.mxu0 0.0
          %2136 = vmatmul.mubr.f32.gmra.mxu0 %v2000
          %v2137 = vpop.f32.mrf.mxu0
          %v2138 = vadd.f32 %v2049, %v2137
          %v2139 = vpop.f32.mrf.mxu0
          %2140 = vmatprep.mubr.f32.mxu0 0.0
          %2141 = vmatmul.mubr.f32.gmra.mxu0 %v2001
          %v2142 = vpop.f32.mrf.mxu0
          %v2143 = vadd.f32 %v2049, %v2142
          %v2144 = vpop.f32.mrf.mxu0
          %2145 = vmatprep.mubr.f32.mxu0 0.0
          %2146 = vmatmul.mubr.f32.gmra.mxu0 %v2002
          %v2147 = vpop.f32.mrf.mxu0
          %v2148 = vadd.f32 %v2049, %v2147
          %v2149 = vpop.f32.mrf.mxu0
          %2150 = vmatprep.mubr.f32.mxu0 0.0
          %2151 = vmatmul.mubr.f32.gmra.mxu0 %v2003
          %v2152 = vpop.f32.mrf.mxu0
          %v2153 = vadd.f32 %v2049, %v2152
          %v2154 = vpop.f32.mrf.mxu0
          %2155 = vmatprep.mubr.f32.mxu0 0.0
          %2156 = vmatmul.mubr.f32.gmra.mxu0 %v2004
          %v2157 = vpop.f32.mrf.mxu0
          %v2158 = vadd.f32 %v2049, %v2157
          %v2159 = vpop.f32.mrf.mxu0
          %2160 = vmatprep.mubr.f32.mxu0 0.0
          %2161 = vmatmul.mubr.f32.gmra.mxu0 %v2005
          %v2162 = vpop.f32.mrf.mxu0
          %v2163 = vadd.f32 %v2049, %v2162
          %v2164 = vpop.f32.mrf.mxu0
          %2165 = vmatprep.mubr.f32.mxu0 0.0
          %2166 = vmatmul.mubr.f32.gmra.mxu0 %v2006
          %v2167 = vpop.f32.mrf.mxu0
          %v2168 = vadd.f32 %v2049, %v2167
          %v2169 = vpop.f32.mrf.mxu0
          %2170 = vmatprep.mubr.f32.mxu0 0.0
          %2171 = vmatmul.mubr.f32.gmra.mxu0 %v2007
          %v2172 = vpop.f32.mrf.mxu0
          %v2173 = vadd.f32 %v2049, %v2172
          %v2174 = vpop.f32.mrf.mxu0
          %2175 = vmatprep.mubr.f32.mxu0 0.0
          %2176 = vmatmul.mubr.f32.gmra.mxu0 %v2008
          %v2177 = vpop.f32.mrf.mxu0
          %v2178 = vadd.f32 %v2049, %v2177
          %v2179 = vpop.f32.mrf.mxu0
          %2180 = vmatprep.mubr.f32.mxu0 0.0
          %2181 = vmatmul.mubr.f32.gmra.mxu0 %v2009
          %v2182 = vpop.f32.mrf.mxu0
          %v2183 = vadd.f32 %v2049, %v2182
          %v2184 = vpop.f32.mrf.mxu0
          %2185 = vmatprep.mubr.f32.mxu0 0.0
          %2186 = vmatmul.mubr.f32.gmra.mxu0 %v2010
          %v2187 = vpop.f32.mrf.mxu0
          %v2188 = vadd.f32 %v2049, %v2187
          %v2189 = vpop.f32.mrf.mxu0
          %2190 = vmatprep.mubr.f32.mxu0 0.0
          %2191 = vmatmul.mubr.f32.gmra.mxu0 %v2011
          %v2192 = vpop.f32.mrf.mxu0
          %v2193 = vadd.f32 %v2049, %v2192
          %v2194 = vpop.f32.mrf.mxu0
          %2195 = vmatprep.mubr.f32.mxu0 0.0
          %2196 = vmatmul.mubr.f32.gmra.mxu0 %v2012
          %v2197 = vpop.f32.mrf.mxu0
          %v2198 = vadd.f32 %v2049, %v2197
          %v2199 = vpop.f32.mrf.mxu0
          %2200 = vmatprep.mubr.f32.mxu0 0.0
          %2201 = vmatmul.mubr.f32.gmra.mxu0 %v2013
          %v2202 = vpop.f32.mrf.mxu0
          %v2203 = vadd.f32 %v2049, %v2202
          %v2204 = vpop.f32.mrf.mxu0
          %2205 = vmatprep.mubr.f32.mxu0 0.0
          %2206 = vmatmul.mubr.f32.gmra.mxu0 %v2014
          %v2207 = vpop.f32.mrf.mxu0
          %v2208 = vadd.f32 %v2049, %v2207
          %v2209 = vpop.f32.mrf.mxu0
          %2210 = vmatprep.mubr.f32.mxu0 0.0
          %2211 = vmatmul.mubr.f32.gmra.mxu0 %v2015
          %v2212 = vpop.f32.mrf.mxu0
          %v2213 = vadd.f32 %v2049, %v2212
          %v2214 = vpop.f32.mrf.mxu0
          %2215 = vmatprep.mubr.f32.mxu0 0.0
          %2216 = vmatmul.mubr.f32.gmra.mxu0 %v2016
          %v2217 = vpop.f32.mrf.mxu0
          %v2218 = vadd.f32 %v2049, %v2217
          %v2219 = vpop.f32.mrf.mxu0
          %2220 = vmatprep.mubr.f32.mxu0 0.0
          %2221 = vmatmul.mubr.f32.gmra.mxu0 %v2017
          %v2222 = vpop.f32.mrf.mxu0
          %v2223 = vadd.f32 %v2049, %v2222
          %v2224 = vpop.f32.mrf.mxu0
          %2225 = vmatprep.mubr.f32.mxu0 0.0
          %2226 = vmatmul.mubr.f32.gmra.mxu0 %v2018
          %v2227 = vpop.f32.mrf.mxu0
          %v2228 = vadd.f32 %v2049, %v2227
          %v2229 = vpop.f32.mrf.mxu0
          %2230 = vmatprep.mubr.f32.mxu0 0.0
          %2231 = vmatmul.mubr.f32.gmra.mxu0 %v2019
          %v2232 = vpop.f32.mrf.mxu0
          %v2233 = vadd.f32 %v2049, %v2232
          %v2234 = vpop.f32.mrf.mxu0
          %2235 = vmatprep.mubr.f32.mxu0 0.0
          %2236 = vmatmul.mubr.f32.gmra.mxu0 %v2020
          %v2237 = vpop.f32.mrf.mxu0
          %v2238 = vadd.f32 %v2049, %v2237
          %v2239 = vpop.f32.mrf.mxu0
          %2240 = vmatprep.mubr.f32.mxu0 0.0
          %2241 = vmatmul.mubr.f32.gmra.mxu0 %v2021
          %v2242 = vpop.f32.mrf.mxu0
          %v2243 = vadd.f32 %v2049, %v2242
          %v2244 = vpop.f32.mrf.mxu0
          %2245 = vmatprep.mubr.f32.mxu0 0.0
          %2246 = vmatmul.mubr.f32.gmra.mxu0 %v2022
          %v2247 = vpop.f32.mrf.mxu0
          %v2248 = vadd.f32 %v2049, %v2247
          %v2249 = vpop.f32.mrf.mxu0
          %2250 = vmatprep.mubr.f32.mxu0 0.0
          %2251 = vmatmul.mubr.f32.gmra.mxu0 %v2023
          %v2252 = vpop.f32.mrf.mxu0
          %v2253 = vadd.f32 %v2049, %v2252
          %v2254 = vpop.f32.mrf.mxu0
          %2255 = vmatprep.mubr.f32.mxu0 0.0
          %2256 = vmatmul.mubr.f32.gmra.mxu0 %v2024
          %v2257 = vpop.f32.mrf.mxu0
          %v2258 = vadd.f32 %v2049, %v2257
          %v2259 = vpop.f32.mrf.mxu0
          %2260 = vmatprep.mubr.f32.mxu0 0.0
          %2261 = vmatmul.mubr.f32.gmra.mxu0 %v2025
          %v2262 = vpop.f32.mrf.mxu0
          %v2263 = vadd.f32 %v2049, %v2262
          %v2264 = vpop.f32.mrf.mxu0
          %2265 = vmatprep.mubr.f32.mxu0 0.0
          %2266 = vmatmul.mubr.f32.gmra.mxu0 %v2026
          %v2267 = vpop.f32.mrf.mxu0
          %v2268 = vadd.f32 %v2049, %v2267
          %v2269 = vpop.f32.mrf.mxu0
          %2270 = vmatprep.mubr.f32.mxu0 0.0
          %2271 = vmatmul.mubr.f32.gmra.mxu0 %v2027
          %v2272 = vpop.f32.mrf.mxu0
          %v2273 = vadd.f32 %v2049, %v2272
          %v2274 = vpop.f32.mrf.mxu0
          %2275 = vdwg.mxu0
          %v2276 = vmax.f32 %v2118, 0.0
          %v2277 = vmax.f32 %v2123, 0.0
          %v2278 = vmax.f32 %v2128, 0.0
          %v2279 = vmax.f32 %v2133, 0.0
          %v2280 = vmax.f32 %v2138, 0.0
          %v2281 = vmax.f32 %v2143, 0.0
          %v2282 = vmax.f32 %v2148, 0.0
          %v2283 = vmax.f32 %v2153, 0.0
          %v2284 = vmax.f32 %v2158, 0.0
          %v2285 = vmax.f32 %v2163, 0.0
          %v2286 = vmax.f32 %v2168, 0.0
          %v2287 = vmax.f32 %v2173, 0.0
          %v2288 = vmax.f32 %v2178, 0.0
          %v2289 = vmax.f32 %v2183, 0.0
          %v2290 = vmax.f32 %v2188, 0.0
          %v2291 = vmax.f32 %v2193, 0.0
          %v2292 = vmax.f32 %v2198, 0.0
          %v2293 = vmax.f32 %v2203, 0.0
          %v2294 = vmax.f32 %v2208, 0.0
          %v2295 = vmax.f32 %v2213, 0.0
          %v2296 = vmax.f32 %v2218, 0.0
          %v2297 = vmax.f32 %v2223, 0.0
          %v2298 = vmax.f32 %v2228, 0.0
          %v2299 = vmax.f32 %v2233, 0.0
          %v2300 = vmax.f32 %v2238, 0.0
          %v2301 = vmax.f32 %v2243, 0.0
          %v2302 = vmax.f32 %v2248, 0.0
          %v2303 = vmax.f32 %v2253, 0.0
          %v2304 = vmax.f32 %v2258, 0.0
          %v2305 = vmax.f32 %v2263, 0.0
          %v2306 = vmax.f32 %v2268, 0.0
          %v2307 = vmax.f32 %v2273, 0.0
          %v2308 = vlaneseq
          %v2309 = vand.u32 %v2308, 127
          %vm2310 = vcmp.lt.s32.totalorder %v2309, 64
          %v2311 = vsel %vm2310, 1, 0
          %v2312 = vcvt.s32.f32 %v2311
          %2313 = vadd.xlane.f32.xlu0 %v2276
          %v2314 = vpop.xlane.xlu0 %2313
          %2315 = vadd.xlane.f32.xlu0 %v2277
          %v2316 = vpop.xlane.xlu0 %2315
          %2317 = vadd.xlane.f32.xlu0 %v2278
          %v2318 = vpop.xlane.xlu0 %2317
          %2319 = vadd.xlane.f32.xlu0 %v2279
          %v2320 = vpop.xlane.xlu0 %2319
          %2321 = vadd.xlane.f32.xlu0 %v2280
          %v2322 = vpop.xlane.xlu0 %2321
          %2323 = vadd.xlane.f32.xlu0 %v2281
          %v2324 = vpop.xlane.xlu0 %2323
          %2325 = vadd.xlane.f32.xlu0 %v2282
          %v2326 = vpop.xlane.xlu0 %2325
          %2327 = vadd.xlane.f32.xlu0 %v2283
          %v2328 = vpop.xlane.xlu0 %2327
          %2329 = vadd.xlane.f32.xlu0 %v2284
          %v2330 = vpop.xlane.xlu0 %2329
          %2331 = vadd.xlane.f32.xlu0 %v2285
          %v2332 = vpop.xlane.xlu0 %2331
          %2333 = vadd.xlane.f32.xlu0 %v2286
          %v2334 = vpop.xlane.xlu0 %2333
          %2335 = vadd.xlane.f32.xlu0 %v2287
          %v2336 = vpop.xlane.xlu0 %2335
          %2337 = vadd.xlane.f32.xlu0 %v2288
          %v2338 = vpop.xlane.xlu0 %2337
          %2339 = vadd.xlane.f32.xlu0 %v2289
          %v2340 = vpop.xlane.xlu0 %2339
          %2341 = vadd.xlane.f32.xlu0 %v2290
          %v2342 = vpop.xlane.xlu0 %2341
          %2343 = vadd.xlane.f32.xlu0 %v2291
          %v2344 = vpop.xlane.xlu0 %2343
          %2345 = vadd.xlane.f32.xlu0 %v2292
          %v2346 = vpop.xlane.xlu0 %2345
          %2347 = vadd.xlane.f32.xlu0 %v2293
          %v2348 = vpop.xlane.xlu0 %2347
          %2349 = vadd.xlane.f32.xlu0 %v2294
          %v2350 = vpop.xlane.xlu0 %2349
          %2351 = vadd.xlane.f32.xlu0 %v2295
          %v2352 = vpop.xlane.xlu0 %2351
          %2353 = vadd.xlane.f32.xlu0 %v2296
          %v2354 = vpop.xlane.xlu0 %2353
          %2355 = vadd.xlane.f32.xlu0 %v2297
          %v2356 = vpop.xlane.xlu0 %2355
          %2357 = vadd.xlane.f32.xlu0 %v2298
          %v2358 = vpop.xlane.xlu0 %2357
          %2359 = vadd.xlane.f32.xlu0 %v2299
          %v2360 = vpop.xlane.xlu0 %2359
          %2361 = vadd.xlane.f32.xlu0 %v2300
          %v2362 = vpop.xlane.xlu0 %2361
          %2363 = vadd.xlane.f32.xlu0 %v2301
          %v2364 = vpop.xlane.xlu0 %2363
          %2365 = vadd.xlane.f32.xlu0 %v2302
          %v2366 = vpop.xlane.xlu0 %2365
          %2367 = vadd.xlane.f32.xlu0 %v2303
          %v2368 = vpop.xlane.xlu0 %2367
          %2369 = vadd.xlane.f32.xlu0 %v2304
          %v2370 = vpop.xlane.xlu0 %2369
          %2371 = vadd.xlane.f32.xlu0 %v2305
          %v2372 = vpop.xlane.xlu0 %2371
          %2373 = vadd.xlane.f32.xlu0 %v2306
          %v2374 = vpop.xlane.xlu0 %2373
          %2375 = vadd.xlane.f32.xlu0 %v2307
          %v2376 = vpop.xlane.xlu0 %2375
          %v2377 = vmul.f32 %v2314, 0.015625
          %v2378 = vmul.f32 %v2316, 0.015625
          %v2379 = vmul.f32 %v2318, 0.015625
          %v2380 = vmul.f32 %v2320, 0.015625
          %v2381 = vmul.f32 %v2322, 0.015625
          %v2382 = vmul.f32 %v2324, 0.015625
          %v2383 = vmul.f32 %v2326, 0.015625
          %v2384 = vmul.f32 %v2328, 0.015625
          %v2385 = vmul.f32 %v2330, 0.015625
          %v2386 = vmul.f32 %v2332, 0.015625
          %v2387 = vmul.f32 %v2334, 0.015625
          %v2388 = vmul.f32 %v2336, 0.015625
          %v2389 = vmul.f32 %v2338, 0.015625
          %v2390 = vmul.f32 %v2340, 0.015625
          %v2391 = vmul.f32 %v2342, 0.015625
          %v2392 = vmul.f32 %v2344, 0.015625
          %v2393 = vmul.f32 %v2346, 0.015625
          %v2394 = vmul.f32 %v2348, 0.015625
          %v2395 = vmul.f32 %v2350, 0.015625
          %v2396 = vmul.f32 %v2352, 0.015625
          %v2397 = vmul.f32 %v2354, 0.015625
          %v2398 = vmul.f32 %v2356, 0.015625
          %v2399 = vmul.f32 %v2358, 0.015625
          %v2400 = vmul.f32 %v2360, 0.015625
          %v2401 = vmul.f32 %v2362, 0.015625
          %v2402 = vmul.f32 %v2364, 0.015625
          %v2403 = vmul.f32 %v2366, 0.015625
          %v2404 = vmul.f32 %v2368, 0.015625
          %v2405 = vmul.f32 %v2370, 0.015625
          %v2406 = vmul.f32 %v2372, 0.015625
          %v2407 = vmul.f32 %v2374, 0.015625
          %v2408 = vmul.f32 %v2376, 0.015625
          %v2409 = vsub.f32 %v2276, %v2377
          %v2410 = vsub.f32 %v2277, %v2378
          %v2411 = vsub.f32 %v2278, %v2379
          %v2412 = vsub.f32 %v2279, %v2380
          %v2413 = vsub.f32 %v2280, %v2381
          %v2414 = vsub.f32 %v2281, %v2382
          %v2415 = vsub.f32 %v2282, %v2383
          %v2416 = vsub.f32 %v2283, %v2384
          %v2417 = vsub.f32 %v2284, %v2385
          %v2418 = vsub.f32 %v2285, %v2386
          %v2419 = vsub.f32 %v2286, %v2387
          %v2420 = vsub.f32 %v2287, %v2388
          %v2421 = vsub.f32 %v2288, %v2389
          %v2422 = vsub.f32 %v2289, %v2390
          %v2423 = vsub.f32 %v2290, %v2391
          %v2424 = vsub.f32 %v2291, %v2392
          %v2425 = vsub.f32 %v2292, %v2393
          %v2426 = vsub.f32 %v2293, %v2394
          %v2427 = vsub.f32 %v2294, %v2395
          %v2428 = vsub.f32 %v2295, %v2396
          %v2429 = vsub.f32 %v2296, %v2397
          %v2430 = vsub.f32 %v2297, %v2398
          %v2431 = vsub.f32 %v2298, %v2399
          %v2432 = vsub.f32 %v2299, %v2400
          %v2433 = vsub.f32 %v2300, %v2401
          %v2434 = vsub.f32 %v2301, %v2402
          %v2435 = vsub.f32 %v2302, %v2403
          %v2436 = vsub.f32 %v2303, %v2404
          %v2437 = vsub.f32 %v2304, %v2405
          %v2438 = vsub.f32 %v2305, %v2406
          %v2439 = vsub.f32 %v2306, %v2407
          %v2440 = vsub.f32 %v2307, %v2408
          %v2441 = vmul.f32 %v2409, %v2312
          %v2442 = vmul.f32 %v2410, %v2312
          %v2443 = vmul.f32 %v2411, %v2312
          %v2444 = vmul.f32 %v2412, %v2312
          %v2445 = vmul.f32 %v2413, %v2312
          %v2446 = vmul.f32 %v2414, %v2312
          %v2447 = vmul.f32 %v2415, %v2312
          %v2448 = vmul.f32 %v2416, %v2312
          %v2449 = vmul.f32 %v2417, %v2312
          %v2450 = vmul.f32 %v2418, %v2312
          %v2451 = vmul.f32 %v2419, %v2312
          %v2452 = vmul.f32 %v2420, %v2312
          %v2453 = vmul.f32 %v2421, %v2312
          %v2454 = vmul.f32 %v2422, %v2312
          %v2455 = vmul.f32 %v2423, %v2312
          %v2456 = vmul.f32 %v2424, %v2312
          %v2457 = vmul.f32 %v2425, %v2312
          %v2458 = vmul.f32 %v2426, %v2312
          %v2459 = vmul.f32 %v2427, %v2312
          %v2460 = vmul.f32 %v2428, %v2312
          %v2461 = vmul.f32 %v2429, %v2312
          %v2462 = vmul.f32 %v2430, %v2312
          %v2463 = vmul.f32 %v2431, %v2312
          %v2464 = vmul.f32 %v2432, %v2312
          %v2465 = vmul.f32 %v2433, %v2312
          %v2466 = vmul.f32 %v2434, %v2312
          %v2467 = vmul.f32 %v2435, %v2312
          %v2468 = vmul.f32 %v2436, %v2312
          %v2469 = vmul.f32 %v2437, %v2312
          %v2470 = vmul.f32 %v2438, %v2312
          %v2471 = vmul.f32 %v2439, %v2312
          %v2472 = vmul.f32 %v2440, %v2312
          %v2473 = vmul.f32 %v2441, %v2441
          %v2474 = vmul.f32 %v2442, %v2442
          %v2475 = vmul.f32 %v2443, %v2443
          %v2476 = vmul.f32 %v2444, %v2444
          %v2477 = vmul.f32 %v2445, %v2445
          %v2478 = vmul.f32 %v2446, %v2446
          %v2479 = vmul.f32 %v2447, %v2447
          %v2480 = vmul.f32 %v2448, %v2448
          %v2481 = vmul.f32 %v2449, %v2449
          %v2482 = vmul.f32 %v2450, %v2450
          %v2483 = vmul.f32 %v2451, %v2451
          %v2484 = vmul.f32 %v2452, %v2452
          %v2485 = vmul.f32 %v2453, %v2453
          %v2486 = vmul.f32 %v2454, %v2454
          %v2487 = vmul.f32 %v2455, %v2455
          %v2488 = vmul.f32 %v2456, %v2456
          %v2489 = vmul.f32 %v2457, %v2457
          %v2490 = vmul.f32 %v2458, %v2458
          %v2491 = vmul.f32 %v2459, %v2459
          %v2492 = vmul.f32 %v2460, %v2460
          %v2493 = vmul.f32 %v2461, %v2461
          %v2494 = vmul.f32 %v2462, %v2462
          %v2495 = vmul.f32 %v2463, %v2463
          %v2496 = vmul.f32 %v2464, %v2464
          %v2497 = vmul.f32 %v2465, %v2465
          %v2498 = vmul.f32 %v2466, %v2466
          %v2499 = vmul.f32 %v2467, %v2467
          %v2500 = vmul.f32 %v2468, %v2468
          %v2501 = vmul.f32 %v2469, %v2469
          %v2502 = vmul.f32 %v2470, %v2470
          %v2503 = vmul.f32 %v2471, %v2471
          %v2504 = vmul.f32 %v2472, %v2472
          %2505 = vadd.xlane.f32.xlu0 %v2473
          %v2506 = vpop.xlane.xlu0 %2505
          %2507 = vadd.xlane.f32.xlu0 %v2474
          %v2508 = vpop.xlane.xlu0 %2507
          %2509 = vadd.xlane.f32.xlu0 %v2475
          %v2510 = vpop.xlane.xlu0 %2509
          %2511 = vadd.xlane.f32.xlu0 %v2476
          %v2512 = vpop.xlane.xlu0 %2511
          %2513 = vadd.xlane.f32.xlu0 %v2477
          %v2514 = vpop.xlane.xlu0 %2513
          %2515 = vadd.xlane.f32.xlu0 %v2478
          %v2516 = vpop.xlane.xlu0 %2515
          %2517 = vadd.xlane.f32.xlu0 %v2479
          %v2518 = vpop.xlane.xlu0 %2517
          %2519 = vadd.xlane.f32.xlu0 %v2480
          %v2520 = vpop.xlane.xlu0 %2519
          %2521 = vadd.xlane.f32.xlu0 %v2481
          %v2522 = vpop.xlane.xlu0 %2521
          %2523 = vadd.xlane.f32.xlu0 %v2482
          %v2524 = vpop.xlane.xlu0 %2523
          %2525 = vadd.xlane.f32.xlu0 %v2483
          %v2526 = vpop.xlane.xlu0 %2525
          %2527 = vadd.xlane.f32.xlu0 %v2484
          %v2528 = vpop.xlane.xlu0 %2527
          %2529 = vadd.xlane.f32.xlu0 %v2485
          %v2530 = vpop.xlane.xlu0 %2529
          %2531 = vadd.xlane.f32.xlu0 %v2486
          %v2532 = vpop.xlane.xlu0 %2531
          %2533 = vadd.xlane.f32.xlu0 %v2487
          %v2534 = vpop.xlane.xlu0 %2533
          %2535 = vadd.xlane.f32.xlu0 %v2488
          %v2536 = vpop.xlane.xlu0 %2535
          %2537 = vadd.xlane.f32.xlu0 %v2489
          %v2538 = vpop.xlane.xlu0 %2537
          %2539 = vadd.xlane.f32.xlu0 %v2490
          %v2540 = vpop.xlane.xlu0 %2539
          %2541 = vadd.xlane.f32.xlu0 %v2491
          %v2542 = vpop.xlane.xlu0 %2541
          %2543 = vadd.xlane.f32.xlu0 %v2492
          %v2544 = vpop.xlane.xlu0 %2543
          %2545 = vadd.xlane.f32.xlu0 %v2493
          %v2546 = vpop.xlane.xlu0 %2545
          %2547 = vadd.xlane.f32.xlu0 %v2494
          %v2548 = vpop.xlane.xlu0 %2547
          %2549 = vadd.xlane.f32.xlu0 %v2495
          %v2550 = vpop.xlane.xlu0 %2549
          %2551 = vadd.xlane.f32.xlu0 %v2496
          %v2552 = vpop.xlane.xlu0 %2551
          %2553 = vadd.xlane.f32.xlu0 %v2497
          %v2554 = vpop.xlane.xlu0 %2553
          %2555 = vadd.xlane.f32.xlu0 %v2498
          %v2556 = vpop.xlane.xlu0 %2555
          %2557 = vadd.xlane.f32.xlu0 %v2499
          %v2558 = vpop.xlane.xlu0 %2557
          %2559 = vadd.xlane.f32.xlu0 %v2500
          %v2560 = vpop.xlane.xlu0 %2559
          %2561 = vadd.xlane.f32.xlu0 %v2501
          %v2562 = vpop.xlane.xlu0 %2561
          %2563 = vadd.xlane.f32.xlu0 %v2502
          %v2564 = vpop.xlane.xlu0 %2563
          %2565 = vadd.xlane.f32.xlu0 %v2503
          %v2566 = vpop.xlane.xlu0 %2565
          %2567 = vadd.xlane.f32.xlu0 %v2504
          %v2568 = vpop.xlane.xlu0 %2567
          %v2569 = vmul.f32 %v2506, 0.015625
          %v2570 = vmul.f32 %v2508, 0.015625
          %v2571 = vmul.f32 %v2510, 0.015625
          %v2572 = vmul.f32 %v2512, 0.015625
          %v2573 = vmul.f32 %v2514, 0.015625
          %v2574 = vmul.f32 %v2516, 0.015625
          %v2575 = vmul.f32 %v2518, 0.015625
          %v2576 = vmul.f32 %v2520, 0.015625
          %v2577 = vmul.f32 %v2522, 0.015625
          %v2578 = vmul.f32 %v2524, 0.015625
          %v2579 = vmul.f32 %v2526, 0.015625
          %v2580 = vmul.f32 %v2528, 0.015625
          %v2581 = vmul.f32 %v2530, 0.015625
          %v2582 = vmul.f32 %v2532, 0.015625
          %v2583 = vmul.f32 %v2534, 0.015625
          %v2584 = vmul.f32 %v2536, 0.015625
          %v2585 = vmul.f32 %v2538, 0.015625
          %v2586 = vmul.f32 %v2540, 0.015625
          %v2587 = vmul.f32 %v2542, 0.015625
          %v2588 = vmul.f32 %v2544, 0.015625
          %v2589 = vmul.f32 %v2546, 0.015625
          %v2590 = vmul.f32 %v2548, 0.015625
          %v2591 = vmul.f32 %v2550, 0.015625
          %v2592 = vmul.f32 %v2552, 0.015625
          %v2593 = vmul.f32 %v2554, 0.015625
          %v2594 = vmul.f32 %v2556, 0.015625
          %v2595 = vmul.f32 %v2558, 0.015625
          %v2596 = vmul.f32 %v2560, 0.015625
          %v2597 = vmul.f32 %v2562, 0.015625
          %v2598 = vmul.f32 %v2564, 0.015625
          %v2599 = vmul.f32 %v2566, 0.015625
          %v2600 = vmul.f32 %v2568, 0.015625
          %v2601 = vadd.f32 %v2569, 1e-05
          %v2602 = vadd.f32 %v2570, 1e-05
          %v2603 = vadd.f32 %v2571, 1e-05
          %v2604 = vadd.f32 %v2572, 1e-05
          %v2605 = vadd.f32 %v2573, 1e-05
          %v2606 = vadd.f32 %v2574, 1e-05
          %v2607 = vadd.f32 %v2575, 1e-05
          %v2608 = vadd.f32 %v2576, 1e-05
          %v2609 = vadd.f32 %v2577, 1e-05
          %v2610 = vadd.f32 %v2578, 1e-05
          %v2611 = vadd.f32 %v2579, 1e-05
          %v2612 = vadd.f32 %v2580, 1e-05
          %v2613 = vadd.f32 %v2581, 1e-05
          %v2614 = vadd.f32 %v2582, 1e-05
          %v2615 = vadd.f32 %v2583, 1e-05
          %v2616 = vadd.f32 %v2584, 1e-05
          %v2617 = vadd.f32 %v2585, 1e-05
          %v2618 = vadd.f32 %v2586, 1e-05
          %v2619 = vadd.f32 %v2587, 1e-05
          %v2620 = vadd.f32 %v2588, 1e-05
          %v2621 = vadd.f32 %v2589, 1e-05
          %v2622 = vadd.f32 %v2590, 1e-05
          %v2623 = vadd.f32 %v2591, 1e-05
          %v2624 = vadd.f32 %v2592, 1e-05
          %v2625 = vadd.f32 %v2593, 1e-05
          %v2626 = vadd.f32 %v2594, 1e-05
          %v2627 = vadd.f32 %v2595, 1e-05
          %v2628 = vadd.f32 %v2596, 1e-05
          %v2629 = vadd.f32 %v2597, 1e-05
          %v2630 = vadd.f32 %v2598, 1e-05
          %v2631 = vadd.f32 %v2599, 1e-05
          %v2632 = vadd.f32 %v2600, 1e-05
          %v2633 = vrsqrt.pop %v2601
          %v2634 = vrsqrt.pop %v2602
          %v2635 = vrsqrt.pop %v2603
          %v2636 = vrsqrt.pop %v2604
          %v2637 = vrsqrt.pop %v2605
          %v2638 = vrsqrt.pop %v2606
          %v2639 = vrsqrt.pop %v2607
          %v2640 = vrsqrt.pop %v2608
          %v2641 = vrsqrt.pop %v2609
          %v2642 = vrsqrt.pop %v2610
          %v2643 = vrsqrt.pop %v2611
          %v2644 = vrsqrt.pop %v2612
          %v2645 = vrsqrt.pop %v2613
          %v2646 = vrsqrt.pop %v2614
          %v2647 = vrsqrt.pop %v2615
          %v2648 = vrsqrt.pop %v2616
          %v2649 = vrsqrt.pop %v2617
          %v2650 = vrsqrt.pop %v2618
          %v2651 = vrsqrt.pop %v2619
          %v2652 = vrsqrt.pop %v2620
          %v2653 = vrsqrt.pop %v2621
          %v2654 = vrsqrt.pop %v2622
          %v2655 = vrsqrt.pop %v2623
          %v2656 = vrsqrt.pop %v2624
          %v2657 = vrsqrt.pop %v2625
          %v2658 = vrsqrt.pop %v2626
          %v2659 = vrsqrt.pop %v2627
          %v2660 = vrsqrt.pop %v2628
          %v2661 = vrsqrt.pop %v2629
          %v2662 = vrsqrt.pop %v2630
          %v2663 = vrsqrt.pop %v2631
          %v2664 = vrsqrt.pop %v2632
          %v2665 = vmul.f32 %v2441, %v2633
          %v2666 = vmul.f32 %v2442, %v2634
          %v2667 = vmul.f32 %v2443, %v2635
          %v2668 = vmul.f32 %v2444, %v2636
          %v2669 = vmul.f32 %v2445, %v2637
          %v2670 = vmul.f32 %v2446, %v2638
          %v2671 = vmul.f32 %v2447, %v2639
          %v2672 = vmul.f32 %v2448, %v2640
          %v2673 = vmul.f32 %v2449, %v2641
          %v2674 = vmul.f32 %v2450, %v2642
          %v2675 = vmul.f32 %v2451, %v2643
          %v2676 = vmul.f32 %v2452, %v2644
          %v2677 = vmul.f32 %v2453, %v2645
          %v2678 = vmul.f32 %v2454, %v2646
          %v2679 = vmul.f32 %v2455, %v2647
          %v2680 = vmul.f32 %v2456, %v2648
          %v2681 = vmul.f32 %v2457, %v2649
          %v2682 = vmul.f32 %v2458, %v2650
          %v2683 = vmul.f32 %v2459, %v2651
          %v2684 = vmul.f32 %v2460, %v2652
          %v2685 = vmul.f32 %v2461, %v2653
          %v2686 = vmul.f32 %v2462, %v2654
          %v2687 = vmul.f32 %v2463, %v2655
          %v2688 = vmul.f32 %v2464, %v2656
          %v2689 = vmul.f32 %v2465, %v2657
          %v2690 = vmul.f32 %v2466, %v2658
          %v2691 = vmul.f32 %v2467, %v2659
          %v2692 = vmul.f32 %v2468, %v2660
          %v2693 = vmul.f32 %v2469, %v2661
          %v2694 = vmul.f32 %v2470, %v2662
          %v2695 = vmul.f32 %v2471, %v2663
          %v2696 = vmul.f32 %v2472, %v2664
          %v2697 = vld [vmem:[%s7] sm:$0x1]
          %v2699 = vlaneseq
          %v2700 = vshrl.u32 %v2699, 7
          %v2701 = vsub.s32 0, %v2700
          %v2702 = vrot.slane %v2697, %v2701
          %v2704 = vmul.f32 %v2665, %v2702
          %v2705 = vmul.f32 %v2666, %v2702
          %v2706 = vmul.f32 %v2667, %v2702
          %v2707 = vmul.f32 %v2668, %v2702
          %v2708 = vmul.f32 %v2669, %v2702
          %v2709 = vmul.f32 %v2670, %v2702
          %v2710 = vmul.f32 %v2671, %v2702
          %v2711 = vmul.f32 %v2672, %v2702
          %v2712 = vmul.f32 %v2673, %v2702
          %v2713 = vmul.f32 %v2674, %v2702
          %v2714 = vmul.f32 %v2675, %v2702
          %v2715 = vmul.f32 %v2676, %v2702
          %v2716 = vmul.f32 %v2677, %v2702
          %v2717 = vmul.f32 %v2678, %v2702
          %v2718 = vmul.f32 %v2679, %v2702
          %v2719 = vmul.f32 %v2680, %v2702
          %v2720 = vmul.f32 %v2681, %v2702
          %v2721 = vmul.f32 %v2682, %v2702
          %v2722 = vmul.f32 %v2683, %v2702
          %v2723 = vmul.f32 %v2684, %v2702
          %v2724 = vmul.f32 %v2685, %v2702
          %v2725 = vmul.f32 %v2686, %v2702
          %v2726 = vmul.f32 %v2687, %v2702
          %v2727 = vmul.f32 %v2688, %v2702
          %v2728 = vmul.f32 %v2689, %v2702
          %v2729 = vmul.f32 %v2690, %v2702
          %v2730 = vmul.f32 %v2691, %v2702
          %v2731 = vmul.f32 %v2692, %v2702
          %v2732 = vmul.f32 %v2693, %v2702
          %v2733 = vmul.f32 %v2694, %v2702
          %v2734 = vmul.f32 %v2695, %v2702
          %v2735 = vmul.f32 %v2696, %v2702
          %v2736 = vld [vmem:[%s8] sm:$0x1]
          %v2738 = vlaneseq
          %v2739 = vshrl.u32 %v2738, 7
          %v2740 = vsub.s32 0, %v2739
          %v2741 = vrot.slane %v2736, %v2740
          %v2743 = vadd.f32 %v2704, %v2741
          %v2744 = vadd.f32 %v2705, %v2741
          %v2745 = vadd.f32 %v2706, %v2741
          %v2746 = vadd.f32 %v2707, %v2741
          %v2747 = vadd.f32 %v2708, %v2741
          %v2748 = vadd.f32 %v2709, %v2741
          %v2749 = vadd.f32 %v2710, %v2741
          %v2750 = vadd.f32 %v2711, %v2741
          %v2751 = vadd.f32 %v2712, %v2741
          %v2752 = vadd.f32 %v2713, %v2741
          %v2753 = vadd.f32 %v2714, %v2741
          %v2754 = vadd.f32 %v2715, %v2741
          %v2755 = vadd.f32 %v2716, %v2741
          %v2756 = vadd.f32 %v2717, %v2741
          %v2757 = vadd.f32 %v2718, %v2741
          %v2758 = vadd.f32 %v2719, %v2741
          %v2759 = vadd.f32 %v2720, %v2741
          %v2760 = vadd.f32 %v2721, %v2741
          %v2761 = vadd.f32 %v2722, %v2741
          %v2762 = vadd.f32 %v2723, %v2741
          %v2763 = vadd.f32 %v2724, %v2741
          %v2764 = vadd.f32 %v2725, %v2741
          %v2765 = vadd.f32 %v2726, %v2741
          %v2766 = vadd.f32 %v2727, %v2741
          %v2767 = vadd.f32 %v2728, %v2741
          %v2768 = vadd.f32 %v2729, %v2741
          %v2769 = vadd.f32 %v2730, %v2741
          %v2770 = vadd.f32 %v2731, %v2741
          %v2771 = vadd.f32 %v2732, %v2741
          %v2772 = vadd.f32 %v2733, %v2741
          %v2773 = vadd.f32 %v2734, %v2741
          %v2774 = vadd.f32 %v2735, %v2741
          %2775 = vst [vmem:[%s494] sm:$0xff] %v2743
          %2776 = vst [vmem:[%s494 + $0x8] sm:$0xff] %v2744
          %2777 = vst [vmem:[%s494 + $0x10] sm:$0xff] %v2745
          %2778 = vst [vmem:[%s494 + $0x18] sm:$0xff] %v2746
          %2779 = vst [vmem:[%s494 + $0x20] sm:$0xff] %v2747
          %2780 = vst [vmem:[%s494 + $0x28] sm:$0xff] %v2748
          %2781 = vst [vmem:[%s494 + $0x30] sm:$0xff] %v2749
          %2782 = vst [vmem:[%s494 + $0x38] sm:$0xff] %v2750
          %2783 = vst [vmem:[%s494 + $0x40] sm:$0xff] %v2751
          %2784 = vst [vmem:[%s494 + $0x48] sm:$0xff] %v2752
          %2785 = vst [vmem:[%s494 + $0x50] sm:$0xff] %v2753
          %2786 = vst [vmem:[%s494 + $0x58] sm:$0xff] %v2754
          %2787 = vst [vmem:[%s494 + $0x60] sm:$0xff] %v2755
          %2788 = vst [vmem:[%s494 + $0x68] sm:$0xff] %v2756
          %2789 = vst [vmem:[%s494 + $0x70] sm:$0xff] %v2757
          %2790 = vst [vmem:[%s494 + $0x78] sm:$0xff] %v2758
          %2791 = vst [vmem:[%s494 + $0x80] sm:$0xff] %v2759
          %2792 = vst [vmem:[%s494 + $0x88] sm:$0xff] %v2760
          %2793 = vst [vmem:[%s494 + $0x90] sm:$0xff] %v2761
          %2794 = vst [vmem:[%s494 + $0x98] sm:$0xff] %v2762
          %2795 = vst [vmem:[%s494 + $0xa0] sm:$0xff] %v2763
          %2796 = vst [vmem:[%s494 + $0xa8] sm:$0xff] %v2764
          %2797 = vst [vmem:[%s494 + $0xb0] sm:$0xff] %v2765
          %2798 = vst [vmem:[%s494 + $0xb8] sm:$0xff] %v2766
          %2799 = vst [vmem:[%s494 + $0xc0] sm:$0xff] %v2767
          %2800 = vst [vmem:[%s494 + $0xc8] sm:$0xff] %v2768
          %2801 = vst [vmem:[%s494 + $0xd0] sm:$0xff] %v2769
          %2802 = vst [vmem:[%s494 + $0xd8] sm:$0xff] %v2770
          %2803 = vst [vmem:[%s494 + $0xe0] sm:$0xff] %v2771
          %2804 = vst [vmem:[%s494 + $0xe8] sm:$0xff] %v2772
          %2805 = vst [vmem:[%s494 + $0xf0] sm:$0xff] %v2773
          %2806 = vst [vmem:[%s494 + $0xf8] sm:$0xff] %v2774
        $region88: #{tpu_custom_call.1} parent=59 // pred_fallthru
          _
        %s2807 = sand.u32 %s277, 1
        %s2808 = scalar_lea.sflag [#allocation6], %s2807
        %s2809 = sand.u32 %s277, 1
        %s2810 = smul.addr %s2809, 256
        %s2811 = scalar_lea.vmem [#allocation13], %s2810
        // Predicated region
        $region89: #{tpu_custom_call.1} parent=59 // pred_check
          %p2812 = pneg %p287
        $region90: #{tpu_custom_call.1} parent=59 // pred_check_branch
          %2814 = sbr.rel (%p2812) target = $region92
        $region91: #{tpu_custom_call.1} parent=59 // pred_region
          %s2815 = smul.u32 32, %s36
          %s2817 = ssub.s32 4096, 4096
          %2818 = vsyncadd %s2808, %s2817
          %s2819 = smul.addr %s2815, 128
          %s2820 = scalar_lea.hbm %s10, %s2819
          %s2821 = sshll.u32 %s2811, 4
          %s2822 = int_to_ptr.vmem [resolvable:$true] %s2821
          %2827 = dma.vmem_to_hbm [thread:$0]  %s2822, 4096, %s2820, %s2808, 128, 128, 8
        $region92: #{tpu_custom_call.1} parent=59 // pred_fallthru
          _
      $region60: #{tpu_custom_call.1} parent=5 // pred_fallthru
        _
      %p2828 = scmp.le.s32.totalorder 2, %s27
      // Predicated region
      $region93: #{tpu_custom_call.1} parent=5 // pred_check
        %p2829 = pneg %p2828
      $region94: #{tpu_custom_call.1} parent=5 // pred_check_branch
        %2831 = sbr.rel (%p2829) target = $region96
      $region95: #{tpu_custom_call.1} parent=5 // pred_region
        %s2832 = ssub.s32 %s27, 2
        // Predicated region
        $region97: #{tpu_custom_call.1} parent=95 // pred_check
          %p2833 = pneg %p293
        $region98: #{tpu_custom_call.1} parent=95 // pred_check_branch
          %2835 = sbr.rel (%p2833) target = $region100
        $region99: #{tpu_custom_call.1} parent=95 // pred_region
          %s2836 = sand.u32 %s278, 1
          %s2837 = scalar_lea.sflag [#allocation6], %s2836
          %s2838 = sand.u32 %s278, 1
          %s2839 = smul.addr %s2838, 256
          %s2840 = scalar_lea.vmem [#allocation13], %s2839
          %2841 = dma.done %s2837, 4096
        $region100: #{tpu_custom_call.1} parent=95 // pred_fallthru
          _
      $region96: #{tpu_custom_call.1} parent=5 // pred_fallthru
        _
    $region6: #{tpu_custom_call.1} parent=1 // loop_footer
      %s31 = sadd.s32 1, %s27
    $region7: #{tpu_custom_call.1} parent=1 // loop_footer_branch
      %26 = sbr.rel target = $region3
    $region8: #{tpu_custom_call.1} parent=1 // loop_exit
      _
    %2842 = vsyncpa [#allocation5], 1
    %s2843 = scalar_lea.sflag [#allocation5], 1
    %2844 = vsyncpa %s2843, 1
    %2845 = vsyncpa [#allocation8], 1
    %s2846 = scalar_lea.sflag [#allocation8], 1
    %2847 = vsyncpa %s2846, 1
    %2848 = vsyncpa [#allocation11], 1
    %2849 = vsyncpa [#allocation6], 1
    %s2850 = scalar_lea.sflag [#allocation6], 1
    %2851 = vsyncpa %s2850, 1

</llo_original>
